<compile_context>
chip_gen: v5e
topology: v5e:2x2
jax: 0.10.0
libtpu: 0.0.40
codegen_flags: <defaults>
</compile_context>

<pallas_src>
import functools

import jax
import jax.numpy as jnp
import numpy as np
from jax.experimental import pallas as pl
from jax.experimental.pallas import tpu as pltpu


def _lem2_fused_kernel(x_ref, wf_ref, b_ref, wg_ref, out_ref, xpad_ref,
                       *, H, W, C):
    """One batch element per grid step.

    x_ref    : (1, H, W, C)   activations, NHWC, compute dtype
    wf_ref   : (3, 3, C, C)   fused conv weight, compute dtype
    b_ref    : (1, C)         fused bias (global-branch bias pre-subtracted), f32
    wg_ref   : (C, C)         global 1x1 weight zero-padded to C output lanes, f32
    out_ref  : (1, C, H*W)    lane-dense output slab (NCHW flattened), f32
    xpad_ref : (H+2, W+2, C)  VMEM scratch holding the zero-padded tile
    """
    f32 = jnp.float32

    # Zero-padded activation tile lives only in VMEM (no padded HBM copy).
    # Zero it every step (not just step 0) so it stays correct when the batch
    # axis is sharded across TensorCores ("parallel" semantics).
    xpad_ref[...] = jnp.zeros_like(xpad_ref)
    x = x_ref[0]                                              # (H, W, C)
    xpad_ref[pl.ds(1, H), pl.ds(1, W), :] = x

    # Global branch, computed once before the tap loop (f32).
    col_sum = jnp.sum(x.astype(f32), axis=0)                  # (W, C)
    x_mean = jnp.sum(col_sum, axis=0, keepdims=True) * (1.0 / (H * W))  # (1, C)
    g = jnp.dot(x_mean, wg_ref[...], preferred_element_type=f32)        # (1, C)
    # Effective bias: branch biases, minus broadcast x_global on the last C/4
    # channels. Used to initialize the accumulator -> no extra full-size add.
    bias_eff = b_ref[...] - g                                 # (1, C)

    # Fused 3x3 conv: nine shifted MXU matmuls, RHS lane width = C.
    acc = None
    for kh in range(3):
        for kw in range(3):
            patch = xpad_ref[pl.ds(kh, H), pl.ds(kw, W), :].reshape(H * W, C)
            d = jnp.dot(patch, wf_ref[kh, kw], preferred_element_type=f32)
            acc = d + bias_eff if acc is None else acc + d    # (H*W, C) f32

    # Lane-dense store: (H*W, C) -> (C, H*W); H*W is a multiple of 128, so the
    # store uses full 128-lane vst (and the result is already NCHW-ordered).
    out_ref[0] = jnp.transpose(acc, (1, 0)).astype(out_ref.dtype)


def local_enhance_module2(x_nchw, params, *, compute_dtype=jnp.bfloat16):
    """LocalEnhanceModule2.forward. x_nchw: (N, C, H, W). Returns (N, C, H, W) f32."""
    N, C, H, W = x_nchw.shape
    C4 = C // 4
    f32 = jnp.float32

    # ---- Fold the five convolutions into ONE 3x3 conv (weight (3,3,C,C)):
    #   out[:,      : C/4 ] = non_local_rgbd (3x3, all taps)
    #   out[:,  C/4 : C/2 ] = local_rgbd     (1x1 -> center tap only)
    #   out[:,  C/2 : 3C/4] = x_local - x_contrast (center w_local - all-tap w_con)
    #   out[:, 3C/4 :     ] = x_local (center tap); x_global subtracted in-kernel
    center = jnp.zeros((3, 3, 1, 1), f32).at[1, 1].set(1.0)
    w_local = params["w_local"].astype(f32)                 # (C, C4)
    w_lr = params["w_lr"].astype(f32)                       # (C, C4)
    w_nl = params["w_nl"].astype(f32)                       # (3, 3, C, C4)
    w_con = params["w_con"].astype(f32)                     # (3, 3, C, C4)
    w_fused = jnp.concatenate(
        [w_nl,
         center * w_lr[None, None],
         -w_con + center * w_local[None, None],
         center * w_local[None, None]], axis=-1)            # (3, 3, C, C)

    # Fused bias, with the global-branch bias pre-subtracted on the last C/4.
    b_fused = jnp.concatenate(
        [params["b_nl"], params["b_lr"],
         params["b_local"] - params["b_con"], params["b_local"]],
        axis=-1).astype(f32)                                 # (1, C)
    b_glob_pad = jnp.concatenate(
        [jnp.zeros((1, 3 * C4), f32), params["b_glob"].astype(f32)], axis=-1)
    b_all = b_fused - b_glob_pad                             # (1, C)

    # Global 1x1 weight zero-padded so its matmul lands on the last C/4 lanes.
    w_glob_pad = jnp.concatenate(
        [jnp.zeros((C, 3 * C4), f32), params["w_glob"].astype(f32)], axis=-1)  # (C, C)

    # Layout glue: channels-last for the channel matmuls; bf16 operands by
    # default (accumulation stays f32 inside the kernel).
    x_nhwc = jnp.transpose(x_nchw, (0, 2, 3, 1)).astype(compute_dtype)
    w_fused = w_fused.astype(compute_dtype)

    kern = functools.partial(_lem2_fused_kernel, H=H, W=W, C=C)

    # TODO(synk): for large H*W*C (e.g. v7x's 64 MiB VMEM) tile the H axis with
    # a 1-row halo instead of processing one whole image per grid step.
    out_flat = pl.pallas_call(
        kern,
        out_shape=jax.ShapeDtypeStruct((N, C, H * W), f32),
        grid_spec=pltpu.PrefetchScalarGridSpec(
            num_scalar_prefetch=0,
            grid=(N,),
            in_specs=[
                pl.BlockSpec((1, H, W, C), lambda n: (n, 0, 0, 0)),
                pl.BlockSpec((3, 3, C, C), lambda n: (0, 0, 0, 0)),
                pl.BlockSpec((1, C), lambda n: (0, 0)),
                pl.BlockSpec((C, C), lambda n: (0, 0)),
            ],
            out_specs=pl.BlockSpec((1, C, H * W), lambda n: (n, 0, 0)),
            scratch_shapes=[pltpu.VMEM((H + 2, W + 2, C), compute_dtype)],
        ),
        compiler_params=pltpu.CompilerParams(
            dimension_semantics=("parallel",)),
    )(x_nhwc, w_fused, b_all, w_glob_pad)

    return out_flat.reshape(N, C, H, W)


if __name__ == "__main__":
    key = jax.random.PRNGKey(0)
    N, C, H, W = 2, 16, 16, 16          # in_dim = 16 -> C/4 = 4 per branch
    C4 = C // 4
    keys = jax.random.split(key, 11)

    x = jax.random.normal(keys[0], (N, C, H, W), jnp.float32)   # NCHW (PyTorch)

    s = 0.1  # deterministic synthetic weights (no checkpoint load)
    params = {
        "w_local": s * jax.random.normal(keys[1], (C, C4), jnp.float32),
        "b_local": s * jax.random.normal(keys[2], (1, C4), jnp.float32),
        "w_con":   s * jax.random.normal(keys[3], (3, 3, C, C4), jnp.float32),
        "b_con":   s * jax.random.normal(keys[4], (1, C4), jnp.float32),
        "w_glob":  s * jax.random.normal(keys[5], (C, C4), jnp.float32),
        "b_glob":  s * jax.random.normal(keys[6], (1, C4), jnp.float32),
        "w_nl":    s * jax.random.normal(keys[7], (3, 3, C, C4), jnp.float32),
        "b_nl":    s * jax.random.normal(keys[8], (1, C4), jnp.float32),
        "w_lr":    s * jax.random.normal(keys[9], (C, C4), jnp.float32),
        "b_lr":    s * jax.random.normal(keys[10], (1, C4), jnp.float32),
    }

    # bf16-operand path (default: v6e/v7x recommendation) and f32 path.
    out_bf16 = jax.block_until_ready(local_enhance_module2(x, params))
    out_f32 = jax.block_until_ready(
        local_enhance_module2(x, params, compute_dtype=jnp.float32))
    assert out_bf16.shape == (N, C, H, W)
    assert out_f32.shape == (N, C, H, W)

    # Pure-JAX reference: original five-branch formulation, NCHW, f32.
    def conv_ref(xin, w_hwio, b):
        y = jax.lax.conv_general_dilated(
            xin, w_hwio, window_strides=(1, 1), padding="SAME",
            dimension_numbers=("NCHW", "HWIO", "NCHW"),
            precision=jax.lax.Precision.HIGHEST)
        return y + b.reshape(1, -1, 1, 1)

    x_local = conv_ref(x, params["w_local"].reshape(1, 1, C, C4), params["b_local"])
    x_contrast = conv_ref(x, params["w_con"], params["b_con"])
    x_mean = jnp.mean(x, axis=(2, 3), keepdims=True)
    x_global = conv_ref(x_mean, params["w_glob"].reshape(1, 1, C, C4),
                        params["b_glob"])
    x_global = jnp.broadcast_to(x_global, x_local.shape)
    non_local = conv_ref(x, params["w_nl"], params["b_nl"])
    local_rgbd = conv_ref(x, params["w_lr"].reshape(1, 1, C, C4), params["b_lr"])
    ref = jnp.concatenate(
        [non_local, local_rgbd, x_local - x_contrast, x_local - x_global], axis=1)

    # f32 path: tight check; bf16 path: tolerance accounts for operand rounding.
    np.testing.assert_allclose(np.asarray(out_f32), np.asarray(ref),
                               rtol=2e-4, atol=2e-4)
    np.testing.assert_allclose(np.asarray(out_bf16), np.asarray(ref),
                               rtol=1e-1, atol=1.5e-1)
    print("KERNEL_OK")
</pallas_src>

<mosaic_0001>
module attributes {stable_mosaic.version = 11 : i64} {
  func.func @_lem2_fused_kernel(%arg0: i32, %arg1: memref<1x16x16x16xbf16, #tpu.memory_space<vmem>>, %arg2: memref<3x3x16x16xbf16, #tpu.memory_space<vmem>>, %arg3: memref<1x16xf32, #tpu.memory_space<vmem>>, %arg4: memref<16x16xf32, #tpu.memory_space<vmem>>, %arg5: memref<1x16x256xf32, #tpu.memory_space<vmem>>, %arg6: memref<18x18x16xbf16, #tpu.memory_space<vmem>>) attributes {dimension_semantics = [#tpu.dimension_semantics<parallel>], iteration_bounds = array<i64: 2>, scalar_prefetch = 0 : i64, scratch_operands = 1 : i64, tpu.core_type = #tpu.core_type<tc>, window_params = [{transform_indices = @transform_0, window_bounds = array<i64: 1, 16, 16, 16>}, {pipeline_mode = #tpu.pipeline_mode<synchronous>, transform_indices = @transform_1, window_bounds = array<i64: 3, 3, 16, 16>}, {pipeline_mode = #tpu.pipeline_mode<synchronous>, transform_indices = @transform_2, window_bounds = array<i64: 1, 16>}, {pipeline_mode = #tpu.pipeline_mode<synchronous>, transform_indices = @transform_3, window_bounds = array<i64: 16, 16>}, {transform_indices = @transform_4, window_bounds = array<i64: 1, 16, 256>}]} {
    %cst = arith.constant 0.000000e+00 : bf16
    %0 = vector.broadcast %cst : bf16 to vector<18x18x16xbf16>
    %c0 = arith.constant 0 : index
    %c0_0 = arith.constant 0 : index
    %c0_1 = arith.constant 0 : index
    %1 = vector.load %arg6[%c0, %c0_0, %c0_1] : memref<18x18x16xbf16, #tpu.memory_space<vmem>>, vector<18x18x16xbf16>
    tpu.vector_store %arg6[%c0, %c0_0, %c0_1], %0 {strides = array<i32>} : memref<18x18x16xbf16, #tpu.memory_space<vmem>>, vector<18x18x16xbf16>,
    %c0_2 = arith.constant 0 : index
    %c0_3 = arith.constant 0 : index
    %c0_4 = arith.constant 0 : index
    %c0_5 = arith.constant 0 : index
    %2 = vector.load %arg1[%c0_2, %c0_3, %c0_4, %c0_5] : memref<1x16x16x16xbf16, #tpu.memory_space<vmem>>, vector<1x16x16x16xbf16>
    %3 = vector.shape_cast %2 : vector<1x16x16x16xbf16> to vector<16x16x16xbf16>
    %c1 = arith.constant 1 : index
    %c1_6 = arith.constant 1 : index
    %c0_7 = arith.constant 0 : index
    %4 = vector.load %arg6[%c1, %c1_6, %c0_7] : memref<18x18x16xbf16, #tpu.memory_space<vmem>>, vector<16x16x16xbf16>
    tpu.vector_store %arg6[%c1, %c1_6, %c0_7], %3 {strides = array<i32>} : memref<18x18x16xbf16, #tpu.memory_space<vmem>>, vector<16x16x16xbf16>,
    %5 = arith.extf %3 : vector<16x16x16xbf16> to vector<16x16x16xf32>
    %cst_8 = arith.constant dense<0.000000e+00> : vector<16x16xf32>
    %6 = vector.multi_reduction <add>, %5, %cst_8 [0] : vector<16x16x16xf32> to vector<16x16xf32>
    %cst_9 = arith.constant dense<0.000000e+00> : vector<16xf32>
    %7 = vector.multi_reduction <add>, %6, %cst_9 [0] : vector<16x16xf32> to vector<16xf32>
    %8 = vector.shape_cast %7 : vector<16xf32> to vector<1x16xf32>
    %cst_10 = arith.constant 3.906250e-03 : f32
    %9 = vector.broadcast %cst_10 : f32 to vector<1x16xf32>
    %10 = arith.mulf %8, %9 : vector<1x16xf32>
    %c0_11 = arith.constant 0 : index
    %c0_12 = arith.constant 0 : index
    %11 = vector.load %arg4[%c0_11, %c0_12] : memref<16x16xf32, #tpu.memory_space<vmem>>, vector<16x16xf32>
    %cst_13 = arith.constant dense<0.000000e+00> : vector<1x16xf32>
    %12 = tpu.matmul %10, %11, %cst_13 {dimension_numbers = #tpu.dot_dimension_numbers<[1], [0], [0], [1], [0, 0, 1, 1], [], []>} : vector<1x16xf32>, vector<16x16xf32>, vector<1x16xf32> -> vector<1x16xf32>
    %c0_14 = arith.constant 0 : index
    %c0_15 = arith.constant 0 : index
    %13 = vector.load %arg3[%c0_14, %c0_15] : memref<1x16xf32, #tpu.memory_space<vmem>>, vector<1x16xf32>
    %14 = arith.subf %13, %12 : vector<1x16xf32>
    %c0_16 = arith.constant 0 : index
    %c0_17 = arith.constant 0 : index
    %c0_18 = arith.constant 0 : index
    %15 = vector.load %arg6[%c0_16, %c0_17, %c0_18] : memref<18x18x16xbf16, #tpu.memory_space<vmem>>, vector<16x16x16xbf16>
    %16 = vector.shape_cast %15 : vector<16x16x16xbf16> to vector<256x16xbf16>
    %c0_19 = arith.constant 0 : index
    %c0_20 = arith.constant 0 : index
    %c0_21 = arith.constant 0 : index
    %c0_22 = arith.constant 0 : index
    %17 = vector.load %arg2[%c0_19, %c0_20, %c0_21, %c0_22] : memref<3x3x16x16xbf16, #tpu.memory_space<vmem>>, vector<1x1x16x16xbf16>
    %18 = vector.shape_cast %17 : vector<1x1x16x16xbf16> to vector<16x16xbf16>
    %cst_23 = arith.constant dense<0.000000e+00> : vector<256x16xf32>
    %19 = tpu.matmul %16, %18, %cst_23 {dimension_numbers = #tpu.dot_dimension_numbers<[1], [0], [0], [1], [0, 0, 1, 1], [], []>} : vector<256x16xbf16>, vector<16x16xbf16>, vector<256x16xf32> -> vector<256x16xf32>
    %20 = vector.broadcast %14 : vector<1x16xf32> to vector<256x16xf32>
    %21 = arith.addf %19, %20 : vector<256x16xf32>
    %c0_24 = arith.constant 0 : index
    %c1_25 = arith.constant 1 : index
    %c0_26 = arith.constant 0 : index
    %22 = vector.load %arg6[%c0_24, %c1_25, %c0_26] : memref<18x18x16xbf16, #tpu.memory_space<vmem>>, vector<16x16x16xbf16>
    %23 = vector.shape_cast %22 : vector<16x16x16xbf16> to vector<256x16xbf16>
    %c0_27 = arith.constant 0 : index
    %c1_28 = arith.constant 1 : index
    %c0_29 = arith.constant 0 : index
    %c0_30 = arith.constant 0 : index
    %24 = vector.load %arg2[%c0_27, %c1_28, %c0_29, %c0_30] : memref<3x3x16x16xbf16, #tpu.memory_space<vmem>>, vector<1x1x16x16xbf16>
    %25 = vector.shape_cast %24 : vector<1x1x16x16xbf16> to vector<16x16xbf16>
    %cst_31 = arith.constant dense<0.000000e+00> : vector<256x16xf32>
    %26 = tpu.matmul %23, %25, %cst_31 {dimension_numbers = #tpu.dot_dimension_numbers<[1], [0], [0], [1], [0, 0, 1, 1], [], []>} : vector<256x16xbf16>, vector<16x16xbf16>, vector<256x16xf32> -> vector<256x16xf32>
    %27 = arith.addf %21, %26 : vector<256x16xf32>
    %c0_32 = arith.constant 0 : index
    %c2 = arith.constant 2 : index
    %c0_33 = arith.constant 0 : index
    %28 = vector.load %arg6[%c0_32, %c2, %c0_33] : memref<18x18x16xbf16, #tpu.memory_space<vmem>>, vector<16x16x16xbf16>
    %29 = vector.shape_cast %28 : vector<16x16x16xbf16> to vector<256x16xbf16>
    %c0_34 = arith.constant 0 : index
    %c2_35 = arith.constant 2 : index
    %c0_36 = arith.constant 0 : index
    %c0_37 = arith.constant 0 : index
    %30 = vector.load %arg2[%c0_34, %c2_35, %c0_36, %c0_37] : memref<3x3x16x16xbf16, #tpu.memory_space<vmem>>, vector<1x1x16x16xbf16>
    %31 = vector.shape_cast %30 : vector<1x1x16x16xbf16> to vector<16x16xbf16>
    %cst_38 = arith.constant dense<0.000000e+00> : vector<256x16xf32>
    %32 = tpu.matmul %29, %31, %cst_38 {dimension_numbers = #tpu.dot_dimension_numbers<[1], [0], [0], [1], [0, 0, 1, 1], [], []>} : vector<256x16xbf16>, vector<16x16xbf16>, vector<256x16xf32> -> vector<256x16xf32>
    %33 = arith.addf %27, %32 : vector<256x16xf32>
    %c1_39 = arith.constant 1 : index
    %c0_40 = arith.constant 0 : index
    %c0_41 = arith.constant 0 : index
    %34 = vector.load %arg6[%c1_39, %c0_40, %c0_41] : memref<18x18x16xbf16, #tpu.memory_space<vmem>>, vector<16x16x16xbf16>
    %35 = vector.shape_cast %34 : vector<16x16x16xbf16> to vector<256x16xbf16>
    %c1_42 = arith.constant 1 : index
    %c0_43 = arith.constant 0 : index
    %c0_44 = arith.constant 0 : index
    %c0_45 = arith.constant 0 : index
    %36 = vector.load %arg2[%c1_42, %c0_43, %c0_44, %c0_45] : memref<3x3x16x16xbf16, #tpu.memory_space<vmem>>, vector<1x1x16x16xbf16>
    %37 = vector.shape_cast %36 : vector<1x1x16x16xbf16> to vector<16x16xbf16>
    %cst_46 = arith.constant dense<0.000000e+00> : vector<256x16xf32>
    %38 = tpu.matmul %35, %37, %cst_46 {dimension_numbers = #tpu.dot_dimension_numbers<[1], [0], [0], [1], [0, 0, 1, 1], [], []>} : vector<256x16xbf16>, vector<16x16xbf16>, vector<256x16xf32> -> vector<256x16xf32>
    %39 = arith.addf %33, %38 : vector<256x16xf32>
    %c1_47 = arith.constant 1 : index
    %c1_48 = arith.constant 1 : index
    %c0_49 = arith.constant 0 : index
    %40 = vector.load %arg6[%c1_47, %c1_48, %c0_49] : memref<18x18x16xbf16, #tpu.memory_space<vmem>>, vector<16x16x16xbf16>
    %41 = vector.shape_cast %40 : vector<16x16x16xbf16> to vector<256x16xbf16>
    %c1_50 = arith.constant 1 : index
    %c1_51 = arith.constant 1 : index
    %c0_52 = arith.constant 0 : index
    %c0_53 = arith.constant 0 : index
    %42 = vector.load %arg2[%c1_50, %c1_51, %c0_52, %c0_53] : memref<3x3x16x16xbf16, #tpu.memory_space<vmem>>, vector<1x1x16x16xbf16>
    %43 = vector.shape_cast %42 : vector<1x1x16x16xbf16> to vector<16x16xbf16>
    %cst_54 = arith.constant dense<0.000000e+00> : vector<256x16xf32>
    %44 = tpu.matmul %41, %43, %cst_54 {dimension_numbers = #tpu.dot_dimension_numbers<[1], [0], [0], [1], [0, 0, 1, 1], [], []>} : vector<256x16xbf16>, vector<16x16xbf16>, vector<256x16xf32> -> vector<256x16xf32>
    %45 = arith.addf %39, %44 : vector<256x16xf32>
    %c1_55 = arith.constant 1 : index
    %c2_56 = arith.constant 2 : index
    %c0_57 = arith.constant 0 : index
    %46 = vector.load %arg6[%c1_55, %c2_56, %c0_57] : memref<18x18x16xbf16, #tpu.memory_space<vmem>>, vector<16x16x16xbf16>
    %47 = vector.shape_cast %46 : vector<16x16x16xbf16> to vector<256x16xbf16>
    %c1_58 = arith.constant 1 : index
    %c2_59 = arith.constant 2 : index
    %c0_60 = arith.constant 0 : index
    %c0_61 = arith.constant 0 : index
    %48 = vector.load %arg2[%c1_58, %c2_59, %c0_60, %c0_61] : memref<3x3x16x16xbf16, #tpu.memory_space<vmem>>, vector<1x1x16x16xbf16>
    %49 = vector.shape_cast %48 : vector<1x1x16x16xbf16> to vector<16x16xbf16>
    %cst_62 = arith.constant dense<0.000000e+00> : vector<256x16xf32>
    %50 = tpu.matmul %47, %49, %cst_62 {dimension_numbers = #tpu.dot_dimension_numbers<[1], [0], [0], [1], [0, 0, 1, 1], [], []>} : vector<256x16xbf16>, vector<16x16xbf16>, vector<256x16xf32> -> vector<256x16xf32>
    %51 = arith.addf %45, %50 : vector<256x16xf32>
    %c2_63 = arith.constant 2 : index
    %c0_64 = arith.constant 0 : index
    %c0_65 = arith.constant 0 : index
    %52 = vector.load %arg6[%c2_63, %c0_64, %c0_65] : memref<18x18x16xbf16, #tpu.memory_space<vmem>>, vector<16x16x16xbf16>
    %53 = vector.shape_cast %52 : vector<16x16x16xbf16> to vector<256x16xbf16>
    %c2_66 = arith.constant 2 : index
    %c0_67 = arith.constant 0 : index
    %c0_68 = arith.constant 0 : index
    %c0_69 = arith.constant 0 : index
    %54 = vector.load %arg2[%c2_66, %c0_67, %c0_68, %c0_69] : memref<3x3x16x16xbf16, #tpu.memory_space<vmem>>, vector<1x1x16x16xbf16>
    %55 = vector.shape_cast %54 : vector<1x1x16x16xbf16> to vector<16x16xbf16>
    %cst_70 = arith.constant dense<0.000000e+00> : vector<256x16xf32>
    %56 = tpu.matmul %53, %55, %cst_70 {dimension_numbers = #tpu.dot_dimension_numbers<[1], [0], [0], [1], [0, 0, 1, 1], [], []>} : vector<256x16xbf16>, vector<16x16xbf16>, vector<256x16xf32> -> vector<256x16xf32>
    %57 = arith.addf %51, %56 : vector<256x16xf32>
    %c2_71 = arith.constant 2 : index
    %c1_72 = arith.constant 1 : index
    %c0_73 = arith.constant 0 : index
    %58 = vector.load %arg6[%c2_71, %c1_72, %c0_73] : memref<18x18x16xbf16, #tpu.memory_space<vmem>>, vector<16x16x16xbf16>
    %59 = vector.shape_cast %58 : vector<16x16x16xbf16> to vector<256x16xbf16>
    %c2_74 = arith.constant 2 : index
    %c1_75 = arith.constant 1 : index
    %c0_76 = arith.constant 0 : index
    %c0_77 = arith.constant 0 : index
    %60 = vector.load %arg2[%c2_74, %c1_75, %c0_76, %c0_77] : memref<3x3x16x16xbf16, #tpu.memory_space<vmem>>, vector<1x1x16x16xbf16>
    %61 = vector.shape_cast %60 : vector<1x1x16x16xbf16> to vector<16x16xbf16>
    %cst_78 = arith.constant dense<0.000000e+00> : vector<256x16xf32>
    %62 = tpu.matmul %59, %61, %cst_78 {dimension_numbers = #tpu.dot_dimension_numbers<[1], [0], [0], [1], [0, 0, 1, 1], [], []>} : vector<256x16xbf16>, vector<16x16xbf16>, vector<256x16xf32> -> vector<256x16xf32>
    %63 = arith.addf %57, %62 : vector<256x16xf32>
    %c2_79 = arith.constant 2 : index
    %c2_80 = arith.constant 2 : index
    %c0_81 = arith.constant 0 : index
    %64 = vector.load %arg6[%c2_79, %c2_80, %c0_81] : memref<18x18x16xbf16, #tpu.memory_space<vmem>>, vector<16x16x16xbf16>
    %65 = vector.shape_cast %64 : vector<16x16x16xbf16> to vector<256x16xbf16>
    %c2_82 = arith.constant 2 : index
    %c2_83 = arith.constant 2 : index
    %c0_84 = arith.constant 0 : index
    %c0_85 = arith.constant 0 : index
    %66 = vector.load %arg2[%c2_82, %c2_83, %c0_84, %c0_85] : memref<3x3x16x16xbf16, #tpu.memory_space<vmem>>, vector<1x1x16x16xbf16>
    %67 = vector.shape_cast %66 : vector<1x1x16x16xbf16> to vector<16x16xbf16>
    %cst_86 = arith.constant dense<0.000000e+00> : vector<256x16xf32>
    %68 = tpu.matmul %65, %67, %cst_86 {dimension_numbers = #tpu.dot_dimension_numbers<[1], [0], [0], [1], [0, 0, 1, 1], [], []>} : vector<256x16xbf16>, vector<16x16xbf16>, vector<256x16xf32> -> vector<256x16xf32>
    %69 = arith.addf %63, %68 : vector<256x16xf32>
    %70 = tpu.transpose %69, [1, 0] : vector<256x16xf32> -> vector<16x256xf32>
    %c0_87 = arith.constant 0 : index
    %c0_88 = arith.constant 0 : index
    %c0_89 = arith.constant 0 : index
    %71 = vector.load %arg5[%c0_87, %c0_88, %c0_89] : memref<1x16x256xf32, #tpu.memory_space<vmem>>, vector<1x16x256xf32>
    %72 = vector.shape_cast %71 : vector<1x16x256xf32> to vector<16x256xf32>
    %73 = vector.shape_cast %70 : vector<16x256xf32> to vector<1x16x256xf32>
    tpu.vector_store %arg5[%c0_87, %c0_88, %c0_89], %73 {strides = array<i32>} : memref<1x16x256xf32, #tpu.memory_space<vmem>>, vector<1x16x256xf32>,
    return
  }
  func.func @transform_0(%arg0: i32) -> (i32, i32, i32, i32) {
    %c0_i32 = arith.constant 0 : i32
    %c0_i32_0 = arith.constant 0 : i32
    %c0_i32_1 = arith.constant 0 : i32
    %c0_i32_2 = arith.constant 0 : i32
    return %arg0, %c0_i32, %c0_i32_0, %c0_i32_1 : i32, i32, i32, i32
  }
  func.func @transform_1(%arg0: i32) -> (i32, i32, i32, i32) {
    %c0_i32 = arith.constant 0 : i32
    %c0_i32_0 = arith.constant 0 : i32
    %c0_i32_1 = arith.constant 0 : i32
    %c0_i32_2 = arith.constant 0 : i32
    %c0_i32_3 = arith.constant 0 : i32
    return %c0_i32, %c0_i32_0, %c0_i32_1, %c0_i32_2 : i32, i32, i32, i32
  }
  func.func @transform_2(%arg0: i32) -> (i32, i32) {
    %c0_i32 = arith.constant 0 : i32
    %c0_i32_0 = arith.constant 0 : i32
    %c0_i32_1 = arith.constant 0 : i32
    return %c0_i32, %c0_i32_0 : i32, i32
  }
  func.func @transform_3(%arg0: i32) -> (i32, i32) {
    %c0_i32 = arith.constant 0 : i32
    %c0_i32_0 = arith.constant 0 : i32
    %c0_i32_1 = arith.constant 0 : i32
    return %c0_i32, %c0_i32_0 : i32, i32
  }
  func.func @transform_4(%arg0: i32) -> (i32, i32, i32) {
    %c0_i32 = arith.constant 0 : i32
    %c0_i32_0 = arith.constant 0 : i32
    %c0_i32_1 = arith.constant 0 : i32
    return %arg0, %c0_i32, %c0_i32_0 : i32, i32, i32
  }
}

</mosaic_0001>

<llo_original>
// kernel: tpu_custom_call.1
$region0: #{tpu_custom_call.1}
  #allocation0 [shape = 'u32[]', space=smem, size = 0x4, offset = 0x4, fixed_abs, tag = 'smem constant byte address 0x4 - core index']
  #allocation1 [shape = 'u32[72,128]{1,0:T(1,128)}', space=vmem, size = 0x9000, scoped, tag = 'internal scratch']
  #allocation2 [shape = 'bf16[18,18,16]{2,1,0:T(8,128)(2,1)}', space=vmem, size = 0x1b000, scoped, tag = 'scratch operand']
  %s0 = inlined_call_operand.hbm [shape: bf16[2,16,16,16], index: 0, kind: input, shape index: {}]
  %s1 = inlined_call_operand.hbm [shape: bf16[3,3,16,16], index: 1, kind: input, shape index: {}]
  %s2 = inlined_call_operand.vmem [shape: f32[1,16], index: 2, kind: input, shape index: {}]
  %s3 = inlined_call_operand.hbm [shape: f32[16,16], index: 3, kind: input, shape index: {}]
  %s4 = inlined_call_operand.hbm [shape: f32[2,16,256], index: 4, kind: output, shape index: {}]
  %s5 = sld [smem:[#allocation0]]
  $region61: #{tpu_custom_call.1} parent=0
    _
  %s7 = ssub.s32 1, %s5
  %s8 = scalar_select 0, %s7, %s5
  $region1: #{tpu_custom_call.1} parent=0
    #allocation3 [shape = 'u8[131072]{0}', space=vmem, size = 0x20000, scoped, tag = 'input window, operand 0']
    #allocation4 [shape = 's32[2]{0}', space=sflag, size = 0x8, scoped, tag = 'scoped memory for tpu_custom_call.1']
    #allocation5 [shape = 's32[2]{0}', space=sflag, size = 0x8, scoped, tag = 'scoped memory for tpu_custom_call.1']
    #allocation6 [shape = 'u8[36864]{0}', space=vmem, size = 0x9000, scoped, tag = 'input window, operand 1, single buffered']
    #allocation7 [shape = 's32[1]{0}', space=sflag, size = 0x4, scoped, tag = 'scoped memory for tpu_custom_call.1']
    #allocation8 [shape = 'u8[8192]{0}', space=vmem, size = 0x2000, scoped, tag = 'input window, operand 3, single buffered']
    #allocation9 [shape = 'u8[32768]{0}', space=vmem, size = 0x8000, scoped, tag = 'output window, operand 0']
    %9 = vsyncpa [#allocation4], 0
    %s10 = scalar_lea.sflag [#allocation4], 1
    %11 = vsyncpa %s10, 0
    %12 = vsyncpa [#allocation7], 0
    %13 = vsyncpa [#allocation5], 0
    %s14 = scalar_lea.sflag [#allocation5], 1
    %15 = vsyncpa %s14, 0
    loop: start=0, step=1, limit=4
    $region2: #{tpu_custom_call.1} parent=1 // loop_pre_header
      _
    $region3: #{tpu_custom_call.1} parent=1 // loop_header
      %s17 = sphi 0, %s21
      %p18 = scmp.ge.s32.totalorder %s17, 4
      %s27 = sphi 0, %s29
      %s30 = sphi 0, %s27
      %s31 = sphi 0, %s30
      %s47 = sphi 0, %s31
      %s51 = sphi 0, %s51
      %s53 = sphi 0, %s51
      %s54 = sphi 0, %s53
      %s68 = sphi 0, %s54
      %s72 = sphi 0, %s72
      %s74 = sphi 0, %s72
      %s75 = sphi 0, %s74
      %s89 = sphi 0, %s75
      %s93 = sphi 0, %s93
      %s95 = sphi 0, %s93
      %s96 = sphi 0, %s95
      %s110 = sphi 0, %s96
      %s116 = sphi 0, %s118
      %s119 = sphi 0, %s116
      %s120 = sphi 0, %s119
      %s136 = sphi 0, %s120
    $region4: #{tpu_custom_call.1} parent=1 // loop_header_branch
      %20 = sbr.rel (%p18) target = $region8
    $region5: #{tpu_custom_call.1} parent=1 // loop_body
      %s22 = ssub.s32 %s17, 1
      %s23 = ssub.s32 %s17, 2
      %s24 = sadd.s32 %s17, 1
      %s25 = ssub.s32 %s17, %s24
      %p26 = scmp.eq.s32.totalorder %s25, 0
      %s28 = sadd.s32 %s27, 1
      %s29 = scalar_select %p26, %s27, %s28
      %p32 = pneg %p26
      %p33 = scmp.eq.s32.totalorder %s17, 1
      %p34 = por %p32, %p33
      %p35 = scmp.ne.s32.totalorder %s27, %s30
      %p36 = scmp.eq.s32.totalorder %s17, 0
      %p37 = por %p35, %p36
      %p38 = scmp.ne.s32.totalorder %s27, %s30
      %p39 = scmp.eq.s32.totalorder %s22, 1
      %p40 = por %p38, %p39
      %p41 = scmp.ne.s32.totalorder %s30, %s31
      %p42 = scmp.eq.s32.totalorder %s22, 0
      %p43 = por %p41, %p42
      %p44 = scmp.ne.s32.totalorder %s30, %s31
      %p45 = scmp.eq.s32.totalorder %s23, 1
      %p46 = por %p44, %p45
      %p48 = scmp.ne.s32.totalorder %s31, %s47
      %p49 = scmp.eq.s32.totalorder %s23, 0
      %p50 = por %p48, %p49
      %s52 = sadd.s32 %s51, 1
      %p55 = scmp.eq.s32.totalorder %s17, 1
      %p56 = scmp.ne.s32.totalorder %s51, %s53
      %p57 = scmp.eq.s32.totalorder %s17, 0
      %p58 = por %p56, %p57
      %p59 = scmp.ne.s32.totalorder %s51, %s53
      %p60 = scmp.eq.s32.totalorder %s22, 1
      %p61 = por %p59, %p60
      %p62 = scmp.ne.s32.totalorder %s53, %s54
      %p63 = scmp.eq.s32.totalorder %s22, 0
      %p64 = por %p62, %p63
      %p65 = scmp.ne.s32.totalorder %s53, %s54
      %p66 = scmp.eq.s32.totalorder %s23, 1
      %p67 = por %p65, %p66
      %p69 = scmp.ne.s32.totalorder %s54, %s68
      %p70 = scmp.eq.s32.totalorder %s23, 0
      %p71 = por %p69, %p70
      %s73 = sadd.s32 %s72, 1
      %p76 = scmp.eq.s32.totalorder %s17, 1
      %p77 = scmp.ne.s32.totalorder %s72, %s74
      %p78 = scmp.eq.s32.totalorder %s17, 0
      %p79 = por %p77, %p78
      %p80 = scmp.ne.s32.totalorder %s72, %s74
      %p81 = scmp.eq.s32.totalorder %s22, 1
      %p82 = por %p80, %p81
      %p83 = scmp.ne.s32.totalorder %s74, %s75
      %p84 = scmp.eq.s32.totalorder %s22, 0
      %p85 = por %p83, %p84
      %p86 = scmp.ne.s32.totalorder %s74, %s75
      %p87 = scmp.eq.s32.totalorder %s23, 1
      %p88 = por %p86, %p87
      %p90 = scmp.ne.s32.totalorder %s75, %s89
      %p91 = scmp.eq.s32.totalorder %s23, 0
      %p92 = por %p90, %p91
      %s94 = sadd.s32 %s93, 1
      %p97 = scmp.eq.s32.totalorder %s17, 1
      %p98 = scmp.ne.s32.totalorder %s93, %s95
      %p99 = scmp.eq.s32.totalorder %s17, 0
      %p100 = por %p98, %p99
      %p101 = scmp.ne.s32.totalorder %s93, %s95
      %p102 = scmp.eq.s32.totalorder %s22, 1
      %p103 = por %p101, %p102
      %p104 = scmp.ne.s32.totalorder %s95, %s96
      %p105 = scmp.eq.s32.totalorder %s22, 0
      %p106 = por %p104, %p105
      %p107 = scmp.ne.s32.totalorder %s95, %s96
      %p108 = scmp.eq.s32.totalorder %s23, 1
      %p109 = por %p107, %p108
      %p111 = scmp.ne.s32.totalorder %s96, %s110
      %p112 = scmp.eq.s32.totalorder %s23, 0
      %p113 = por %p111, %p112
      %s114 = ssub.s32 %s17, %s24
      %p115 = scmp.eq.s32.totalorder %s114, 0
      %s117 = sadd.s32 %s116, 1
      %s118 = scalar_select %p115, %s116, %s117
      %p121 = pneg %p115
      %p122 = scmp.eq.s32.totalorder %s17, 1
      %p123 = por %p121, %p122
      %p124 = scmp.ne.s32.totalorder %s116, %s119
      %p125 = scmp.eq.s32.totalorder %s17, 0
      %p126 = por %p124, %p125
      %p127 = scmp.ne.s32.totalorder %s116, %s119
      %p128 = scmp.eq.s32.totalorder %s22, 1
      %p129 = por %p127, %p128
      %p130 = scmp.ne.s32.totalorder %s119, %s120
      %p131 = scmp.eq.s32.totalorder %s22, 0
      %p132 = por %p130, %p131
      %p133 = scmp.ne.s32.totalorder %s119, %s120
      %p134 = scmp.eq.s32.totalorder %s23, 1
      %p135 = por %p133, %p134
      %p137 = scmp.ne.s32.totalorder %s120, %s136
      %p138 = scmp.eq.s32.totalorder %s23, 0
      %p139 = por %p137, %p138
      %p140 = scmp.le.s32.totalorder 1, %s17
      %p141 = scmp.lt.s32.totalorder %s17, 3
      %p142 = pnand %p140, %p141
      %p143 = pneg %p142
      // Predicated region
      $region9: #{tpu_custom_call.1} parent=5 // pred_check
        _
      $region10: #{tpu_custom_call.1} parent=5 // pred_check_branch
        %145 = sbr.rel (%p142) target = $region12
      $region11: #{tpu_custom_call.1} parent=5 // pred_region
        %s146 = ssub.s32 %s17, 1
        // Predicated region
        $region13: #{tpu_custom_call.1} parent=11 // pred_check
          %p147 = pneg %p64
        $region14: #{tpu_custom_call.1} parent=11 // pred_check_branch
          %149 = sbr.rel (%p147) target = $region16
        $region15: #{tpu_custom_call.1} parent=11 // pred_region
          %151 = vsyncadd [#allocation7], 0
          %s152 = sshll.u32 %s1, 4
          %s153 = int_to_ptr.hbm [resolvable:$true] %s152
          %s154 = sshll.u32 [#allocation6], 4
          %s155 = int_to_ptr.vmem [resolvable:$true] %s154
          %160 = dma.hbm_to_vmem [thread:$0]  %s153, 1152, %s155, [#allocation7], 64, 64, 4
        $region16: #{tpu_custom_call.1} parent=11 // pred_fallthru
          _
        // Predicated region
        $region17: #{tpu_custom_call.1} parent=11 // pred_check
          %p161 = pneg %p85
        $region18: #{tpu_custom_call.1} parent=11 // pred_check_branch
          %163 = sbr.rel (%p161) target = $region20
        $region19: #{tpu_custom_call.1} parent=11 // pred_region
          _
        $region20: #{tpu_custom_call.1} parent=11 // pred_fallthru
          _
        // Predicated region
        $region21: #{tpu_custom_call.1} parent=11 // pred_check
          %p164 = pneg %p106
        $region22: #{tpu_custom_call.1} parent=11 // pred_check_branch
          %166 = sbr.rel (%p164) target = $region24
        $region23: #{tpu_custom_call.1} parent=11 // pred_region
          %168 = vsyncadd [#allocation7], 0
          %s169 = sshll.u32 %s3, 4
          %s170 = int_to_ptr.hbm [resolvable:$true] %s169
          %s171 = sshll.u32 [#allocation8], 4
          %s172 = int_to_ptr.vmem [resolvable:$true] %s171
          %177 = dma.hbm_to_vmem [thread:$0]  %s170, 256, %s172, [#allocation7], 128, 128, 8
        $region24: #{tpu_custom_call.1} parent=11 // pred_fallthru
          _
      $region12: #{tpu_custom_call.1} parent=5 // pred_fallthru
        _
      %p178 = scmp.lt.s32.totalorder %s17, 2
      // Predicated region
      $region25: #{tpu_custom_call.1} parent=5 // pred_check
        %p179 = pneg %p178
      $region26: #{tpu_custom_call.1} parent=5 // pred_check_branch
        %181 = sbr.rel (%p179) target = $region28
      $region27: #{tpu_custom_call.1} parent=5 // pred_region
        // Predicated region
        $region29: #{tpu_custom_call.1} parent=27 // pred_check
          %p182 = pneg %p37
        $region30: #{tpu_custom_call.1} parent=27 // pred_check_branch
          %184 = sbr.rel (%p182) target = $region32
        $region31: #{tpu_custom_call.1} parent=27 // pred_region
          %s185 = sand.u32 %s27, 1
          %s186 = scalar_lea.sflag [#allocation4], %s185
          %s187 = sand.u32 %s27, 1
          %s188 = smul.addr %s187, 128
          %s189 = scalar_lea.vmem [#allocation3], %s188
          %191 = vsyncadd %s186, 0
          %s192 = smul.addr %s17, 32
          %s193 = smul.addr %s192, 4
          %s194 = scalar_lea.hbm %s0, %s193
          %s195 = sshll.u32 %s194, 4
          %s196 = int_to_ptr.hbm [resolvable:$true] %s195
          %s197 = sshll.u32 %s189, 4
          %s198 = int_to_ptr.vmem [resolvable:$true] %s197
          %203 = dma.hbm_to_vmem [thread:$0]  %s196, 2048, %s198, %s186, 64, 64, 4
        $region32: #{tpu_custom_call.1} parent=27 // pred_fallthru
          _
      $region28: #{tpu_custom_call.1} parent=5 // pred_fallthru
        _
      %p204 = scmp.le.s32.totalorder 1, %s17
      %p205 = scmp.lt.s32.totalorder %s17, 3
      %p206 = pnand %p204, %p205
      %p207 = pneg %p206
      // Predicated region
      $region33: #{tpu_custom_call.1} parent=5 // pred_check
        _
      $region34: #{tpu_custom_call.1} parent=5 // pred_check_branch
        %209 = sbr.rel (%p206) target = $region36
      $region35: #{tpu_custom_call.1} parent=5 // pred_region
        %s210 = ssub.s32 %s17, 1
        %s211 = sand.u32 %s30, 1
        %s212 = scalar_lea.sflag [#allocation4], %s211
        %s213 = sand.u32 %s30, 1
        %s214 = smul.addr %s213, 128
        %s215 = scalar_lea.vmem [#allocation3], %s214
        // Predicated region
        $region37: #{tpu_custom_call.1} parent=35 // pred_check
          %p216 = pneg %p43
        $region38: #{tpu_custom_call.1} parent=35 // pred_check_branch
          %218 = sbr.rel (%p216) target = $region40
        $region39: #{tpu_custom_call.1} parent=35 // pred_region
          %220 = dma.done %s212, 2048
        $region40: #{tpu_custom_call.1} parent=35 // pred_fallthru
          _
        // Predicated region
        $region41: #{tpu_custom_call.1} parent=35 // pred_check
          %p221 = pneg %p64
        $region42: #{tpu_custom_call.1} parent=35 // pred_check_branch
          %223 = sbr.rel (%p221) target = $region44
        $region43: #{tpu_custom_call.1} parent=35 // pred_region
          %225 = dma.done [#allocation7], 1152
        $region44: #{tpu_custom_call.1} parent=35 // pred_fallthru
          _
        // Predicated region
        $region45: #{tpu_custom_call.1} parent=35 // pred_check
          %p226 = pneg %p106
        $region46: #{tpu_custom_call.1} parent=35 // pred_check_branch
          %228 = sbr.rel (%p226) target = $region48
        $region47: #{tpu_custom_call.1} parent=35 // pred_region
          %230 = dma.done [#allocation7], 256
        $region48: #{tpu_custom_call.1} parent=35 // pred_fallthru
          _
        %s231 = sand.u32 %s30, 1
        %s232 = scalar_lea.sflag [#allocation4], %s231
        %s233 = sand.u32 %s30, 1
        %s234 = smul.addr %s233, 128
        %s235 = scalar_lea.vmem [#allocation3], %s234
        %p236 = pneg %p43
        %p237 = pneg %p40
        %p238 = pneg %p64
        %p239 = pneg %p61
        %p240 = pneg %p85
        %p241 = pneg %p82
        %p242 = pneg %p106
        %p243 = pneg %p103
        %p244 = pneg %p132
        %p245 = pneg %p129
        %s246 = sand.u32 %s119, 1
        %s247 = scalar_lea.sflag [#allocation5], %s246
        %s248 = sand.u32 %s119, 1
        %s249 = smul.addr %s248, 32
        %s250 = scalar_lea.vmem [#allocation9], %s249
        %vm252 = vcmask 125952
        %253 = vst.msk [vmem:[#allocation2] sm:$0xf] %vm252, 0
        %254 = vst.msk [vmem:[#allocation2 + $0x4] sm:$0xf] %vm252, 0
        %vm255 = vcmask 122880
        %256 = vst.msk [vmem:[#allocation2 + $0x8] sm:$0x1] %vm255, 0
        %257 = vst.msk [vmem:[#allocation2 + $0xc] sm:$0xf] %vm252, 0
        %258 = vst.msk [vmem:[#allocation2 + $0x10] sm:$0xf] %vm252, 0
        %259 = vst.msk [vmem:[#allocation2 + $0x14] sm:$0x1] %vm255, 0
        %260 = vst.msk [vmem:[#allocation2 + $0x18] sm:$0xf] %vm252, 0
        %261 = vst.msk [vmem:[#allocation2 + $0x1c] sm:$0xf] %vm252, 0
        %262 = vst.msk [vmem:[#allocation2 + $0x20] sm:$0x1] %vm255, 0
        %263 = vst.msk [vmem:[#allocation2 + $0x24] sm:$0xf] %vm252, 0
        %264 = vst.msk [vmem:[#allocation2 + $0x28] sm:$0xf] %vm252, 0
        %265 = vst.msk [vmem:[#allocation2 + $0x2c] sm:$0x1] %vm255, 0
        %266 = vst.msk [vmem:[#allocation2 + $0x30] sm:$0xf] %vm252, 0
        %267 = vst.msk [vmem:[#allocation2 + $0x34] sm:$0xf] %vm252, 0
        %268 = vst.msk [vmem:[#allocation2 + $0x38] sm:$0x1] %vm255, 0
        %269 = vst.msk [vmem:[#allocation2 + $0x3c] sm:$0xf] %vm252, 0
        %270 = vst.msk [vmem:[#allocation2 + $0x40] sm:$0xf] %vm252, 0
        %271 = vst.msk [vmem:[#allocation2 + $0x44] sm:$0x1] %vm255, 0
        %272 = vst.msk [vmem:[#allocation2 + $0x48] sm:$0xf] %vm252, 0
        %273 = vst.msk [vmem:[#allocation2 + $0x4c] sm:$0xf] %vm252, 0
        %274 = vst.msk [vmem:[#allocation2 + $0x50] sm:$0x1] %vm255, 0
        %275 = vst.msk [vmem:[#allocation2 + $0x54] sm:$0xf] %vm252, 0
        %276 = vst.msk [vmem:[#allocation2 + $0x58] sm:$0xf] %vm252, 0
        %277 = vst.msk [vmem:[#allocation2 + $0x5c] sm:$0x1] %vm255, 0
        %278 = vst.msk [vmem:[#allocation2 + $0x60] sm:$0xf] %vm252, 0
        %279 = vst.msk [vmem:[#allocation2 + $0x64] sm:$0xf] %vm252, 0
        %280 = vst.msk [vmem:[#allocation2 + $0x68] sm:$0x1] %vm255, 0
        %281 = vst.msk [vmem:[#allocation2 + $0x6c] sm:$0xf] %vm252, 0
        %282 = vst.msk [vmem:[#allocation2 + $0x70] sm:$0xf] %vm252, 0
        %283 = vst.msk [vmem:[#allocation2 + $0x74] sm:$0x1] %vm255, 0
        %284 = vst.msk [vmem:[#allocation2 + $0x78] sm:$0xf] %vm252, 0
        %285 = vst.msk [vmem:[#allocation2 + $0x7c] sm:$0xf] %vm252, 0
        %286 = vst.msk [vmem:[#allocation2 + $0x80] sm:$0x1] %vm255, 0
        %287 = vst.msk [vmem:[#allocation2 + $0x84] sm:$0xf] %vm252, 0
        %288 = vst.msk [vmem:[#allocation2 + $0x88] sm:$0xf] %vm252, 0
        %289 = vst.msk [vmem:[#allocation2 + $0x8c] sm:$0x1] %vm255, 0
        %290 = vst.msk [vmem:[#allocation2 + $0x90] sm:$0xf] %vm252, 0
        %291 = vst.msk [vmem:[#allocation2 + $0x94] sm:$0xf] %vm252, 0
        %292 = vst.msk [vmem:[#allocation2 + $0x98] sm:$0x1] %vm255, 0
        %293 = vst.msk [vmem:[#allocation2 + $0x9c] sm:$0xf] %vm252, 0
        %294 = vst.msk [vmem:[#allocation2 + $0xa0] sm:$0xf] %vm252, 0
        %295 = vst.msk [vmem:[#allocation2 + $0xa4] sm:$0x1] %vm255, 0
        %296 = vst.msk [vmem:[#allocation2 + $0xa8] sm:$0xf] %vm252, 0
        %297 = vst.msk [vmem:[#allocation2 + $0xac] sm:$0xf] %vm252, 0
        %298 = vst.msk [vmem:[#allocation2 + $0xb0] sm:$0x1] %vm255, 0
        %299 = vst.msk [vmem:[#allocation2 + $0xb4] sm:$0xf] %vm252, 0
        %300 = vst.msk [vmem:[#allocation2 + $0xb8] sm:$0xf] %vm252, 0
        %301 = vst.msk [vmem:[#allocation2 + $0xbc] sm:$0x1] %vm255, 0
        %302 = vst.msk [vmem:[#allocation2 + $0xc0] sm:$0xf] %vm252, 0
        %303 = vst.msk [vmem:[#allocation2 + $0xc4] sm:$0xf] %vm252, 0
        %304 = vst.msk [vmem:[#allocation2 + $0xc8] sm:$0x1] %vm255, 0
        %305 = vst.msk [vmem:[#allocation2 + $0xcc] sm:$0xf] %vm252, 0
        %306 = vst.msk [vmem:[#allocation2 + $0xd0] sm:$0xf] %vm252, 0
        %307 = vst.msk [vmem:[#allocation2 + $0xd4] sm:$0x1] %vm255, 0
        %v308 = vld [vmem:[%s215] sm:$0xf]
        %v309 = vld [vmem:[%s215 + $0x4] sm:$0xf]
        %v310 = vld [vmem:[%s215 + $0x8] sm:$0xf]
        %v311 = vld [vmem:[%s215 + $0xc] sm:$0xf]
        %v312 = vld [vmem:[%s215 + $0x10] sm:$0xf]
        %v313 = vld [vmem:[%s215 + $0x14] sm:$0xf]
        %v314 = vld [vmem:[%s215 + $0x18] sm:$0xf]
        %v315 = vld [vmem:[%s215 + $0x1c] sm:$0xf]
        %v316 = vld [vmem:[%s215 + $0x20] sm:$0xf]
        %v317 = vld [vmem:[%s215 + $0x24] sm:$0xf]
        %v318 = vld [vmem:[%s215 + $0x28] sm:$0xf]
        %v319 = vld [vmem:[%s215 + $0x2c] sm:$0xf]
        %v320 = vld [vmem:[%s215 + $0x30] sm:$0xf]
        %v321 = vld [vmem:[%s215 + $0x34] sm:$0xf]
        %v322 = vld [vmem:[%s215 + $0x38] sm:$0xf]
        %v323 = vld [vmem:[%s215 + $0x3c] sm:$0xf]
        %v324 = vld [vmem:[%s215 + $0x40] sm:$0xf]
        %v325 = vld [vmem:[%s215 + $0x44] sm:$0xf]
        %v326 = vld [vmem:[%s215 + $0x48] sm:$0xf]
        %v327 = vld [vmem:[%s215 + $0x4c] sm:$0xf]
        %v328 = vld [vmem:[%s215 + $0x50] sm:$0xf]
        %v329 = vld [vmem:[%s215 + $0x54] sm:$0xf]
        %v330 = vld [vmem:[%s215 + $0x58] sm:$0xf]
        %v331 = vld [vmem:[%s215 + $0x5c] sm:$0xf]
        %v332 = vld [vmem:[%s215 + $0x60] sm:$0xf]
        %v333 = vld [vmem:[%s215 + $0x64] sm:$0xf]
        %v334 = vld [vmem:[%s215 + $0x68] sm:$0xf]
        %v335 = vld [vmem:[%s215 + $0x6c] sm:$0xf]
        %v336 = vld [vmem:[%s215 + $0x70] sm:$0xf]
        %v337 = vld [vmem:[%s215 + $0x74] sm:$0xf]
        %v338 = vld [vmem:[%s215 + $0x78] sm:$0xf]
        %v339 = vld [vmem:[%s215 + $0x7c] sm:$0xf]
        %vm340 = vsmask.f32 256
        %vm341 = vsmask.f32 4368
        %vm342 = vmor %vm340, %vm341
        %v344 = vshrl.u32 %v308, 16
        %v346 = vrot.slane %v344, 7
        %v347 = vshll.u32 %v308, 16
        %v349 = vor.u32 %v346, %v347
        %v350 = vrot.slane %v346, 4
        %v352 = vshrl.u32 %v309, 16
        %v354 = vrot.slane %v352, 7
        %v355 = vshll.u32 %v309, 16
        %v357 = vor.u32 %v354, %v355
        %v358 = vsel %vm342, %v350, %v357
        %v359 = vrot.slane %v354, 4
        %v361 = vshrl.u32 %v310, 16
        %v363 = vrot.slane %v361, 7
        %v364 = vshll.u32 %v310, 16
        %v366 = vor.u32 %v363, %v364
        %v367 = vrot.slane %v363, 4
        %v369 = vshrl.u32 %v311, 16
        %v371 = vrot.slane %v369, 7
        %v372 = vshll.u32 %v311, 16
        %v374 = vor.u32 %v371, %v372
        %v375 = vsel %vm342, %v367, %v374
        %v376 = vrot.slane %v371, 4
        %v378 = vshrl.u32 %v312, 16
        %v380 = vrot.slane %v378, 7
        %v381 = vshll.u32 %v312, 16
        %v383 = vor.u32 %v380, %v381
        %v384 = vrot.slane %v380, 4
        %v386 = vshrl.u32 %v313, 16
        %v388 = vrot.slane %v386, 7
        %v389 = vshll.u32 %v313, 16
        %v391 = vor.u32 %v388, %v389
        %v392 = vsel %vm342, %v384, %v391
        %v393 = vrot.slane %v388, 4
        %v395 = vshrl.u32 %v314, 16
        %v397 = vrot.slane %v395, 7
        %v398 = vshll.u32 %v314, 16
        %v400 = vor.u32 %v397, %v398
        %v401 = vrot.slane %v397, 4
        %v403 = vshrl.u32 %v315, 16
        %v405 = vrot.slane %v403, 7
        %v406 = vshll.u32 %v315, 16
        %v408 = vor.u32 %v405, %v406
        %v409 = vsel %vm342, %v401, %v408
        %v410 = vrot.slane %v405, 4
        %v412 = vshrl.u32 %v316, 16
        %v414 = vrot.slane %v412, 7
        %v415 = vshll.u32 %v316, 16
        %v417 = vor.u32 %v414, %v415
        %v418 = vrot.slane %v414, 4
        %v420 = vshrl.u32 %v317, 16
        %v422 = vrot.slane %v420, 7
        %v423 = vshll.u32 %v317, 16
        %v425 = vor.u32 %v422, %v423
        %v426 = vsel %vm342, %v418, %v425
        %v427 = vrot.slane %v422, 4
        %v429 = vshrl.u32 %v318, 16
        %v431 = vrot.slane %v429, 7
        %v432 = vshll.u32 %v318, 16
        %v434 = vor.u32 %v431, %v432
        %v435 = vrot.slane %v431, 4
        %v437 = vshrl.u32 %v319, 16
        %v439 = vrot.slane %v437, 7
        %v440 = vshll.u32 %v319, 16
        %v442 = vor.u32 %v439, %v440
        %v443 = vsel %vm342, %v435, %v442
        %v444 = vrot.slane %v439, 4
        %v446 = vshrl.u32 %v320, 16
        %v448 = vrot.slane %v446, 7
        %v449 = vshll.u32 %v320, 16
        %v451 = vor.u32 %v448, %v449
        %v452 = vrot.slane %v448, 4
        %v454 = vshrl.u32 %v321, 16
        %v456 = vrot.slane %v454, 7
        %v457 = vshll.u32 %v321, 16
        %v459 = vor.u32 %v456, %v457
        %v460 = vsel %vm342, %v452, %v459
        %v461 = vrot.slane %v456, 4
        %v463 = vshrl.u32 %v322, 16
        %v465 = vrot.slane %v463, 7
        %v466 = vshll.u32 %v322, 16
        %v468 = vor.u32 %v465, %v466
        %v469 = vrot.slane %v465, 4
        %v471 = vshrl.u32 %v323, 16
        %v473 = vrot.slane %v471, 7
        %v474 = vshll.u32 %v323, 16
        %v476 = vor.u32 %v473, %v474
        %v477 = vsel %vm342, %v469, %v476
        %v478 = vrot.slane %v473, 4
        %v480 = vshrl.u32 %v324, 16
        %v482 = vrot.slane %v480, 7
        %v483 = vshll.u32 %v324, 16
        %v485 = vor.u32 %v482, %v483
        %v486 = vrot.slane %v482, 4
        %v488 = vshrl.u32 %v325, 16
        %v490 = vrot.slane %v488, 7
        %v491 = vshll.u32 %v325, 16
        %v493 = vor.u32 %v490, %v491
        %v494 = vsel %vm342, %v486, %v493
        %v495 = vrot.slane %v490, 4
        %v497 = vshrl.u32 %v326, 16
        %v499 = vrot.slane %v497, 7
        %v500 = vshll.u32 %v326, 16
        %v502 = vor.u32 %v499, %v500
        %v503 = vrot.slane %v499, 4
        %v505 = vshrl.u32 %v327, 16
        %v507 = vrot.slane %v505, 7
        %v508 = vshll.u32 %v327, 16
        %v510 = vor.u32 %v507, %v508
        %v511 = vsel %vm342, %v503, %v510
        %v512 = vrot.slane %v507, 4
        %v514 = vshrl.u32 %v328, 16
        %v516 = vrot.slane %v514, 7
        %v517 = vshll.u32 %v328, 16
        %v519 = vor.u32 %v516, %v517
        %v520 = vrot.slane %v516, 4
        %v522 = vshrl.u32 %v329, 16
        %v524 = vrot.slane %v522, 7
        %v525 = vshll.u32 %v329, 16
        %v527 = vor.u32 %v524, %v525
        %v528 = vsel %vm342, %v520, %v527
        %v529 = vrot.slane %v524, 4
        %v531 = vshrl.u32 %v330, 16
        %v533 = vrot.slane %v531, 7
        %v534 = vshll.u32 %v330, 16
        %v536 = vor.u32 %v533, %v534
        %v537 = vrot.slane %v533, 4
        %v539 = vshrl.u32 %v331, 16
        %v541 = vrot.slane %v539, 7
        %v542 = vshll.u32 %v331, 16
        %v544 = vor.u32 %v541, %v542
        %v545 = vsel %vm342, %v537, %v544
        %v546 = vrot.slane %v541, 4
        %v548 = vshrl.u32 %v332, 16
        %v550 = vrot.slane %v548, 7
        %v551 = vshll.u32 %v332, 16
        %v553 = vor.u32 %v550, %v551
        %v554 = vrot.slane %v550, 4
        %v556 = vshrl.u32 %v333, 16
        %v558 = vrot.slane %v556, 7
        %v559 = vshll.u32 %v333, 16
        %v561 = vor.u32 %v558, %v559
        %v562 = vsel %vm342, %v554, %v561
        %v563 = vrot.slane %v558, 4
        %v565 = vshrl.u32 %v334, 16
        %v567 = vrot.slane %v565, 7
        %v568 = vshll.u32 %v334, 16
        %v570 = vor.u32 %v567, %v568
        %v571 = vrot.slane %v567, 4
        %v573 = vshrl.u32 %v335, 16
        %v575 = vrot.slane %v573, 7
        %v576 = vshll.u32 %v335, 16
        %v578 = vor.u32 %v575, %v576
        %v579 = vsel %vm342, %v571, %v578
        %v580 = vrot.slane %v575, 4
        %v582 = vshrl.u32 %v336, 16
        %v584 = vrot.slane %v582, 7
        %v585 = vshll.u32 %v336, 16
        %v587 = vor.u32 %v584, %v585
        %v588 = vrot.slane %v584, 4
        %v590 = vshrl.u32 %v337, 16
        %v592 = vrot.slane %v590, 7
        %v593 = vshll.u32 %v337, 16
        %v595 = vor.u32 %v592, %v593
        %v596 = vsel %vm342, %v588, %v595
        %v597 = vrot.slane %v592, 4
        %v599 = vshrl.u32 %v338, 16
        %v601 = vrot.slane %v599, 7
        %v602 = vshll.u32 %v338, 16
        %v604 = vor.u32 %v601, %v602
        %v605 = vrot.slane %v601, 4
        %v607 = vshrl.u32 %v339, 16
        %v609 = vrot.slane %v607, 7
        %v610 = vshll.u32 %v339, 16
        %v612 = vor.u32 %v609, %v610
        %v613 = vsel %vm342, %v605, %v612
        %v614 = vrot.slane %v609, 4
        %s663 = scalar_lea.vmem [#allocation2], 12
        %vm664 = vcmask 125952
        %vm665 = vsmask.f32 7938
        %vm666 = vmand %vm664, %vm665
        %v667 = vld [vmem:[%s663] sm:$0xf]
        %v668 = vsel %vm666, %v349, %v667
        %669 = vst [vmem:[%s663] sm:$0xf] %v668
        %670 = vst.msk [vmem:[%s663 + $0x4] sm:$0xf] %vm252, %v358
        %vm671 = vcmask 122880
        %vm672 = vmand %vm671, %vm340
        %v673 = vld [vmem:[%s663 + $0x8] sm:$0x1]
        %v674 = vsel %vm672, %v359, %v673
        %675 = vst [vmem:[%s663 + $0x8] sm:$0x1] %v674
        %v676 = vld [vmem:[%s663 + $0xc] sm:$0xf]
        %v677 = vsel %vm666, %v366, %v676
        %678 = vst [vmem:[%s663 + $0xc] sm:$0xf] %v677
        %679 = vst.msk [vmem:[%s663 + $0x10] sm:$0xf] %vm252, %v375
        %v680 = vld [vmem:[%s663 + $0x14] sm:$0x1]
        %v681 = vsel %vm672, %v376, %v680
        %682 = vst [vmem:[%s663 + $0x14] sm:$0x1] %v681
        %v683 = vld [vmem:[%s663 + $0x18] sm:$0xf]
        %v684 = vsel %vm666, %v383, %v683
        %685 = vst [vmem:[%s663 + $0x18] sm:$0xf] %v684
        %686 = vst.msk [vmem:[%s663 + $0x1c] sm:$0xf] %vm252, %v392
        %v687 = vld [vmem:[%s663 + $0x20] sm:$0x1]
        %v688 = vsel %vm672, %v393, %v687
        %689 = vst [vmem:[%s663 + $0x20] sm:$0x1] %v688
        %v690 = vld [vmem:[%s663 + $0x24] sm:$0xf]
        %v691 = vsel %vm666, %v400, %v690
        %692 = vst [vmem:[%s663 + $0x24] sm:$0xf] %v691
        %693 = vst.msk [vmem:[%s663 + $0x28] sm:$0xf] %vm252, %v409
        %v694 = vld [vmem:[%s663 + $0x2c] sm:$0x1]
        %v695 = vsel %vm672, %v410, %v694
        %696 = vst [vmem:[%s663 + $0x2c] sm:$0x1] %v695
        %v697 = vld [vmem:[%s663 + $0x30] sm:$0xf]
        %v698 = vsel %vm666, %v417, %v697
        %699 = vst [vmem:[%s663 + $0x30] sm:$0xf] %v698
        %700 = vst.msk [vmem:[%s663 + $0x34] sm:$0xf] %vm252, %v426
        %v701 = vld [vmem:[%s663 + $0x38] sm:$0x1]
        %v702 = vsel %vm672, %v427, %v701
        %703 = vst [vmem:[%s663 + $0x38] sm:$0x1] %v702
        %v704 = vld [vmem:[%s663 + $0x3c] sm:$0xf]
        %v705 = vsel %vm666, %v434, %v704
        %706 = vst [vmem:[%s663 + $0x3c] sm:$0xf] %v705
        %707 = vst.msk [vmem:[%s663 + $0x40] sm:$0xf] %vm252, %v443
        %v708 = vld [vmem:[%s663 + $0x44] sm:$0x1]
        %v709 = vsel %vm672, %v444, %v708
        %710 = vst [vmem:[%s663 + $0x44] sm:$0x1] %v709
        %v711 = vld [vmem:[%s663 + $0x48] sm:$0xf]
        %v712 = vsel %vm666, %v451, %v711
        %713 = vst [vmem:[%s663 + $0x48] sm:$0xf] %v712
        %714 = vst.msk [vmem:[%s663 + $0x4c] sm:$0xf] %vm252, %v460
        %v715 = vld [vmem:[%s663 + $0x50] sm:$0x1]
        %v716 = vsel %vm672, %v461, %v715
        %717 = vst [vmem:[%s663 + $0x50] sm:$0x1] %v716
        %v718 = vld [vmem:[%s663 + $0x54] sm:$0xf]
        %v719 = vsel %vm666, %v468, %v718
        %720 = vst [vmem:[%s663 + $0x54] sm:$0xf] %v719
        %721 = vst.msk [vmem:[%s663 + $0x58] sm:$0xf] %vm252, %v477
        %v722 = vld [vmem:[%s663 + $0x5c] sm:$0x1]
        %v723 = vsel %vm672, %v478, %v722
        %724 = vst [vmem:[%s663 + $0x5c] sm:$0x1] %v723
        %v725 = vld [vmem:[%s663 + $0x60] sm:$0xf]
        %v726 = vsel %vm666, %v485, %v725
        %727 = vst [vmem:[%s663 + $0x60] sm:$0xf] %v726
        %728 = vst.msk [vmem:[%s663 + $0x64] sm:$0xf] %vm252, %v494
        %v729 = vld [vmem:[%s663 + $0x68] sm:$0x1]
        %v730 = vsel %vm672, %v495, %v729
        %731 = vst [vmem:[%s663 + $0x68] sm:$0x1] %v730
        %v732 = vld [vmem:[%s663 + $0x6c] sm:$0xf]
        %v733 = vsel %vm666, %v502, %v732
        %734 = vst [vmem:[%s663 + $0x6c] sm:$0xf] %v733
        %735 = vst.msk [vmem:[%s663 + $0x70] sm:$0xf] %vm252, %v511
        %v736 = vld [vmem:[%s663 + $0x74] sm:$0x1]
        %v737 = vsel %vm672, %v512, %v736
        %738 = vst [vmem:[%s663 + $0x74] sm:$0x1] %v737
        %v739 = vld [vmem:[%s663 + $0x78] sm:$0xf]
        %v740 = vsel %vm666, %v519, %v739
        %741 = vst [vmem:[%s663 + $0x78] sm:$0xf] %v740
        %742 = vst.msk [vmem:[%s663 + $0x7c] sm:$0xf] %vm252, %v528
        %v743 = vld [vmem:[%s663 + $0x80] sm:$0x1]
        %v744 = vsel %vm672, %v529, %v743
        %745 = vst [vmem:[%s663 + $0x80] sm:$0x1] %v744
        %v746 = vld [vmem:[%s663 + $0x84] sm:$0xf]
        %v747 = vsel %vm666, %v536, %v746
        %748 = vst [vmem:[%s663 + $0x84] sm:$0xf] %v747
        %749 = vst.msk [vmem:[%s663 + $0x88] sm:$0xf] %vm252, %v545
        %v750 = vld [vmem:[%s663 + $0x8c] sm:$0x1]
        %v751 = vsel %vm672, %v546, %v750
        %752 = vst [vmem:[%s663 + $0x8c] sm:$0x1] %v751
        %v753 = vld [vmem:[%s663 + $0x90] sm:$0xf]
        %v754 = vsel %vm666, %v553, %v753
        %755 = vst [vmem:[%s663 + $0x90] sm:$0xf] %v754
        %756 = vst.msk [vmem:[%s663 + $0x94] sm:$0xf] %vm252, %v562
        %v757 = vld [vmem:[%s663 + $0x98] sm:$0x1]
        %v758 = vsel %vm672, %v563, %v757
        %759 = vst [vmem:[%s663 + $0x98] sm:$0x1] %v758
        %v760 = vld [vmem:[%s663 + $0x9c] sm:$0xf]
        %v761 = vsel %vm666, %v570, %v760
        %762 = vst [vmem:[%s663 + $0x9c] sm:$0xf] %v761
        %763 = vst.msk [vmem:[%s663 + $0xa0] sm:$0xf] %vm252, %v579
        %v764 = vld [vmem:[%s663 + $0xa4] sm:$0x1]
        %v765 = vsel %vm672, %v580, %v764
        %766 = vst [vmem:[%s663 + $0xa4] sm:$0x1] %v765
        %v767 = vld [vmem:[%s663 + $0xa8] sm:$0xf]
        %v768 = vsel %vm666, %v587, %v767
        %769 = vst [vmem:[%s663 + $0xa8] sm:$0xf] %v768
        %770 = vst.msk [vmem:[%s663 + $0xac] sm:$0xf] %vm252, %v596
        %v771 = vld [vmem:[%s663 + $0xb0] sm:$0x1]
        %v772 = vsel %vm672, %v597, %v771
        %773 = vst [vmem:[%s663 + $0xb0] sm:$0x1] %v772
        %v774 = vld [vmem:[%s663 + $0xb4] sm:$0xf]
        %v775 = vsel %vm666, %v604, %v774
        %776 = vst [vmem:[%s663 + $0xb4] sm:$0xf] %v775
        %777 = vst.msk [vmem:[%s663 + $0xb8] sm:$0xf] %vm252, %v613
        %v778 = vld [vmem:[%s663 + $0xbc] sm:$0x1]
        %v779 = vsel %vm672, %v614, %v778
        %780 = vst [vmem:[%s663 + $0xbc] sm:$0x1] %v779
        %v781 = vunpack.c.l.bf16 %v308
        %v782 = vunpack.c.l.bf16 %v309
        %v783 = vunpack.c.l.bf16 %v310
        %v784 = vunpack.c.l.bf16 %v311
        %v785 = vunpack.c.l.bf16 %v312
        %v786 = vunpack.c.l.bf16 %v313
        %v787 = vunpack.c.l.bf16 %v314
        %v788 = vunpack.c.l.bf16 %v315
        %v789 = vunpack.c.l.bf16 %v316
        %v790 = vunpack.c.l.bf16 %v317
        %v791 = vunpack.c.l.bf16 %v318
        %v792 = vunpack.c.l.bf16 %v319
        %v793 = vunpack.c.l.bf16 %v320
        %v794 = vunpack.c.l.bf16 %v321
        %v795 = vunpack.c.l.bf16 %v322
        %v796 = vunpack.c.l.bf16 %v323
        %v797 = vunpack.c.l.bf16 %v324
        %v798 = vunpack.c.l.bf16 %v325
        %v799 = vunpack.c.l.bf16 %v326
        %v800 = vunpack.c.l.bf16 %v327
        %v801 = vunpack.c.l.bf16 %v328
        %v802 = vunpack.c.l.bf16 %v329
        %v803 = vunpack.c.l.bf16 %v330
        %v804 = vunpack.c.l.bf16 %v331
        %v805 = vunpack.c.l.bf16 %v332
        %v806 = vunpack.c.l.bf16 %v333
        %v807 = vunpack.c.l.bf16 %v334
        %v808 = vunpack.c.l.bf16 %v335
        %v809 = vunpack.c.l.bf16 %v336
        %v810 = vunpack.c.l.bf16 %v337
        %v811 = vunpack.c.l.bf16 %v338
        %v812 = vunpack.c.l.bf16 %v339
        %vm813 = vcmask 130048
        %v814 = vsel %vm813, %v781, 0.0
        %v815 = vsel %vm813, %v783, 0.0
        %v816 = vadd.f32 %v814, %v815
        %v817 = vsel %vm813, %v785, 0.0
        %v818 = vadd.f32 %v816, %v817
        %v819 = vsel %vm813, %v787, 0.0
        %v820 = vadd.f32 %v818, %v819
        %v821 = vsel %vm813, %v789, 0.0
        %v822 = vadd.f32 %v820, %v821
        %v823 = vsel %vm813, %v791, 0.0
        %v824 = vadd.f32 %v822, %v823
        %v825 = vsel %vm813, %v793, 0.0
        %v826 = vadd.f32 %v824, %v825
        %v827 = vsel %vm813, %v795, 0.0
        %v828 = vadd.f32 %v826, %v827
        %v829 = vsel %vm813, %v797, 0.0
        %v830 = vadd.f32 %v828, %v829
        %v831 = vsel %vm813, %v799, 0.0
        %v832 = vadd.f32 %v830, %v831
        %v833 = vsel %vm813, %v801, 0.0
        %v834 = vadd.f32 %v832, %v833
        %v835 = vsel %vm813, %v803, 0.0
        %v836 = vadd.f32 %v834, %v835
        %v837 = vsel %vm813, %v805, 0.0
        %v838 = vadd.f32 %v836, %v837
        %v839 = vsel %vm813, %v807, 0.0
        %v840 = vadd.f32 %v838, %v839
        %v841 = vsel %vm813, %v809, 0.0
        %v842 = vadd.f32 %v840, %v841
        %v843 = vsel %vm813, %v811, 0.0
        %v844 = vadd.f32 %v842, %v843
        %v845 = vsel %vm813, %v782, 0.0
        %v846 = vsel %vm813, %v784, 0.0
        %v847 = vadd.f32 %v845, %v846
        %v848 = vsel %vm813, %v786, 0.0
        %v849 = vadd.f32 %v847, %v848
        %v850 = vsel %vm813, %v788, 0.0
        %v851 = vadd.f32 %v849, %v850
        %v852 = vsel %vm813, %v790, 0.0
        %v853 = vadd.f32 %v851, %v852
        %v854 = vsel %vm813, %v792, 0.0
        %v855 = vadd.f32 %v853, %v854
        %v856 = vsel %vm813, %v794, 0.0
        %v857 = vadd.f32 %v855, %v856
        %v858 = vsel %vm813, %v796, 0.0
        %v859 = vadd.f32 %v857, %v858
        %v860 = vsel %vm813, %v798, 0.0
        %v861 = vadd.f32 %v859, %v860
        %v862 = vsel %vm813, %v800, 0.0
        %v863 = vadd.f32 %v861, %v862
        %v864 = vsel %vm813, %v802, 0.0
        %v865 = vadd.f32 %v863, %v864
        %v866 = vsel %vm813, %v804, 0.0
        %v867 = vadd.f32 %v865, %v866
        %v868 = vsel %vm813, %v806, 0.0
        %v869 = vadd.f32 %v867, %v868
        %v870 = vsel %vm813, %v808, 0.0
        %v871 = vadd.f32 %v869, %v870
        %v872 = vsel %vm813, %v810, 0.0
        %v873 = vadd.f32 %v871, %v872
        %v874 = vsel %vm813, %v812, 0.0
        %v875 = vadd.f32 %v873, %v874
        %v876 = vsel %vm813, %v844, 0.0
        %v877 = vsel %vm813, %v875, 0.0
        %v878 = vadd.f32 %v876, %v877
        %v879 = vrot.slane %v878, 4
        %v880 = vadd.f32 %v878, %v879
        %v881 = vrot.slane %v880, 2
        %v882 = vadd.f32 %v880, %v881
        %v883 = vrot.slane %v882, 1
        %v884 = vadd.f32 %v882, %v883
        %v885 = vmul.f32 %v884, 0.00390625
        %v886 = vld [vmem:[#allocation8] sm:$0xff]
        %v887 = vld [vmem:[#allocation8 + $0x8] sm:$0xff]
        %v889 = vsel %vm813, %v885, 0
        %891 = vmatpush.msra.mxu0 0.0
        %892 = vmatpush.msra.mxu0 0.0
        %893 = vmatpush.msra.mxu0 0.0
        %894 = vmatpush.msra.mxu0 0.0
        %895 = vmatpush.msra.mxu0 0.0
        %896 = vmatpush.msra.mxu0 0.0
        %897 = vmatpush.msra.mxu0 0.0
        %898 = vmatpush.msra.mxu0 0.0
        %899 = vmatpush.msra.mxu0 0.0
        %900 = vmatpush.msra.mxu0 0.0
        %901 = vmatpush.msra.mxu0 0.0
        %902 = vmatpush.msra.mxu0 0.0
        %903 = vmatpush.msra.mxu0 0.0
        %904 = vmatpush.msra.mxu0 0.0
        %905 = vmatpush.msra.mxu0 %v887
        %906 = vmatpush.msra.mxu0 %v886
        %907 = vmatmul.f32.gmra.mxu0 %v889
        %v908 = vpop.f32.mrf.mxu0
        %v909 = vadd.f32 0.0, %v908
        %910 = vdwg.mxu0
        %v911 = vld [vmem:[%s2] sm:$0x1]
        %v912 = vsub.f32 %v911, %v909
        %v913 = vld [vmem:[#allocation2] sm:$0xf]
        %v914 = vld [vmem:[#allocation2 + $0x4] sm:$0xf]
        %v915 = vld [vmem:[#allocation2 + $0xc] sm:$0xf]
        %v916 = vld [vmem:[#allocation2 + $0x10] sm:$0xf]
        %v917 = vld [vmem:[#allocation2 + $0x18] sm:$0xf]
        %v918 = vld [vmem:[#allocation2 + $0x1c] sm:$0xf]
        %v919 = vld [vmem:[#allocation2 + $0x24] sm:$0xf]
        %v920 = vld [vmem:[#allocation2 + $0x28] sm:$0xf]
        %v921 = vld [vmem:[#allocation2 + $0x30] sm:$0xf]
        %v922 = vld [vmem:[#allocation2 + $0x34] sm:$0xf]
        %v923 = vld [vmem:[#allocation2 + $0x3c] sm:$0xf]
        %v924 = vld [vmem:[#allocation2 + $0x40] sm:$0xf]
        %v925 = vld [vmem:[#allocation2 + $0x48] sm:$0xf]
        %v926 = vld [vmem:[#allocation2 + $0x4c] sm:$0xf]
        %v927 = vld [vmem:[#allocation2 + $0x54] sm:$0xf]
        %v928 = vld [vmem:[#allocation2 + $0x58] sm:$0xf]
        %v929 = vld [vmem:[#allocation2 + $0x60] sm:$0xf]
        %v930 = vld [vmem:[#allocation2 + $0x64] sm:$0xf]
        %v931 = vld [vmem:[#allocation2 + $0x6c] sm:$0xf]
        %v932 = vld [vmem:[#allocation2 + $0x70] sm:$0xf]
        %v933 = vld [vmem:[#allocation2 + $0x78] sm:$0xf]
        %v934 = vld [vmem:[#allocation2 + $0x7c] sm:$0xf]
        %v935 = vld [vmem:[#allocation2 + $0x84] sm:$0xf]
        %v936 = vld [vmem:[#allocation2 + $0x88] sm:$0xf]
        %v937 = vld [vmem:[#allocation2 + $0x90] sm:$0xf]
        %v938 = vld [vmem:[#allocation2 + $0x94] sm:$0xf]
        %v939 = vld [vmem:[#allocation2 + $0x9c] sm:$0xf]
        %v940 = vld [vmem:[#allocation2 + $0xa0] sm:$0xf]
        %v941 = vld [vmem:[#allocation2 + $0xa8] sm:$0xf]
        %v942 = vld [vmem:[#allocation2 + $0xac] sm:$0xf]
        %v943 = vld [vmem:[#allocation2 + $0xb4] sm:$0xf]
        %v944 = vld [vmem:[#allocation2 + $0xb8] sm:$0xf]
        %v945 = vld [vmem:[#allocation6] sm:$0xf]
        %v946 = vld [vmem:[#allocation6 + $0x4] sm:$0xf]
        %v948 = vperm.slane %v912, 0
        %v982 = vunpack.c.l.b16 %v913
        %v983 = vunpack.c.l.b16 %v914
        %v984 = vunpack.c.l.b16 %v915
        %v985 = vunpack.c.l.b16 %v916
        %v986 = vunpack.c.l.b16 %v917
        %v987 = vunpack.c.l.b16 %v918
        %v988 = vunpack.c.l.b16 %v919
        %v989 = vunpack.c.l.b16 %v920
        %v990 = vunpack.c.l.b16 %v921
        %v991 = vunpack.c.l.b16 %v922
        %v992 = vunpack.c.l.b16 %v923
        %v993 = vunpack.c.l.b16 %v924
        %v994 = vunpack.c.l.b16 %v925
        %v995 = vunpack.c.l.b16 %v926
        %v996 = vunpack.c.l.b16 %v927
        %v997 = vunpack.c.l.b16 %v928
        %v998 = vunpack.c.l.b16 %v929
        %v999 = vunpack.c.l.b16 %v930
        %v1000 = vunpack.c.l.b16 %v931
        %v1001 = vunpack.c.l.b16 %v932
        %v1002 = vunpack.c.l.b16 %v933
        %v1003 = vunpack.c.l.b16 %v934
        %v1004 = vunpack.c.l.b16 %v935
        %v1005 = vunpack.c.l.b16 %v936
        %v1006 = vunpack.c.l.b16 %v937
        %v1007 = vunpack.c.l.b16 %v938
        %v1008 = vunpack.c.l.b16 %v939
        %v1009 = vunpack.c.l.b16 %v940
        %v1010 = vunpack.c.l.b16 %v941
        %v1011 = vunpack.c.l.b16 %v942
        %v1012 = vunpack.c.l.b16 %v943
        %v1013 = vunpack.c.l.b16 %v944
        %v1014 = vpack.c.b16 %v983, %v982
        %v1015 = vpack.c.b16 %v985, %v984
        %v1016 = vpack.c.b16 %v987, %v986
        %v1017 = vpack.c.b16 %v989, %v988
        %v1018 = vpack.c.b16 %v991, %v990
        %v1019 = vpack.c.b16 %v993, %v992
        %v1020 = vpack.c.b16 %v995, %v994
        %v1021 = vpack.c.b16 %v997, %v996
        %v1022 = vpack.c.b16 %v999, %v998
        %v1023 = vpack.c.b16 %v1001, %v1000
        %v1024 = vpack.c.b16 %v1003, %v1002
        %v1025 = vpack.c.b16 %v1005, %v1004
        %v1026 = vpack.c.b16 %v1007, %v1006
        %v1027 = vpack.c.b16 %v1009, %v1008
        %v1028 = vpack.c.b16 %v1011, %v1010
        %v1029 = vpack.c.b16 %v1013, %v1012
        %v1032 = vunpack.c.l.b16 %v945
        %v1033 = vunpack.c.l.b16 %v946
        %v1034 = vpack.c.b16 %v1033, %v1032
        %v1037 = vsel %vm813, %v1014, 0
        %v1040 = vsel %vm813, %v1015, 0
        %v1043 = vsel %vm813, %v1016, 0
        %v1046 = vsel %vm813, %v1017, 0
        %v1049 = vsel %vm813, %v1018, 0
        %v1052 = vsel %vm813, %v1019, 0
        %v1055 = vsel %vm813, %v1020, 0
        %v1058 = vsel %vm813, %v1021, 0
        %v1061 = vsel %vm813, %v1022, 0
        %v1064 = vsel %vm813, %v1023, 0
        %v1067 = vsel %vm813, %v1024, 0
        %v1070 = vsel %vm813, %v1025, 0
        %v1073 = vsel %vm813, %v1026, 0
        %v1076 = vsel %vm813, %v1027, 0
        %v1079 = vsel %vm813, %v1028, 0
        %v1082 = vsel %vm813, %v1029, 0
        %1084 = vmatpush.bf16.msra.mxu0 0
        %1085 = vmatpush.bf16.msra.mxu0 0
        %1086 = vmatpush.bf16.msra.mxu0 0
        %1087 = vmatpush.bf16.msra.mxu0 0
        %1088 = vmatpush.bf16.msra.mxu0 0
        %1089 = vmatpush.bf16.msra.mxu0 0
        %1090 = vmatpush.bf16.msra.mxu0 0
        %1091 = vmatpush.bf16.msra.mxu0 %v1034
        %1092 = vmatmul.bf16.gmra.mxu0 %v1037
        %v1093 = vpop.f32.mrf.mxu0
        %v1094 = vadd.f32 %v948, %v1093
        %v1095 = vpop.f32.mrf.mxu0
        %v1096 = vadd.f32 %v948, %v1095
        %1097 = vmatmul.bf16.gmra.mxu0 %v1040
        %v1098 = vpop.f32.mrf.mxu0
        %v1099 = vadd.f32 %v948, %v1098
        %v1100 = vpop.f32.mrf.mxu0
        %v1101 = vadd.f32 %v948, %v1100
        %1102 = vmatmul.bf16.gmra.mxu0 %v1043
        %v1103 = vpop.f32.mrf.mxu0
        %v1104 = vadd.f32 %v948, %v1103
        %v1105 = vpop.f32.mrf.mxu0
        %v1106 = vadd.f32 %v948, %v1105
        %1107 = vmatmul.bf16.gmra.mxu0 %v1046
        %v1108 = vpop.f32.mrf.mxu0
        %v1109 = vadd.f32 %v948, %v1108
        %v1110 = vpop.f32.mrf.mxu0
        %v1111 = vadd.f32 %v948, %v1110
        %1112 = vmatmul.bf16.gmra.mxu0 %v1049
        %v1113 = vpop.f32.mrf.mxu0
        %v1114 = vadd.f32 %v948, %v1113
        %v1115 = vpop.f32.mrf.mxu0
        %v1116 = vadd.f32 %v948, %v1115
        %1117 = vmatmul.bf16.gmra.mxu0 %v1052
        %v1118 = vpop.f32.mrf.mxu0
        %v1119 = vadd.f32 %v948, %v1118
        %v1120 = vpop.f32.mrf.mxu0
        %v1121 = vadd.f32 %v948, %v1120
        %1122 = vmatmul.bf16.gmra.mxu0 %v1055
        %v1123 = vpop.f32.mrf.mxu0
        %v1124 = vadd.f32 %v948, %v1123
        %v1125 = vpop.f32.mrf.mxu0
        %v1126 = vadd.f32 %v948, %v1125
        %1127 = vmatmul.bf16.gmra.mxu0 %v1058
        %v1128 = vpop.f32.mrf.mxu0
        %v1129 = vadd.f32 %v948, %v1128
        %v1130 = vpop.f32.mrf.mxu0
        %v1131 = vadd.f32 %v948, %v1130
        %1132 = vmatmul.bf16.gmra.mxu0 %v1061
        %v1133 = vpop.f32.mrf.mxu0
        %v1134 = vadd.f32 %v948, %v1133
        %v1135 = vpop.f32.mrf.mxu0
        %v1136 = vadd.f32 %v948, %v1135
        %1137 = vmatmul.bf16.gmra.mxu0 %v1064
        %v1138 = vpop.f32.mrf.mxu0
        %v1139 = vadd.f32 %v948, %v1138
        %v1140 = vpop.f32.mrf.mxu0
        %v1141 = vadd.f32 %v948, %v1140
        %1142 = vmatmul.bf16.gmra.mxu0 %v1067
        %v1143 = vpop.f32.mrf.mxu0
        %v1144 = vadd.f32 %v948, %v1143
        %v1145 = vpop.f32.mrf.mxu0
        %v1146 = vadd.f32 %v948, %v1145
        %1147 = vmatmul.bf16.gmra.mxu0 %v1070
        %v1148 = vpop.f32.mrf.mxu0
        %v1149 = vadd.f32 %v948, %v1148
        %v1150 = vpop.f32.mrf.mxu0
        %v1151 = vadd.f32 %v948, %v1150
        %1152 = vmatmul.bf16.gmra.mxu0 %v1073
        %v1153 = vpop.f32.mrf.mxu0
        %v1154 = vadd.f32 %v948, %v1153
        %v1155 = vpop.f32.mrf.mxu0
        %v1156 = vadd.f32 %v948, %v1155
        %1157 = vmatmul.bf16.gmra.mxu0 %v1076
        %v1158 = vpop.f32.mrf.mxu0
        %v1159 = vadd.f32 %v948, %v1158
        %v1160 = vpop.f32.mrf.mxu0
        %v1161 = vadd.f32 %v948, %v1160
        %1162 = vmatmul.bf16.gmra.mxu0 %v1079
        %v1163 = vpop.f32.mrf.mxu0
        %v1164 = vadd.f32 %v948, %v1163
        %v1165 = vpop.f32.mrf.mxu0
        %v1166 = vadd.f32 %v948, %v1165
        %1167 = vmatmul.bf16.gmra.mxu0 %v1082
        %v1168 = vpop.f32.mrf.mxu0
        %v1169 = vadd.f32 %v948, %v1168
        %v1170 = vpop.f32.mrf.mxu0
        %v1171 = vadd.f32 %v948, %v1170
        %1172 = vdwg.mxu0
        %v1173 = vld [vmem:[#allocation2] sm:$0xf]
        %v1174 = vld [vmem:[#allocation2 + $0x4] sm:$0xf]
        %v1175 = vld [vmem:[#allocation2 + $0x8] sm:$0x1]
        %v1176 = vld [vmem:[#allocation2 + $0xc] sm:$0xf]
        %v1177 = vld [vmem:[#allocation2 + $0x10] sm:$0xf]
        %v1178 = vld [vmem:[#allocation2 + $0x14] sm:$0x1]
        %v1179 = vld [vmem:[#allocation2 + $0x18] sm:$0xf]
        %v1180 = vld [vmem:[#allocation2 + $0x1c] sm:$0xf]
        %v1181 = vld [vmem:[#allocation2 + $0x20] sm:$0x1]
        %v1182 = vld [vmem:[#allocation2 + $0x24] sm:$0xf]
        %v1183 = vld [vmem:[#allocation2 + $0x28] sm:$0xf]
        %v1184 = vld [vmem:[#allocation2 + $0x2c] sm:$0x1]
        %v1185 = vld [vmem:[#allocation2 + $0x30] sm:$0xf]
        %v1186 = vld [vmem:[#allocation2 + $0x34] sm:$0xf]
        %v1187 = vld [vmem:[#allocation2 + $0x38] sm:$0x1]
        %v1188 = vld [vmem:[#allocation2 + $0x3c] sm:$0xf]
        %v1189 = vld [vmem:[#allocation2 + $0x40] sm:$0xf]
        %v1190 = vld [vmem:[#allocation2 + $0x44] sm:$0x1]
        %v1191 = vld [vmem:[#allocation2 + $0x48] sm:$0xf]
        %v1192 = vld [vmem:[#allocation2 + $0x4c] sm:$0xf]
        %v1193 = vld [vmem:[#allocation2 + $0x50] sm:$0x1]
        %v1194 = vld [vmem:[#allocation2 + $0x54] sm:$0xf]
        %v1195 = vld [vmem:[#allocation2 + $0x58] sm:$0xf]
        %v1196 = vld [vmem:[#allocation2 + $0x5c] sm:$0x1]
        %v1197 = vld [vmem:[#allocation2 + $0x60] sm:$0xf]
        %v1198 = vld [vmem:[#allocation2 + $0x64] sm:$0xf]
        %v1199 = vld [vmem:[#allocation2 + $0x68] sm:$0x1]
        %v1200 = vld [vmem:[#allocation2 + $0x6c] sm:$0xf]
        %v1201 = vld [vmem:[#allocation2 + $0x70] sm:$0xf]
        %v1202 = vld [vmem:[#allocation2 + $0x74] sm:$0x1]
        %v1203 = vld [vmem:[#allocation2 + $0x78] sm:$0xf]
        %v1204 = vld [vmem:[#allocation2 + $0x7c] sm:$0xf]
        %v1205 = vld [vmem:[#allocation2 + $0x80] sm:$0x1]
        %v1206 = vld [vmem:[#allocation2 + $0x84] sm:$0xf]
        %v1207 = vld [vmem:[#allocation2 + $0x88] sm:$0xf]
        %v1208 = vld [vmem:[#allocation2 + $0x8c] sm:$0x1]
        %v1209 = vld [vmem:[#allocation2 + $0x90] sm:$0xf]
        %v1210 = vld [vmem:[#allocation2 + $0x94] sm:$0xf]
        %v1211 = vld [vmem:[#allocation2 + $0x98] sm:$0x1]
        %v1212 = vld [vmem:[#allocation2 + $0x9c] sm:$0xf]
        %v1213 = vld [vmem:[#allocation2 + $0xa0] sm:$0xf]
        %v1214 = vld [vmem:[#allocation2 + $0xa4] sm:$0x1]
        %v1215 = vld [vmem:[#allocation2 + $0xa8] sm:$0xf]
        %v1216 = vld [vmem:[#allocation2 + $0xac] sm:$0xf]
        %v1217 = vld [vmem:[#allocation2 + $0xb0] sm:$0x1]
        %v1218 = vld [vmem:[#allocation2 + $0xb4] sm:$0xf]
        %v1219 = vld [vmem:[#allocation2 + $0xb8] sm:$0xf]
        %v1220 = vld [vmem:[#allocation2 + $0xbc] sm:$0x1]
        %vm1221 = vsmask.f32 3328
        %vm1222 = vsmask.f32 7440
        %vm1223 = vmor %vm1221, %vm1222
        %v1225 = vshrl.u32 %v1173, 16
        %v1227 = vrot.slane %v1225, 4
        %v1228 = vshll.u32 %v1173, 16
        %v1230 = vrot.slane %v1228, 5
        %v1231 = vor.u32 %v1227, %v1230
        %v1232 = vrot.slane %v1231, 4
        %v1234 = vshll.u32 %v1174, 16
        %v1236 = vrot.slane %v1234, 5
        %v1237 = vsel %vm1223, %v1232, %v1236
        %v1238 = vshrl.u32 %v1174, 16
        %v1240 = vrot.slane %v1238, 4
        %v1241 = vor.u32 %v1240, %v1236
        %v1242 = vrot.slane %v1241, 4
        %v1244 = vshll.u32 %v1175, 16
        %v1246 = vrot.slane %v1244, 5
        %v1247 = vsel %vm1223, %v1242, %v1246
        %v1249 = vshrl.u32 %v1176, 16
        %v1251 = vrot.slane %v1249, 4
        %v1252 = vshll.u32 %v1176, 16
        %v1254 = vrot.slane %v1252, 5
        %v1255 = vor.u32 %v1251, %v1254
        %v1256 = vrot.slane %v1255, 4
        %v1258 = vshll.u32 %v1177, 16
        %v1260 = vrot.slane %v1258, 5
        %v1261 = vsel %vm1223, %v1256, %v1260
        %v1262 = vshrl.u32 %v1177, 16
        %v1264 = vrot.slane %v1262, 4
        %v1265 = vor.u32 %v1264, %v1260
        %v1266 = vrot.slane %v1265, 4
        %v1268 = vshll.u32 %v1178, 16
        %v1270 = vrot.slane %v1268, 5
        %v1271 = vsel %vm1223, %v1266, %v1270
        %v1273 = vshrl.u32 %v1179, 16
        %v1275 = vrot.slane %v1273, 4
        %v1276 = vshll.u32 %v1179, 16
        %v1278 = vrot.slane %v1276, 5
        %v1279 = vor.u32 %v1275, %v1278
        %v1280 = vrot.slane %v1279, 4
        %v1282 = vshll.u32 %v1180, 16
        %v1284 = vrot.slane %v1282, 5
        %v1285 = vsel %vm1223, %v1280, %v1284
        %v1286 = vshrl.u32 %v1180, 16
        %v1288 = vrot.slane %v1286, 4
        %v1289 = vor.u32 %v1288, %v1284
        %v1290 = vrot.slane %v1289, 4
        %v1292 = vshll.u32 %v1181, 16
        %v1294 = vrot.slane %v1292, 5
        %v1295 = vsel %vm1223, %v1290, %v1294
        %v1297 = vshrl.u32 %v1182, 16
        %v1299 = vrot.slane %v1297, 4
        %v1300 = vshll.u32 %v1182, 16
        %v1302 = vrot.slane %v1300, 5
        %v1303 = vor.u32 %v1299, %v1302
        %v1304 = vrot.slane %v1303, 4
        %v1306 = vshll.u32 %v1183, 16
        %v1308 = vrot.slane %v1306, 5
        %v1309 = vsel %vm1223, %v1304, %v1308
        %v1310 = vshrl.u32 %v1183, 16
        %v1312 = vrot.slane %v1310, 4
        %v1313 = vor.u32 %v1312, %v1308
        %v1314 = vrot.slane %v1313, 4
        %v1316 = vshll.u32 %v1184, 16
        %v1318 = vrot.slane %v1316, 5
        %v1319 = vsel %vm1223, %v1314, %v1318
        %v1321 = vshrl.u32 %v1185, 16
        %v1323 = vrot.slane %v1321, 4
        %v1324 = vshll.u32 %v1185, 16
        %v1326 = vrot.slane %v1324, 5
        %v1327 = vor.u32 %v1323, %v1326
        %v1328 = vrot.slane %v1327, 4
        %v1330 = vshll.u32 %v1186, 16
        %v1332 = vrot.slane %v1330, 5
        %v1333 = vsel %vm1223, %v1328, %v1332
        %v1334 = vshrl.u32 %v1186, 16
        %v1336 = vrot.slane %v1334, 4
        %v1337 = vor.u32 %v1336, %v1332
        %v1338 = vrot.slane %v1337, 4
        %v1340 = vshll.u32 %v1187, 16
        %v1342 = vrot.slane %v1340, 5
        %v1343 = vsel %vm1223, %v1338, %v1342
        %v1345 = vshrl.u32 %v1188, 16
        %v1347 = vrot.slane %v1345, 4
        %v1348 = vshll.u32 %v1188, 16
        %v1350 = vrot.slane %v1348, 5
        %v1351 = vor.u32 %v1347, %v1350
        %v1352 = vrot.slane %v1351, 4
        %v1354 = vshll.u32 %v1189, 16
        %v1356 = vrot.slane %v1354, 5
        %v1357 = vsel %vm1223, %v1352, %v1356
        %v1358 = vshrl.u32 %v1189, 16
        %v1360 = vrot.slane %v1358, 4
        %v1361 = vor.u32 %v1360, %v1356
        %v1362 = vrot.slane %v1361, 4
        %v1364 = vshll.u32 %v1190, 16
        %v1366 = vrot.slane %v1364, 5
        %v1367 = vsel %vm1223, %v1362, %v1366
        %v1369 = vshrl.u32 %v1191, 16
        %v1371 = vrot.slane %v1369, 4
        %v1372 = vshll.u32 %v1191, 16
        %v1374 = vrot.slane %v1372, 5
        %v1375 = vor.u32 %v1371, %v1374
        %v1376 = vrot.slane %v1375, 4
        %v1378 = vshll.u32 %v1192, 16
        %v1380 = vrot.slane %v1378, 5
        %v1381 = vsel %vm1223, %v1376, %v1380
        %v1382 = vshrl.u32 %v1192, 16
        %v1384 = vrot.slane %v1382, 4
        %v1385 = vor.u32 %v1384, %v1380
        %v1386 = vrot.slane %v1385, 4
        %v1388 = vshll.u32 %v1193, 16
        %v1390 = vrot.slane %v1388, 5
        %v1391 = vsel %vm1223, %v1386, %v1390
        %v1393 = vshrl.u32 %v1194, 16
        %v1395 = vrot.slane %v1393, 4
        %v1396 = vshll.u32 %v1194, 16
        %v1398 = vrot.slane %v1396, 5
        %v1399 = vor.u32 %v1395, %v1398
        %v1400 = vrot.slane %v1399, 4
        %v1402 = vshll.u32 %v1195, 16
        %v1404 = vrot.slane %v1402, 5
        %v1405 = vsel %vm1223, %v1400, %v1404
        %v1406 = vshrl.u32 %v1195, 16
        %v1408 = vrot.slane %v1406, 4
        %v1409 = vor.u32 %v1408, %v1404
        %v1410 = vrot.slane %v1409, 4
        %v1412 = vshll.u32 %v1196, 16
        %v1414 = vrot.slane %v1412, 5
        %v1415 = vsel %vm1223, %v1410, %v1414
        %v1417 = vshrl.u32 %v1197, 16
        %v1419 = vrot.slane %v1417, 4
        %v1420 = vshll.u32 %v1197, 16
        %v1422 = vrot.slane %v1420, 5
        %v1423 = vor.u32 %v1419, %v1422
        %v1424 = vrot.slane %v1423, 4
        %v1426 = vshll.u32 %v1198, 16
        %v1428 = vrot.slane %v1426, 5
        %v1429 = vsel %vm1223, %v1424, %v1428
        %v1430 = vshrl.u32 %v1198, 16
        %v1432 = vrot.slane %v1430, 4
        %v1433 = vor.u32 %v1432, %v1428
        %v1434 = vrot.slane %v1433, 4
        %v1436 = vshll.u32 %v1199, 16
        %v1438 = vrot.slane %v1436, 5
        %v1439 = vsel %vm1223, %v1434, %v1438
        %v1441 = vshrl.u32 %v1200, 16
        %v1443 = vrot.slane %v1441, 4
        %v1444 = vshll.u32 %v1200, 16
        %v1446 = vrot.slane %v1444, 5
        %v1447 = vor.u32 %v1443, %v1446
        %v1448 = vrot.slane %v1447, 4
        %v1450 = vshll.u32 %v1201, 16
        %v1452 = vrot.slane %v1450, 5
        %v1453 = vsel %vm1223, %v1448, %v1452
        %v1454 = vshrl.u32 %v1201, 16
        %v1456 = vrot.slane %v1454, 4
        %v1457 = vor.u32 %v1456, %v1452
        %v1458 = vrot.slane %v1457, 4
        %v1460 = vshll.u32 %v1202, 16
        %v1462 = vrot.slane %v1460, 5
        %v1463 = vsel %vm1223, %v1458, %v1462
        %v1465 = vshrl.u32 %v1203, 16
        %v1467 = vrot.slane %v1465, 4
        %v1468 = vshll.u32 %v1203, 16
        %v1470 = vrot.slane %v1468, 5
        %v1471 = vor.u32 %v1467, %v1470
        %v1472 = vrot.slane %v1471, 4
        %v1474 = vshll.u32 %v1204, 16
        %v1476 = vrot.slane %v1474, 5
        %v1477 = vsel %vm1223, %v1472, %v1476
        %v1478 = vshrl.u32 %v1204, 16
        %v1480 = vrot.slane %v1478, 4
        %v1481 = vor.u32 %v1480, %v1476
        %v1482 = vrot.slane %v1481, 4
        %v1484 = vshll.u32 %v1205, 16
        %v1486 = vrot.slane %v1484, 5
        %v1487 = vsel %vm1223, %v1482, %v1486
        %v1489 = vshrl.u32 %v1206, 16
        %v1491 = vrot.slane %v1489, 4
        %v1492 = vshll.u32 %v1206, 16
        %v1494 = vrot.slane %v1492, 5
        %v1495 = vor.u32 %v1491, %v1494
        %v1496 = vrot.slane %v1495, 4
        %v1498 = vshll.u32 %v1207, 16
        %v1500 = vrot.slane %v1498, 5
        %v1501 = vsel %vm1223, %v1496, %v1500
        %v1502 = vshrl.u32 %v1207, 16
        %v1504 = vrot.slane %v1502, 4
        %v1505 = vor.u32 %v1504, %v1500
        %v1506 = vrot.slane %v1505, 4
        %v1508 = vshll.u32 %v1208, 16
        %v1510 = vrot.slane %v1508, 5
        %v1511 = vsel %vm1223, %v1506, %v1510
        %v1513 = vshrl.u32 %v1209, 16
        %v1515 = vrot.slane %v1513, 4
        %v1516 = vshll.u32 %v1209, 16
        %v1518 = vrot.slane %v1516, 5
        %v1519 = vor.u32 %v1515, %v1518
        %v1520 = vrot.slane %v1519, 4
        %v1522 = vshll.u32 %v1210, 16
        %v1524 = vrot.slane %v1522, 5
        %v1525 = vsel %vm1223, %v1520, %v1524
        %v1526 = vshrl.u32 %v1210, 16
        %v1528 = vrot.slane %v1526, 4
        %v1529 = vor.u32 %v1528, %v1524
        %v1530 = vrot.slane %v1529, 4
        %v1532 = vshll.u32 %v1211, 16
        %v1534 = vrot.slane %v1532, 5
        %v1535 = vsel %vm1223, %v1530, %v1534
        %v1537 = vshrl.u32 %v1212, 16
        %v1539 = vrot.slane %v1537, 4
        %v1540 = vshll.u32 %v1212, 16
        %v1542 = vrot.slane %v1540, 5
        %v1543 = vor.u32 %v1539, %v1542
        %v1544 = vrot.slane %v1543, 4
        %v1546 = vshll.u32 %v1213, 16
        %v1548 = vrot.slane %v1546, 5
        %v1549 = vsel %vm1223, %v1544, %v1548
        %v1550 = vshrl.u32 %v1213, 16
        %v1552 = vrot.slane %v1550, 4
        %v1553 = vor.u32 %v1552, %v1548
        %v1554 = vrot.slane %v1553, 4
        %v1556 = vshll.u32 %v1214, 16
        %v1558 = vrot.slane %v1556, 5
        %v1559 = vsel %vm1223, %v1554, %v1558
        %v1561 = vshrl.u32 %v1215, 16
        %v1563 = vrot.slane %v1561, 4
        %v1564 = vshll.u32 %v1215, 16
        %v1566 = vrot.slane %v1564, 5
        %v1567 = vor.u32 %v1563, %v1566
        %v1568 = vrot.slane %v1567, 4
        %v1570 = vshll.u32 %v1216, 16
        %v1572 = vrot.slane %v1570, 5
        %v1573 = vsel %vm1223, %v1568, %v1572
        %v1574 = vshrl.u32 %v1216, 16
        %v1576 = vrot.slane %v1574, 4
        %v1577 = vor.u32 %v1576, %v1572
        %v1578 = vrot.slane %v1577, 4
        %v1580 = vshll.u32 %v1217, 16
        %v1582 = vrot.slane %v1580, 5
        %v1583 = vsel %vm1223, %v1578, %v1582
        %v1585 = vshrl.u32 %v1218, 16
        %v1587 = vrot.slane %v1585, 4
        %v1588 = vshll.u32 %v1218, 16
        %v1590 = vrot.slane %v1588, 5
        %v1591 = vor.u32 %v1587, %v1590
        %v1592 = vrot.slane %v1591, 4
        %v1594 = vshll.u32 %v1219, 16
        %v1596 = vrot.slane %v1594, 5
        %v1597 = vsel %vm1223, %v1592, %v1596
        %v1598 = vshrl.u32 %v1219, 16
        %v1600 = vrot.slane %v1598, 4
        %v1601 = vor.u32 %v1600, %v1596
        %v1602 = vrot.slane %v1601, 4
        %v1604 = vshll.u32 %v1220, 16
        %v1606 = vrot.slane %v1604, 5
        %v1607 = vsel %vm1223, %v1602, %v1606
        %s1608 = scalar_lea.vmem [#allocation6], 8
        %v1609 = vld [vmem:[%s1608] sm:$0xf]
        %v1610 = vld [vmem:[%s1608 + $0x4] sm:$0xf]
        %v1611 = vunpack.c.l.b16 %v1237
        %v1612 = vunpack.c.l.b16 %v1247
        %v1613 = vunpack.c.l.b16 %v1261
        %v1614 = vunpack.c.l.b16 %v1271
        %v1615 = vunpack.c.l.b16 %v1285
        %v1616 = vunpack.c.l.b16 %v1295
        %v1617 = vunpack.c.l.b16 %v1309
        %v1618 = vunpack.c.l.b16 %v1319
        %v1619 = vunpack.c.l.b16 %v1333
        %v1620 = vunpack.c.l.b16 %v1343
        %v1621 = vunpack.c.l.b16 %v1357
        %v1622 = vunpack.c.l.b16 %v1367
        %v1623 = vunpack.c.l.b16 %v1381
        %v1624 = vunpack.c.l.b16 %v1391
        %v1625 = vunpack.c.l.b16 %v1405
        %v1626 = vunpack.c.l.b16 %v1415
        %v1627 = vunpack.c.l.b16 %v1429
        %v1628 = vunpack.c.l.b16 %v1439
        %v1629 = vunpack.c.l.b16 %v1453
        %v1630 = vunpack.c.l.b16 %v1463
        %v1631 = vunpack.c.l.b16 %v1477
        %v1632 = vunpack.c.l.b16 %v1487
        %v1633 = vunpack.c.l.b16 %v1501
        %v1634 = vunpack.c.l.b16 %v1511
        %v1635 = vunpack.c.l.b16 %v1525
        %v1636 = vunpack.c.l.b16 %v1535
        %v1637 = vunpack.c.l.b16 %v1549
        %v1638 = vunpack.c.l.b16 %v1559
        %v1639 = vunpack.c.l.b16 %v1573
        %v1640 = vunpack.c.l.b16 %v1583
        %v1641 = vunpack.c.l.b16 %v1597
        %v1642 = vunpack.c.l.b16 %v1607
        %v1643 = vpack.c.b16 %v1612, %v1611
        %v1644 = vpack.c.b16 %v1614, %v1613
        %v1645 = vpack.c.b16 %v1616, %v1615
        %v1646 = vpack.c.b16 %v1618, %v1617
        %v1647 = vpack.c.b16 %v1620, %v1619
        %v1648 = vpack.c.b16 %v1622, %v1621
        %v1649 = vpack.c.b16 %v1624, %v1623
        %v1650 = vpack.c.b16 %v1626, %v1625
        %v1651 = vpack.c.b16 %v1628, %v1627
        %v1652 = vpack.c.b16 %v1630, %v1629
        %v1653 = vpack.c.b16 %v1632, %v1631
        %v1654 = vpack.c.b16 %v1634, %v1633
        %v1655 = vpack.c.b16 %v1636, %v1635
        %v1656 = vpack.c.b16 %v1638, %v1637
        %v1657 = vpack.c.b16 %v1640, %v1639
        %v1658 = vpack.c.b16 %v1642, %v1641
        %v1661 = vunpack.c.l.b16 %v1609
        %v1662 = vunpack.c.l.b16 %v1610
        %v1663 = vpack.c.b16 %v1662, %v1661
        %v1666 = vsel %vm813, %v1643, 0
        %v1669 = vsel %vm813, %v1644, 0
        %v1672 = vsel %vm813, %v1645, 0
        %v1675 = vsel %vm813, %v1646, 0
        %v1678 = vsel %vm813, %v1647, 0
        %v1681 = vsel %vm813, %v1648, 0
        %v1684 = vsel %vm813, %v1649, 0
        %v1687 = vsel %vm813, %v1650, 0
        %v1690 = vsel %vm813, %v1651, 0
        %v1693 = vsel %vm813, %v1652, 0
        %v1696 = vsel %vm813, %v1653, 0
        %v1699 = vsel %vm813, %v1654, 0
        %v1702 = vsel %vm813, %v1655, 0
        %v1705 = vsel %vm813, %v1656, 0
        %v1708 = vsel %vm813, %v1657, 0
        %v1711 = vsel %vm813, %v1658, 0
        %1713 = vmatpush.bf16.msra.mxu0 0
        %1714 = vmatpush.bf16.msra.mxu0 0
        %1715 = vmatpush.bf16.msra.mxu0 0
        %1716 = vmatpush.bf16.msra.mxu0 0
        %1717 = vmatpush.bf16.msra.mxu0 0
        %1718 = vmatpush.bf16.msra.mxu0 0
        %1719 = vmatpush.bf16.msra.mxu0 0
        %1720 = vmatpush.bf16.msra.mxu0 %v1663
        %1721 = vmatmul.bf16.gmra.mxu0 %v1666
        %v1722 = vpop.f32.mrf.mxu0
        %v1723 = vadd.f32 0.0, %v1722
        %v1724 = vpop.f32.mrf.mxu0
        %v1725 = vadd.f32 0.0, %v1724
        %1726 = vmatmul.bf16.gmra.mxu0 %v1669
        %v1727 = vpop.f32.mrf.mxu0
        %v1728 = vadd.f32 0.0, %v1727
        %v1729 = vpop.f32.mrf.mxu0
        %v1730 = vadd.f32 0.0, %v1729
        %1731 = vmatmul.bf16.gmra.mxu0 %v1672
        %v1732 = vpop.f32.mrf.mxu0
        %v1733 = vadd.f32 0.0, %v1732
        %v1734 = vpop.f32.mrf.mxu0
        %v1735 = vadd.f32 0.0, %v1734
        %1736 = vmatmul.bf16.gmra.mxu0 %v1675
        %v1737 = vpop.f32.mrf.mxu0
        %v1738 = vadd.f32 0.0, %v1737
        %v1739 = vpop.f32.mrf.mxu0
        %v1740 = vadd.f32 0.0, %v1739
        %1741 = vmatmul.bf16.gmra.mxu0 %v1678
        %v1742 = vpop.f32.mrf.mxu0
        %v1743 = vadd.f32 0.0, %v1742
        %v1744 = vpop.f32.mrf.mxu0
        %v1745 = vadd.f32 0.0, %v1744
        %1746 = vmatmul.bf16.gmra.mxu0 %v1681
        %v1747 = vpop.f32.mrf.mxu0
        %v1748 = vadd.f32 0.0, %v1747
        %v1749 = vpop.f32.mrf.mxu0
        %v1750 = vadd.f32 0.0, %v1749
        %1751 = vmatmul.bf16.gmra.mxu0 %v1684
        %v1752 = vpop.f32.mrf.mxu0
        %v1753 = vadd.f32 0.0, %v1752
        %v1754 = vpop.f32.mrf.mxu0
        %v1755 = vadd.f32 0.0, %v1754
        %1756 = vmatmul.bf16.gmra.mxu0 %v1687
        %v1757 = vpop.f32.mrf.mxu0
        %v1758 = vadd.f32 0.0, %v1757
        %v1759 = vpop.f32.mrf.mxu0
        %v1760 = vadd.f32 0.0, %v1759
        %1761 = vmatmul.bf16.gmra.mxu0 %v1690
        %v1762 = vpop.f32.mrf.mxu0
        %v1763 = vadd.f32 0.0, %v1762
        %v1764 = vpop.f32.mrf.mxu0
        %v1765 = vadd.f32 0.0, %v1764
        %1766 = vmatmul.bf16.gmra.mxu0 %v1693
        %v1767 = vpop.f32.mrf.mxu0
        %v1768 = vadd.f32 0.0, %v1767
        %v1769 = vpop.f32.mrf.mxu0
        %v1770 = vadd.f32 0.0, %v1769
        %1771 = vmatmul.bf16.gmra.mxu0 %v1696
        %v1772 = vpop.f32.mrf.mxu0
        %v1773 = vadd.f32 0.0, %v1772
        %v1774 = vpop.f32.mrf.mxu0
        %v1775 = vadd.f32 0.0, %v1774
        %1776 = vmatmul.bf16.gmra.mxu0 %v1699
        %v1777 = vpop.f32.mrf.mxu0
        %v1778 = vadd.f32 0.0, %v1777
        %v1779 = vpop.f32.mrf.mxu0
        %v1780 = vadd.f32 0.0, %v1779
        %1781 = vmatmul.bf16.gmra.mxu0 %v1702
        %v1782 = vpop.f32.mrf.mxu0
        %v1783 = vadd.f32 0.0, %v1782
        %v1784 = vpop.f32.mrf.mxu0
        %v1785 = vadd.f32 0.0, %v1784
        %1786 = vmatmul.bf16.gmra.mxu0 %v1705
        %v1787 = vpop.f32.mrf.mxu0
        %v1788 = vadd.f32 0.0, %v1787
        %v1789 = vpop.f32.mrf.mxu0
        %v1790 = vadd.f32 0.0, %v1789
        %1791 = vmatmul.bf16.gmra.mxu0 %v1708
        %v1792 = vpop.f32.mrf.mxu0
        %v1793 = vadd.f32 0.0, %v1792
        %v1794 = vpop.f32.mrf.mxu0
        %v1795 = vadd.f32 0.0, %v1794
        %1796 = vmatmul.bf16.gmra.mxu0 %v1711
        %v1797 = vpop.f32.mrf.mxu0
        %v1798 = vadd.f32 0.0, %v1797
        %v1799 = vpop.f32.mrf.mxu0
        %v1800 = vadd.f32 0.0, %v1799
        %1801 = vdwg.mxu0
        %v1802 = vadd.f32 %v1094, %v1723
        %v1803 = vadd.f32 %v1096, %v1725
        %v1804 = vadd.f32 %v1099, %v1728
        %v1805 = vadd.f32 %v1101, %v1730
        %v1806 = vadd.f32 %v1104, %v1733
        %v1807 = vadd.f32 %v1106, %v1735
        %v1808 = vadd.f32 %v1109, %v1738
        %v1809 = vadd.f32 %v1111, %v1740
        %v1810 = vadd.f32 %v1114, %v1743
        %v1811 = vadd.f32 %v1116, %v1745
        %v1812 = vadd.f32 %v1119, %v1748
        %v1813 = vadd.f32 %v1121, %v1750
        %v1814 = vadd.f32 %v1124, %v1753
        %v1815 = vadd.f32 %v1126, %v1755
        %v1816 = vadd.f32 %v1129, %v1758
        %v1817 = vadd.f32 %v1131, %v1760
        %v1818 = vadd.f32 %v1134, %v1763
        %v1819 = vadd.f32 %v1136, %v1765
        %v1820 = vadd.f32 %v1139, %v1768
        %v1821 = vadd.f32 %v1141, %v1770
        %v1822 = vadd.f32 %v1144, %v1773
        %v1823 = vadd.f32 %v1146, %v1775
        %v1824 = vadd.f32 %v1149, %v1778
        %v1825 = vadd.f32 %v1151, %v1780
        %v1826 = vadd.f32 %v1154, %v1783
        %v1827 = vadd.f32 %v1156, %v1785
        %v1828 = vadd.f32 %v1159, %v1788
        %v1829 = vadd.f32 %v1161, %v1790
        %v1830 = vadd.f32 %v1164, %v1793
        %v1831 = vadd.f32 %v1166, %v1795
        %v1832 = vadd.f32 %v1169, %v1798
        %v1833 = vadd.f32 %v1171, %v1800
        %v1834 = vld [vmem:[#allocation2] sm:$0xe]
        %v1835 = vld [vmem:[#allocation2 + $0xc] sm:$0xe]
        %v1836 = vld [vmem:[#allocation2 + $0x18] sm:$0xe]
        %v1837 = vld [vmem:[#allocation2 + $0x24] sm:$0xe]
        %v1838 = vld [vmem:[#allocation2 + $0x30] sm:$0xe]
        %v1839 = vld [vmem:[#allocation2 + $0x3c] sm:$0xe]
        %v1840 = vld [vmem:[#allocation2 + $0x48] sm:$0xe]
        %v1841 = vld [vmem:[#allocation2 + $0x54] sm:$0xe]
        %v1842 = vld [vmem:[#allocation2 + $0x60] sm:$0xe]
        %v1843 = vld [vmem:[#allocation2 + $0x6c] sm:$0xe]
        %v1844 = vld [vmem:[#allocation2 + $0x78] sm:$0xe]
        %v1845 = vld [vmem:[#allocation2 + $0x84] sm:$0xe]
        %v1846 = vld [vmem:[#allocation2 + $0x90] sm:$0xe]
        %v1847 = vld [vmem:[#allocation2 + $0x9c] sm:$0xe]
        %v1848 = vld [vmem:[#allocation2 + $0xa8] sm:$0xe]
        %v1849 = vld [vmem:[#allocation2 + $0xb4] sm:$0xe]
        %vm1898 = vcmask 1042432
        %vm1899 = vcmask 1046532
        %vm1900 = vmor %vm1898, %vm1899
        %v1901 = vrot.slane %v1834, 5
        %v1902 = vrot.slane %v1901, 4
        %v1903 = vrot.slane %v1174, 5
        %v1904 = vsel %vm1900, %v1902, %v1903
        %v1905 = vrot.slane %v1903, 4
        %v1906 = vrot.slane %v1175, 5
        %v1907 = vsel %vm1900, %v1905, %v1906
        %v1908 = vrot.slane %v1835, 5
        %v1909 = vrot.slane %v1908, 4
        %v1910 = vrot.slane %v1177, 5
        %v1911 = vsel %vm1900, %v1909, %v1910
        %v1912 = vrot.slane %v1910, 4
        %v1913 = vrot.slane %v1178, 5
        %v1914 = vsel %vm1900, %v1912, %v1913
        %v1915 = vrot.slane %v1836, 5
        %v1916 = vrot.slane %v1915, 4
        %v1917 = vrot.slane %v1180, 5
        %v1918 = vsel %vm1900, %v1916, %v1917
        %v1919 = vrot.slane %v1917, 4
        %v1920 = vrot.slane %v1181, 5
        %v1921 = vsel %vm1900, %v1919, %v1920
        %v1922 = vrot.slane %v1837, 5
        %v1923 = vrot.slane %v1922, 4
        %v1924 = vrot.slane %v1183, 5
        %v1925 = vsel %vm1900, %v1923, %v1924
        %v1926 = vrot.slane %v1924, 4
        %v1927 = vrot.slane %v1184, 5
        %v1928 = vsel %vm1900, %v1926, %v1927
        %v1929 = vrot.slane %v1838, 5
        %v1930 = vrot.slane %v1929, 4
        %v1931 = vrot.slane %v1186, 5
        %v1932 = vsel %vm1900, %v1930, %v1931
        %v1933 = vrot.slane %v1931, 4
        %v1934 = vrot.slane %v1187, 5
        %v1935 = vsel %vm1900, %v1933, %v1934
        %v1936 = vrot.slane %v1839, 5
        %v1937 = vrot.slane %v1936, 4
        %v1938 = vrot.slane %v1189, 5
        %v1939 = vsel %vm1900, %v1937, %v1938
        %v1940 = vrot.slane %v1938, 4
        %v1941 = vrot.slane %v1190, 5
        %v1942 = vsel %vm1900, %v1940, %v1941
        %v1943 = vrot.slane %v1840, 5
        %v1944 = vrot.slane %v1943, 4
        %v1945 = vrot.slane %v1192, 5
        %v1946 = vsel %vm1900, %v1944, %v1945
        %v1947 = vrot.slane %v1945, 4
        %v1948 = vrot.slane %v1193, 5
        %v1949 = vsel %vm1900, %v1947, %v1948
        %v1950 = vrot.slane %v1841, 5
        %v1951 = vrot.slane %v1950, 4
        %v1952 = vrot.slane %v1195, 5
        %v1953 = vsel %vm1900, %v1951, %v1952
        %v1954 = vrot.slane %v1952, 4
        %v1955 = vrot.slane %v1196, 5
        %v1956 = vsel %vm1900, %v1954, %v1955
        %v1957 = vrot.slane %v1842, 5
        %v1958 = vrot.slane %v1957, 4
        %v1959 = vrot.slane %v1198, 5
        %v1960 = vsel %vm1900, %v1958, %v1959
        %v1961 = vrot.slane %v1959, 4
        %v1962 = vrot.slane %v1199, 5
        %v1963 = vsel %vm1900, %v1961, %v1962
        %v1964 = vrot.slane %v1843, 5
        %v1965 = vrot.slane %v1964, 4
        %v1966 = vrot.slane %v1201, 5
        %v1967 = vsel %vm1900, %v1965, %v1966
        %v1968 = vrot.slane %v1966, 4
        %v1969 = vrot.slane %v1202, 5
        %v1970 = vsel %vm1900, %v1968, %v1969
        %v1971 = vrot.slane %v1844, 5
        %v1972 = vrot.slane %v1971, 4
        %v1973 = vrot.slane %v1204, 5
        %v1974 = vsel %vm1900, %v1972, %v1973
        %v1975 = vrot.slane %v1973, 4
        %v1976 = vrot.slane %v1205, 5
        %v1977 = vsel %vm1900, %v1975, %v1976
        %v1978 = vrot.slane %v1845, 5
        %v1979 = vrot.slane %v1978, 4
        %v1980 = vrot.slane %v1207, 5
        %v1981 = vsel %vm1900, %v1979, %v1980
        %v1982 = vrot.slane %v1980, 4
        %v1983 = vrot.slane %v1208, 5
        %v1984 = vsel %vm1900, %v1982, %v1983
        %v1985 = vrot.slane %v1846, 5
        %v1986 = vrot.slane %v1985, 4
        %v1987 = vrot.slane %v1210, 5
        %v1988 = vsel %vm1900, %v1986, %v1987
        %v1989 = vrot.slane %v1987, 4
        %v1990 = vrot.slane %v1211, 5
        %v1991 = vsel %vm1900, %v1989, %v1990
        %v1992 = vrot.slane %v1847, 5
        %v1993 = vrot.slane %v1992, 4
        %v1994 = vrot.slane %v1213, 5
        %v1995 = vsel %vm1900, %v1993, %v1994
        %v1996 = vrot.slane %v1994, 4
        %v1997 = vrot.slane %v1214, 5
        %v1998 = vsel %vm1900, %v1996, %v1997
        %v1999 = vrot.slane %v1848, 5
        %v2000 = vrot.slane %v1999, 4
        %v2001 = vrot.slane %v1216, 5
        %v2002 = vsel %vm1900, %v2000, %v2001
        %v2003 = vrot.slane %v2001, 4
        %v2004 = vrot.slane %v1217, 5
        %v2005 = vsel %vm1900, %v2003, %v2004
        %v2006 = vrot.slane %v1849, 5
        %v2007 = vrot.slane %v2006, 4
        %v2008 = vrot.slane %v1219, 5
        %v2009 = vsel %vm1900, %v2007, %v2008
        %v2010 = vrot.slane %v2008, 4
        %v2011 = vrot.slane %v1220, 5
        %v2012 = vsel %vm1900, %v2010, %v2011
        %s2013 = scalar_lea.vmem [#allocation6], 16
        %v2014 = vld [vmem:[%s2013] sm:$0xf]
        %v2015 = vld [vmem:[%s2013 + $0x4] sm:$0xf]
        %v2016 = vunpack.c.l.b16 %v1904
        %v2017 = vunpack.c.l.b16 %v1907
        %v2018 = vunpack.c.l.b16 %v1911
        %v2019 = vunpack.c.l.b16 %v1914
        %v2020 = vunpack.c.l.b16 %v1918
        %v2021 = vunpack.c.l.b16 %v1921
        %v2022 = vunpack.c.l.b16 %v1925
        %v2023 = vunpack.c.l.b16 %v1928
        %v2024 = vunpack.c.l.b16 %v1932
        %v2025 = vunpack.c.l.b16 %v1935
        %v2026 = vunpack.c.l.b16 %v1939
        %v2027 = vunpack.c.l.b16 %v1942
        %v2028 = vunpack.c.l.b16 %v1946
        %v2029 = vunpack.c.l.b16 %v1949
        %v2030 = vunpack.c.l.b16 %v1953
        %v2031 = vunpack.c.l.b16 %v1956
        %v2032 = vunpack.c.l.b16 %v1960
        %v2033 = vunpack.c.l.b16 %v1963
        %v2034 = vunpack.c.l.b16 %v1967
        %v2035 = vunpack.c.l.b16 %v1970
        %v2036 = vunpack.c.l.b16 %v1974
        %v2037 = vunpack.c.l.b16 %v1977
        %v2038 = vunpack.c.l.b16 %v1981
        %v2039 = vunpack.c.l.b16 %v1984
        %v2040 = vunpack.c.l.b16 %v1988
        %v2041 = vunpack.c.l.b16 %v1991
        %v2042 = vunpack.c.l.b16 %v1995
        %v2043 = vunpack.c.l.b16 %v1998
        %v2044 = vunpack.c.l.b16 %v2002
        %v2045 = vunpack.c.l.b16 %v2005
        %v2046 = vunpack.c.l.b16 %v2009
        %v2047 = vunpack.c.l.b16 %v2012
        %v2048 = vpack.c.b16 %v2017, %v2016
        %v2049 = vpack.c.b16 %v2019, %v2018
        %v2050 = vpack.c.b16 %v2021, %v2020
        %v2051 = vpack.c.b16 %v2023, %v2022
        %v2052 = vpack.c.b16 %v2025, %v2024
        %v2053 = vpack.c.b16 %v2027, %v2026
        %v2054 = vpack.c.b16 %v2029, %v2028
        %v2055 = vpack.c.b16 %v2031, %v2030
        %v2056 = vpack.c.b16 %v2033, %v2032
        %v2057 = vpack.c.b16 %v2035, %v2034
        %v2058 = vpack.c.b16 %v2037, %v2036
        %v2059 = vpack.c.b16 %v2039, %v2038
        %v2060 = vpack.c.b16 %v2041, %v2040
        %v2061 = vpack.c.b16 %v2043, %v2042
        %v2062 = vpack.c.b16 %v2045, %v2044
        %v2063 = vpack.c.b16 %v2047, %v2046
        %v2066 = vunpack.c.l.b16 %v2014
        %v2067 = vunpack.c.l.b16 %v2015
        %v2068 = vpack.c.b16 %v2067, %v2066
        %v2071 = vsel %vm813, %v2048, 0
        %v2074 = vsel %vm813, %v2049, 0
        %v2077 = vsel %vm813, %v2050, 0
        %v2080 = vsel %vm813, %v2051, 0
        %v2083 = vsel %vm813, %v2052, 0
        %v2086 = vsel %vm813, %v2053, 0
        %v2089 = vsel %vm813, %v2054, 0
        %v2092 = vsel %vm813, %v2055, 0
        %v2095 = vsel %vm813, %v2056, 0
        %v2098 = vsel %vm813, %v2057, 0
        %v2101 = vsel %vm813, %v2058, 0
        %v2104 = vsel %vm813, %v2059, 0
        %v2107 = vsel %vm813, %v2060, 0
        %v2110 = vsel %vm813, %v2061, 0
        %v2113 = vsel %vm813, %v2062, 0
        %v2116 = vsel %vm813, %v2063, 0
        %2118 = vmatpush.bf16.msra.mxu0 0
        %2119 = vmatpush.bf16.msra.mxu0 0
        %2120 = vmatpush.bf16.msra.mxu0 0
        %2121 = vmatpush.bf16.msra.mxu0 0
        %2122 = vmatpush.bf16.msra.mxu0 0
        %2123 = vmatpush.bf16.msra.mxu0 0
        %2124 = vmatpush.bf16.msra.mxu0 0
        %2125 = vmatpush.bf16.msra.mxu0 %v2068
        %2126 = vmatmul.bf16.gmra.mxu0 %v2071
        %v2127 = vpop.f32.mrf.mxu0
        %v2128 = vadd.f32 0.0, %v2127
        %v2129 = vpop.f32.mrf.mxu0
        %v2130 = vadd.f32 0.0, %v2129
        %2131 = vmatmul.bf16.gmra.mxu0 %v2074
        %v2132 = vpop.f32.mrf.mxu0
        %v2133 = vadd.f32 0.0, %v2132
        %v2134 = vpop.f32.mrf.mxu0
        %v2135 = vadd.f32 0.0, %v2134
        %2136 = vmatmul.bf16.gmra.mxu0 %v2077
        %v2137 = vpop.f32.mrf.mxu0
        %v2138 = vadd.f32 0.0, %v2137
        %v2139 = vpop.f32.mrf.mxu0
        %v2140 = vadd.f32 0.0, %v2139
        %2141 = vmatmul.bf16.gmra.mxu0 %v2080
        %v2142 = vpop.f32.mrf.mxu0
        %v2143 = vadd.f32 0.0, %v2142
        %v2144 = vpop.f32.mrf.mxu0
        %v2145 = vadd.f32 0.0, %v2144
        %2146 = vmatmul.bf16.gmra.mxu0 %v2083
        %v2147 = vpop.f32.mrf.mxu0
        %v2148 = vadd.f32 0.0, %v2147
        %v2149 = vpop.f32.mrf.mxu0
        %v2150 = vadd.f32 0.0, %v2149
        %2151 = vmatmul.bf16.gmra.mxu0 %v2086
        %v2152 = vpop.f32.mrf.mxu0
        %v2153 = vadd.f32 0.0, %v2152
        %v2154 = vpop.f32.mrf.mxu0
        %v2155 = vadd.f32 0.0, %v2154
        %2156 = vmatmul.bf16.gmra.mxu0 %v2089
        %v2157 = vpop.f32.mrf.mxu0
        %v2158 = vadd.f32 0.0, %v2157
        %v2159 = vpop.f32.mrf.mxu0
        %v2160 = vadd.f32 0.0, %v2159
        %2161 = vmatmul.bf16.gmra.mxu0 %v2092
        %v2162 = vpop.f32.mrf.mxu0
        %v2163 = vadd.f32 0.0, %v2162
        %v2164 = vpop.f32.mrf.mxu0
        %v2165 = vadd.f32 0.0, %v2164
        %2166 = vmatmul.bf16.gmra.mxu0 %v2095
        %v2167 = vpop.f32.mrf.mxu0
        %v2168 = vadd.f32 0.0, %v2167
        %v2169 = vpop.f32.mrf.mxu0
        %v2170 = vadd.f32 0.0, %v2169
        %2171 = vmatmul.bf16.gmra.mxu0 %v2098
        %v2172 = vpop.f32.mrf.mxu0
        %v2173 = vadd.f32 0.0, %v2172
        %v2174 = vpop.f32.mrf.mxu0
        %v2175 = vadd.f32 0.0, %v2174
        %2176 = vmatmul.bf16.gmra.mxu0 %v2101
        %v2177 = vpop.f32.mrf.mxu0
        %v2178 = vadd.f32 0.0, %v2177
        %v2179 = vpop.f32.mrf.mxu0
        %v2180 = vadd.f32 0.0, %v2179
        %2181 = vmatmul.bf16.gmra.mxu0 %v2104
        %v2182 = vpop.f32.mrf.mxu0
        %v2183 = vadd.f32 0.0, %v2182
        %v2184 = vpop.f32.mrf.mxu0
        %v2185 = vadd.f32 0.0, %v2184
        %2186 = vmatmul.bf16.gmra.mxu0 %v2107
        %v2187 = vpop.f32.mrf.mxu0
        %v2188 = vadd.f32 0.0, %v2187
        %v2189 = vpop.f32.mrf.mxu0
        %v2190 = vadd.f32 0.0, %v2189
        %2191 = vmatmul.bf16.gmra.mxu0 %v2110
        %v2192 = vpop.f32.mrf.mxu0
        %v2193 = vadd.f32 0.0, %v2192
        %v2194 = vpop.f32.mrf.mxu0
        %v2195 = vadd.f32 0.0, %v2194
        %2196 = vmatmul.bf16.gmra.mxu0 %v2113
        %v2197 = vpop.f32.mrf.mxu0
        %v2198 = vadd.f32 0.0, %v2197
        %v2199 = vpop.f32.mrf.mxu0
        %v2200 = vadd.f32 0.0, %v2199
        %2201 = vmatmul.bf16.gmra.mxu0 %v2116
        %v2202 = vpop.f32.mrf.mxu0
        %v2203 = vadd.f32 0.0, %v2202
        %v2204 = vpop.f32.mrf.mxu0
        %v2205 = vadd.f32 0.0, %v2204
        %2206 = vdwg.mxu0
        %v2207 = vadd.f32 %v1802, %v2128
        %v2208 = vadd.f32 %v1803, %v2130
        %v2209 = vadd.f32 %v1804, %v2133
        %v2210 = vadd.f32 %v1805, %v2135
        %v2211 = vadd.f32 %v1806, %v2138
        %v2212 = vadd.f32 %v1807, %v2140
        %v2213 = vadd.f32 %v1808, %v2143
        %v2214 = vadd.f32 %v1809, %v2145
        %v2215 = vadd.f32 %v1810, %v2148
        %v2216 = vadd.f32 %v1811, %v2150
        %v2217 = vadd.f32 %v1812, %v2153
        %v2218 = vadd.f32 %v1813, %v2155
        %v2219 = vadd.f32 %v1814, %v2158
        %v2220 = vadd.f32 %v1815, %v2160
        %v2221 = vadd.f32 %v1816, %v2163
        %v2222 = vadd.f32 %v1817, %v2165
        %v2223 = vadd.f32 %v1818, %v2168
        %v2224 = vadd.f32 %v1819, %v2170
        %v2225 = vadd.f32 %v1820, %v2173
        %v2226 = vadd.f32 %v1821, %v2175
        %v2227 = vadd.f32 %v1822, %v2178
        %v2228 = vadd.f32 %v1823, %v2180
        %v2229 = vadd.f32 %v1824, %v2183
        %v2230 = vadd.f32 %v1825, %v2185
        %v2231 = vadd.f32 %v1826, %v2188
        %v2232 = vadd.f32 %v1827, %v2190
        %v2233 = vadd.f32 %v1828, %v2193
        %v2234 = vadd.f32 %v1829, %v2195
        %v2235 = vadd.f32 %v1830, %v2198
        %v2236 = vadd.f32 %v1831, %v2200
        %v2237 = vadd.f32 %v1832, %v2203
        %v2238 = vadd.f32 %v1833, %v2205
        %v2239 = vld [vmem:[%s663] sm:$0xf]
        %v2240 = vld [vmem:[%s663 + $0x4] sm:$0xf]
        %v2241 = vld [vmem:[%s663 + $0xc] sm:$0xf]
        %v2242 = vld [vmem:[%s663 + $0x10] sm:$0xf]
        %v2243 = vld [vmem:[%s663 + $0x18] sm:$0xf]
        %v2244 = vld [vmem:[%s663 + $0x1c] sm:$0xf]
        %v2245 = vld [vmem:[%s663 + $0x24] sm:$0xf]
        %v2246 = vld [vmem:[%s663 + $0x28] sm:$0xf]
        %v2247 = vld [vmem:[%s663 + $0x30] sm:$0xf]
        %v2248 = vld [vmem:[%s663 + $0x34] sm:$0xf]
        %v2249 = vld [vmem:[%s663 + $0x3c] sm:$0xf]
        %v2250 = vld [vmem:[%s663 + $0x40] sm:$0xf]
        %v2251 = vld [vmem:[%s663 + $0x48] sm:$0xf]
        %v2252 = vld [vmem:[%s663 + $0x4c] sm:$0xf]
        %v2253 = vld [vmem:[%s663 + $0x54] sm:$0xf]
        %v2254 = vld [vmem:[%s663 + $0x58] sm:$0xf]
        %v2255 = vld [vmem:[%s663 + $0x60] sm:$0xf]
        %v2256 = vld [vmem:[%s663 + $0x64] sm:$0xf]
        %v2257 = vld [vmem:[%s663 + $0x6c] sm:$0xf]
        %v2258 = vld [vmem:[%s663 + $0x70] sm:$0xf]
        %v2259 = vld [vmem:[%s663 + $0x78] sm:$0xf]
        %v2260 = vld [vmem:[%s663 + $0x7c] sm:$0xf]
        %v2261 = vld [vmem:[%s663 + $0x84] sm:$0xf]
        %v2262 = vld [vmem:[%s663 + $0x88] sm:$0xf]
        %v2263 = vld [vmem:[%s663 + $0x90] sm:$0xf]
        %v2264 = vld [vmem:[%s663 + $0x94] sm:$0xf]
        %v2265 = vld [vmem:[%s663 + $0x9c] sm:$0xf]
        %v2266 = vld [vmem:[%s663 + $0xa0] sm:$0xf]
        %v2267 = vld [vmem:[%s663 + $0xa8] sm:$0xf]
        %v2268 = vld [vmem:[%s663 + $0xac] sm:$0xf]
        %v2269 = vld [vmem:[%s663 + $0xb4] sm:$0xf]
        %v2270 = vld [vmem:[%s663 + $0xb8] sm:$0xf]
        %s2271 = scalar_lea.vmem [#allocation6], 24
        %v2272 = vld [vmem:[%s2271] sm:$0xf]
        %v2273 = vld [vmem:[%s2271 + $0x4] sm:$0xf]
        %v2306 = vunpack.c.l.b16 %v2239
        %v2307 = vunpack.c.l.b16 %v2240
        %v2308 = vunpack.c.l.b16 %v2241
        %v2309 = vunpack.c.l.b16 %v2242
        %v2310 = vunpack.c.l.b16 %v2243
        %v2311 = vunpack.c.l.b16 %v2244
        %v2312 = vunpack.c.l.b16 %v2245
        %v2313 = vunpack.c.l.b16 %v2246
        %v2314 = vunpack.c.l.b16 %v2247
        %v2315 = vunpack.c.l.b16 %v2248
        %v2316 = vunpack.c.l.b16 %v2249
        %v2317 = vunpack.c.l.b16 %v2250
        %v2318 = vunpack.c.l.b16 %v2251
        %v2319 = vunpack.c.l.b16 %v2252
        %v2320 = vunpack.c.l.b16 %v2253
        %v2321 = vunpack.c.l.b16 %v2254
        %v2322 = vunpack.c.l.b16 %v2255
        %v2323 = vunpack.c.l.b16 %v2256
        %v2324 = vunpack.c.l.b16 %v2257
        %v2325 = vunpack.c.l.b16 %v2258
        %v2326 = vunpack.c.l.b16 %v2259
        %v2327 = vunpack.c.l.b16 %v2260
        %v2328 = vunpack.c.l.b16 %v2261
        %v2329 = vunpack.c.l.b16 %v2262
        %v2330 = vunpack.c.l.b16 %v2263
        %v2331 = vunpack.c.l.b16 %v2264
        %v2332 = vunpack.c.l.b16 %v2265
        %v2333 = vunpack.c.l.b16 %v2266
        %v2334 = vunpack.c.l.b16 %v2267
        %v2335 = vunpack.c.l.b16 %v2268
        %v2336 = vunpack.c.l.b16 %v2269
        %v2337 = vunpack.c.l.b16 %v2270
        %v2338 = vpack.c.b16 %v2307, %v2306
        %v2339 = vpack.c.b16 %v2309, %v2308
        %v2340 = vpack.c.b16 %v2311, %v2310
        %v2341 = vpack.c.b16 %v2313, %v2312
        %v2342 = vpack.c.b16 %v2315, %v2314
        %v2343 = vpack.c.b16 %v2317, %v2316
        %v2344 = vpack.c.b16 %v2319, %v2318
        %v2345 = vpack.c.b16 %v2321, %v2320
        %v2346 = vpack.c.b16 %v2323, %v2322
        %v2347 = vpack.c.b16 %v2325, %v2324
        %v2348 = vpack.c.b16 %v2327, %v2326
        %v2349 = vpack.c.b16 %v2329, %v2328
        %v2350 = vpack.c.b16 %v2331, %v2330
        %v2351 = vpack.c.b16 %v2333, %v2332
        %v2352 = vpack.c.b16 %v2335, %v2334
        %v2353 = vpack.c.b16 %v2337, %v2336
        %v2356 = vunpack.c.l.b16 %v2272
        %v2357 = vunpack.c.l.b16 %v2273
        %v2358 = vpack.c.b16 %v2357, %v2356
        %v2361 = vsel %vm813, %v2338, 0
        %v2364 = vsel %vm813, %v2339, 0
        %v2367 = vsel %vm813, %v2340, 0
        %v2370 = vsel %vm813, %v2341, 0
        %v2373 = vsel %vm813, %v2342, 0
        %v2376 = vsel %vm813, %v2343, 0
        %v2379 = vsel %vm813, %v2344, 0
        %v2382 = vsel %vm813, %v2345, 0
        %v2385 = vsel %vm813, %v2346, 0
        %v2388 = vsel %vm813, %v2347, 0
        %v2391 = vsel %vm813, %v2348, 0
        %v2394 = vsel %vm813, %v2349, 0
        %v2397 = vsel %vm813, %v2350, 0
        %v2400 = vsel %vm813, %v2351, 0
        %v2403 = vsel %vm813, %v2352, 0
        %v2406 = vsel %vm813, %v2353, 0
        %2408 = vmatpush.bf16.msra.mxu0 0
        %2409 = vmatpush.bf16.msra.mxu0 0
        %2410 = vmatpush.bf16.msra.mxu0 0
        %2411 = vmatpush.bf16.msra.mxu0 0
        %2412 = vmatpush.bf16.msra.mxu0 0
        %2413 = vmatpush.bf16.msra.mxu0 0
        %2414 = vmatpush.bf16.msra.mxu0 0
        %2415 = vmatpush.bf16.msra.mxu0 %v2358
        %2416 = vmatmul.bf16.gmra.mxu0 %v2361
        %v2417 = vpop.f32.mrf.mxu0
        %v2418 = vadd.f32 0.0, %v2417
        %v2419 = vpop.f32.mrf.mxu0
        %v2420 = vadd.f32 0.0, %v2419
        %2421 = vmatmul.bf16.gmra.mxu0 %v2364
        %v2422 = vpop.f32.mrf.mxu0
        %v2423 = vadd.f32 0.0, %v2422
        %v2424 = vpop.f32.mrf.mxu0
        %v2425 = vadd.f32 0.0, %v2424
        %2426 = vmatmul.bf16.gmra.mxu0 %v2367
        %v2427 = vpop.f32.mrf.mxu0
        %v2428 = vadd.f32 0.0, %v2427
        %v2429 = vpop.f32.mrf.mxu0
        %v2430 = vadd.f32 0.0, %v2429
        %2431 = vmatmul.bf16.gmra.mxu0 %v2370
        %v2432 = vpop.f32.mrf.mxu0
        %v2433 = vadd.f32 0.0, %v2432
        %v2434 = vpop.f32.mrf.mxu0
        %v2435 = vadd.f32 0.0, %v2434
        %2436 = vmatmul.bf16.gmra.mxu0 %v2373
        %v2437 = vpop.f32.mrf.mxu0
        %v2438 = vadd.f32 0.0, %v2437
        %v2439 = vpop.f32.mrf.mxu0
        %v2440 = vadd.f32 0.0, %v2439
        %2441 = vmatmul.bf16.gmra.mxu0 %v2376
        %v2442 = vpop.f32.mrf.mxu0
        %v2443 = vadd.f32 0.0, %v2442
        %v2444 = vpop.f32.mrf.mxu0
        %v2445 = vadd.f32 0.0, %v2444
        %2446 = vmatmul.bf16.gmra.mxu0 %v2379
        %v2447 = vpop.f32.mrf.mxu0
        %v2448 = vadd.f32 0.0, %v2447
        %v2449 = vpop.f32.mrf.mxu0
        %v2450 = vadd.f32 0.0, %v2449
        %2451 = vmatmul.bf16.gmra.mxu0 %v2382
        %v2452 = vpop.f32.mrf.mxu0
        %v2453 = vadd.f32 0.0, %v2452
        %v2454 = vpop.f32.mrf.mxu0
        %v2455 = vadd.f32 0.0, %v2454
        %2456 = vmatmul.bf16.gmra.mxu0 %v2385
        %v2457 = vpop.f32.mrf.mxu0
        %v2458 = vadd.f32 0.0, %v2457
        %v2459 = vpop.f32.mrf.mxu0
        %v2460 = vadd.f32 0.0, %v2459
        %2461 = vmatmul.bf16.gmra.mxu0 %v2388
        %v2462 = vpop.f32.mrf.mxu0
        %v2463 = vadd.f32 0.0, %v2462
        %v2464 = vpop.f32.mrf.mxu0
        %v2465 = vadd.f32 0.0, %v2464
        %2466 = vmatmul.bf16.gmra.mxu0 %v2391
        %v2467 = vpop.f32.mrf.mxu0
        %v2468 = vadd.f32 0.0, %v2467
        %v2469 = vpop.f32.mrf.mxu0
        %v2470 = vadd.f32 0.0, %v2469
        %2471 = vmatmul.bf16.gmra.mxu0 %v2394
        %v2472 = vpop.f32.mrf.mxu0
        %v2473 = vadd.f32 0.0, %v2472
        %v2474 = vpop.f32.mrf.mxu0
        %v2475 = vadd.f32 0.0, %v2474
        %2476 = vmatmul.bf16.gmra.mxu0 %v2397
        %v2477 = vpop.f32.mrf.mxu0
        %v2478 = vadd.f32 0.0, %v2477
        %v2479 = vpop.f32.mrf.mxu0
        %v2480 = vadd.f32 0.0, %v2479
        %2481 = vmatmul.bf16.gmra.mxu0 %v2400
        %v2482 = vpop.f32.mrf.mxu0
        %v2483 = vadd.f32 0.0, %v2482
        %v2484 = vpop.f32.mrf.mxu0
        %v2485 = vadd.f32 0.0, %v2484
        %2486 = vmatmul.bf16.gmra.mxu0 %v2403
        %v2487 = vpop.f32.mrf.mxu0
        %v2488 = vadd.f32 0.0, %v2487
        %v2489 = vpop.f32.mrf.mxu0
        %v2490 = vadd.f32 0.0, %v2489
        %2491 = vmatmul.bf16.gmra.mxu0 %v2406
        %v2492 = vpop.f32.mrf.mxu0
        %v2493 = vadd.f32 0.0, %v2492
        %v2494 = vpop.f32.mrf.mxu0
        %v2495 = vadd.f32 0.0, %v2494
        %2496 = vdwg.mxu0
        %v2497 = vadd.f32 %v2207, %v2418
        %v2498 = vadd.f32 %v2208, %v2420
        %v2499 = vadd.f32 %v2209, %v2423
        %v2500 = vadd.f32 %v2210, %v2425
        %v2501 = vadd.f32 %v2211, %v2428
        %v2502 = vadd.f32 %v2212, %v2430
        %v2503 = vadd.f32 %v2213, %v2433
        %v2504 = vadd.f32 %v2214, %v2435
        %v2505 = vadd.f32 %v2215, %v2438
        %v2506 = vadd.f32 %v2216, %v2440
        %v2507 = vadd.f32 %v2217, %v2443
        %v2508 = vadd.f32 %v2218, %v2445
        %v2509 = vadd.f32 %v2219, %v2448
        %v2510 = vadd.f32 %v2220, %v2450
        %v2511 = vadd.f32 %v2221, %v2453
        %v2512 = vadd.f32 %v2222, %v2455
        %v2513 = vadd.f32 %v2223, %v2458
        %v2514 = vadd.f32 %v2224, %v2460
        %v2515 = vadd.f32 %v2225, %v2463
        %v2516 = vadd.f32 %v2226, %v2465
        %v2517 = vadd.f32 %v2227, %v2468
        %v2518 = vadd.f32 %v2228, %v2470
        %v2519 = vadd.f32 %v2229, %v2473
        %v2520 = vadd.f32 %v2230, %v2475
        %v2521 = vadd.f32 %v2231, %v2478
        %v2522 = vadd.f32 %v2232, %v2480
        %v2523 = vadd.f32 %v2233, %v2483
        %v2524 = vadd.f32 %v2234, %v2485
        %v2525 = vadd.f32 %v2235, %v2488
        %v2526 = vadd.f32 %v2236, %v2490
        %v2527 = vadd.f32 %v2237, %v2493
        %v2528 = vadd.f32 %v2238, %v2495
        %v2529 = vld [vmem:[%s663] sm:$0xf]
        %v2530 = vld [vmem:[%s663 + $0x4] sm:$0xf]
        %v2531 = vld [vmem:[%s663 + $0x8] sm:$0x1]
        %v2532 = vld [vmem:[%s663 + $0xc] sm:$0xf]
        %v2533 = vld [vmem:[%s663 + $0x10] sm:$0xf]
        %v2534 = vld [vmem:[%s663 + $0x14] sm:$0x1]
        %v2535 = vld [vmem:[%s663 + $0x18] sm:$0xf]
        %v2536 = vld [vmem:[%s663 + $0x1c] sm:$0xf]
        %v2537 = vld [vmem:[%s663 + $0x20] sm:$0x1]
        %v2538 = vld [vmem:[%s663 + $0x24] sm:$0xf]
        %v2539 = vld [vmem:[%s663 + $0x28] sm:$0xf]
        %v2540 = vld [vmem:[%s663 + $0x2c] sm:$0x1]
        %v2541 = vld [vmem:[%s663 + $0x30] sm:$0xf]
        %v2542 = vld [vmem:[%s663 + $0x34] sm:$0xf]
        %v2543 = vld [vmem:[%s663 + $0x38] sm:$0x1]
        %v2544 = vld [vmem:[%s663 + $0x3c] sm:$0xf]
        %v2545 = vld [vmem:[%s663 + $0x40] sm:$0xf]
        %v2546 = vld [vmem:[%s663 + $0x44] sm:$0x1]
        %v2547 = vld [vmem:[%s663 + $0x48] sm:$0xf]
        %v2548 = vld [vmem:[%s663 + $0x4c] sm:$0xf]
        %v2549 = vld [vmem:[%s663 + $0x50] sm:$0x1]
        %v2550 = vld [vmem:[%s663 + $0x54] sm:$0xf]
        %v2551 = vld [vmem:[%s663 + $0x58] sm:$0xf]
        %v2552 = vld [vmem:[%s663 + $0x5c] sm:$0x1]
        %v2553 = vld [vmem:[%s663 + $0x60] sm:$0xf]
        %v2554 = vld [vmem:[%s663 + $0x64] sm:$0xf]
        %v2555 = vld [vmem:[%s663 + $0x68] sm:$0x1]
        %v2556 = vld [vmem:[%s663 + $0x6c] sm:$0xf]
        %v2557 = vld [vmem:[%s663 + $0x70] sm:$0xf]
        %v2558 = vld [vmem:[%s663 + $0x74] sm:$0x1]
        %v2559 = vld [vmem:[%s663 + $0x78] sm:$0xf]
        %v2560 = vld [vmem:[%s663 + $0x7c] sm:$0xf]
        %v2561 = vld [vmem:[%s663 + $0x80] sm:$0x1]
        %v2562 = vld [vmem:[%s663 + $0x84] sm:$0xf]
        %v2563 = vld [vmem:[%s663 + $0x88] sm:$0xf]
        %v2564 = vld [vmem:[%s663 + $0x8c] sm:$0x1]
        %v2565 = vld [vmem:[%s663 + $0x90] sm:$0xf]
        %v2566 = vld [vmem:[%s663 + $0x94] sm:$0xf]
        %v2567 = vld [vmem:[%s663 + $0x98] sm:$0x1]
        %v2568 = vld [vmem:[%s663 + $0x9c] sm:$0xf]
        %v2569 = vld [vmem:[%s663 + $0xa0] sm:$0xf]
        %v2570 = vld [vmem:[%s663 + $0xa4] sm:$0x1]
        %v2571 = vld [vmem:[%s663 + $0xa8] sm:$0xf]
        %v2572 = vld [vmem:[%s663 + $0xac] sm:$0xf]
        %v2573 = vld [vmem:[%s663 + $0xb0] sm:$0x1]
        %v2574 = vld [vmem:[%s663 + $0xb4] sm:$0xf]
        %v2575 = vld [vmem:[%s663 + $0xb8] sm:$0xf]
        %v2576 = vld [vmem:[%s663 + $0xbc] sm:$0x1]
        %v2578 = vshrl.u32 %v2529, 16
        %v2580 = vrot.slane %v2578, 4
        %v2581 = vshll.u32 %v2529, 16
        %v2583 = vrot.slane %v2581, 5
        %v2584 = vor.u32 %v2580, %v2583
        %v2585 = vrot.slane %v2584, 4
        %v2587 = vshll.u32 %v2530, 16
        %v2589 = vrot.slane %v2587, 5
        %v2590 = vsel %vm1223, %v2585, %v2589
        %v2591 = vshrl.u32 %v2530, 16
        %v2593 = vrot.slane %v2591, 4
        %v2594 = vor.u32 %v2593, %v2589
        %v2595 = vrot.slane %v2594, 4
        %v2597 = vshll.u32 %v2531, 16
        %v2599 = vrot.slane %v2597, 5
        %v2600 = vsel %vm1223, %v2595, %v2599
        %v2602 = vshrl.u32 %v2532, 16
        %v2604 = vrot.slane %v2602, 4
        %v2605 = vshll.u32 %v2532, 16
        %v2607 = vrot.slane %v2605, 5
        %v2608 = vor.u32 %v2604, %v2607
        %v2609 = vrot.slane %v2608, 4
        %v2611 = vshll.u32 %v2533, 16
        %v2613 = vrot.slane %v2611, 5
        %v2614 = vsel %vm1223, %v2609, %v2613
        %v2615 = vshrl.u32 %v2533, 16
        %v2617 = vrot.slane %v2615, 4
        %v2618 = vor.u32 %v2617, %v2613
        %v2619 = vrot.slane %v2618, 4
        %v2621 = vshll.u32 %v2534, 16
        %v2623 = vrot.slane %v2621, 5
        %v2624 = vsel %vm1223, %v2619, %v2623
        %v2626 = vshrl.u32 %v2535, 16
        %v2628 = vrot.slane %v2626, 4
        %v2629 = vshll.u32 %v2535, 16
        %v2631 = vrot.slane %v2629, 5
        %v2632 = vor.u32 %v2628, %v2631
        %v2633 = vrot.slane %v2632, 4
        %v2635 = vshll.u32 %v2536, 16
        %v2637 = vrot.slane %v2635, 5
        %v2638 = vsel %vm1223, %v2633, %v2637
        %v2639 = vshrl.u32 %v2536, 16
        %v2641 = vrot.slane %v2639, 4
        %v2642 = vor.u32 %v2641, %v2637
        %v2643 = vrot.slane %v2642, 4
        %v2645 = vshll.u32 %v2537, 16
        %v2647 = vrot.slane %v2645, 5
        %v2648 = vsel %vm1223, %v2643, %v2647
        %v2650 = vshrl.u32 %v2538, 16
        %v2652 = vrot.slane %v2650, 4
        %v2653 = vshll.u32 %v2538, 16
        %v2655 = vrot.slane %v2653, 5
        %v2656 = vor.u32 %v2652, %v2655
        %v2657 = vrot.slane %v2656, 4
        %v2659 = vshll.u32 %v2539, 16
        %v2661 = vrot.slane %v2659, 5
        %v2662 = vsel %vm1223, %v2657, %v2661
        %v2663 = vshrl.u32 %v2539, 16
        %v2665 = vrot.slane %v2663, 4
        %v2666 = vor.u32 %v2665, %v2661
        %v2667 = vrot.slane %v2666, 4
        %v2669 = vshll.u32 %v2540, 16
        %v2671 = vrot.slane %v2669, 5
        %v2672 = vsel %vm1223, %v2667, %v2671
        %v2674 = vshrl.u32 %v2541, 16
        %v2676 = vrot.slane %v2674, 4
        %v2677 = vshll.u32 %v2541, 16
        %v2679 = vrot.slane %v2677, 5
        %v2680 = vor.u32 %v2676, %v2679
        %v2681 = vrot.slane %v2680, 4
        %v2683 = vshll.u32 %v2542, 16
        %v2685 = vrot.slane %v2683, 5
        %v2686 = vsel %vm1223, %v2681, %v2685
        %v2687 = vshrl.u32 %v2542, 16
        %v2689 = vrot.slane %v2687, 4
        %v2690 = vor.u32 %v2689, %v2685
        %v2691 = vrot.slane %v2690, 4
        %v2693 = vshll.u32 %v2543, 16
        %v2695 = vrot.slane %v2693, 5
        %v2696 = vsel %vm1223, %v2691, %v2695
        %v2698 = vshrl.u32 %v2544, 16
        %v2700 = vrot.slane %v2698, 4
        %v2701 = vshll.u32 %v2544, 16
        %v2703 = vrot.slane %v2701, 5
        %v2704 = vor.u32 %v2700, %v2703
        %v2705 = vrot.slane %v2704, 4
        %v2707 = vshll.u32 %v2545, 16
        %v2709 = vrot.slane %v2707, 5
        %v2710 = vsel %vm1223, %v2705, %v2709
        %v2711 = vshrl.u32 %v2545, 16
        %v2713 = vrot.slane %v2711, 4
        %v2714 = vor.u32 %v2713, %v2709
        %v2715 = vrot.slane %v2714, 4
        %v2717 = vshll.u32 %v2546, 16
        %v2719 = vrot.slane %v2717, 5
        %v2720 = vsel %vm1223, %v2715, %v2719
        %v2722 = vshrl.u32 %v2547, 16
        %v2724 = vrot.slane %v2722, 4
        %v2725 = vshll.u32 %v2547, 16
        %v2727 = vrot.slane %v2725, 5
        %v2728 = vor.u32 %v2724, %v2727
        %v2729 = vrot.slane %v2728, 4
        %v2731 = vshll.u32 %v2548, 16
        %v2733 = vrot.slane %v2731, 5
        %v2734 = vsel %vm1223, %v2729, %v2733
        %v2735 = vshrl.u32 %v2548, 16
        %v2737 = vrot.slane %v2735, 4
        %v2738 = vor.u32 %v2737, %v2733
        %v2739 = vrot.slane %v2738, 4
        %v2741 = vshll.u32 %v2549, 16
        %v2743 = vrot.slane %v2741, 5
        %v2744 = vsel %vm1223, %v2739, %v2743
        %v2746 = vshrl.u32 %v2550, 16
        %v2748 = vrot.slane %v2746, 4
        %v2749 = vshll.u32 %v2550, 16
        %v2751 = vrot.slane %v2749, 5
        %v2752 = vor.u32 %v2748, %v2751
        %v2753 = vrot.slane %v2752, 4
        %v2755 = vshll.u32 %v2551, 16
        %v2757 = vrot.slane %v2755, 5
        %v2758 = vsel %vm1223, %v2753, %v2757
        %v2759 = vshrl.u32 %v2551, 16
        %v2761 = vrot.slane %v2759, 4
        %v2762 = vor.u32 %v2761, %v2757
        %v2763 = vrot.slane %v2762, 4
        %v2765 = vshll.u32 %v2552, 16
        %v2767 = vrot.slane %v2765, 5
        %v2768 = vsel %vm1223, %v2763, %v2767
        %v2770 = vshrl.u32 %v2553, 16
        %v2772 = vrot.slane %v2770, 4
        %v2773 = vshll.u32 %v2553, 16
        %v2775 = vrot.slane %v2773, 5
        %v2776 = vor.u32 %v2772, %v2775
        %v2777 = vrot.slane %v2776, 4
        %v2779 = vshll.u32 %v2554, 16
        %v2781 = vrot.slane %v2779, 5
        %v2782 = vsel %vm1223, %v2777, %v2781
        %v2783 = vshrl.u32 %v2554, 16
        %v2785 = vrot.slane %v2783, 4
        %v2786 = vor.u32 %v2785, %v2781
        %v2787 = vrot.slane %v2786, 4
        %v2789 = vshll.u32 %v2555, 16
        %v2791 = vrot.slane %v2789, 5
        %v2792 = vsel %vm1223, %v2787, %v2791
        %v2794 = vshrl.u32 %v2556, 16
        %v2796 = vrot.slane %v2794, 4
        %v2797 = vshll.u32 %v2556, 16
        %v2799 = vrot.slane %v2797, 5
        %v2800 = vor.u32 %v2796, %v2799
        %v2801 = vrot.slane %v2800, 4
        %v2803 = vshll.u32 %v2557, 16
        %v2805 = vrot.slane %v2803, 5
        %v2806 = vsel %vm1223, %v2801, %v2805
        %v2807 = vshrl.u32 %v2557, 16
        %v2809 = vrot.slane %v2807, 4
        %v2810 = vor.u32 %v2809, %v2805
        %v2811 = vrot.slane %v2810, 4
        %v2813 = vshll.u32 %v2558, 16
        %v2815 = vrot.slane %v2813, 5
        %v2816 = vsel %vm1223, %v2811, %v2815
        %v2818 = vshrl.u32 %v2559, 16
        %v2820 = vrot.slane %v2818, 4
        %v2821 = vshll.u32 %v2559, 16
        %v2823 = vrot.slane %v2821, 5
        %v2824 = vor.u32 %v2820, %v2823
        %v2825 = vrot.slane %v2824, 4
        %v2827 = vshll.u32 %v2560, 16
        %v2829 = vrot.slane %v2827, 5
        %v2830 = vsel %vm1223, %v2825, %v2829
        %v2831 = vshrl.u32 %v2560, 16
        %v2833 = vrot.slane %v2831, 4
        %v2834 = vor.u32 %v2833, %v2829
        %v2835 = vrot.slane %v2834, 4
        %v2837 = vshll.u32 %v2561, 16
        %v2839 = vrot.slane %v2837, 5
        %v2840 = vsel %vm1223, %v2835, %v2839
        %v2842 = vshrl.u32 %v2562, 16
        %v2844 = vrot.slane %v2842, 4
        %v2845 = vshll.u32 %v2562, 16
        %v2847 = vrot.slane %v2845, 5
        %v2848 = vor.u32 %v2844, %v2847
        %v2849 = vrot.slane %v2848, 4
        %v2851 = vshll.u32 %v2563, 16
        %v2853 = vrot.slane %v2851, 5
        %v2854 = vsel %vm1223, %v2849, %v2853
        %v2855 = vshrl.u32 %v2563, 16
        %v2857 = vrot.slane %v2855, 4
        %v2858 = vor.u32 %v2857, %v2853
        %v2859 = vrot.slane %v2858, 4
        %v2861 = vshll.u32 %v2564, 16
        %v2863 = vrot.slane %v2861, 5
        %v2864 = vsel %vm1223, %v2859, %v2863
        %v2866 = vshrl.u32 %v2565, 16
        %v2868 = vrot.slane %v2866, 4
        %v2869 = vshll.u32 %v2565, 16
        %v2871 = vrot.slane %v2869, 5
        %v2872 = vor.u32 %v2868, %v2871
        %v2873 = vrot.slane %v2872, 4
        %v2875 = vshll.u32 %v2566, 16
        %v2877 = vrot.slane %v2875, 5
        %v2878 = vsel %vm1223, %v2873, %v2877
        %v2879 = vshrl.u32 %v2566, 16
        %v2881 = vrot.slane %v2879, 4
        %v2882 = vor.u32 %v2881, %v2877
        %v2883 = vrot.slane %v2882, 4
        %v2885 = vshll.u32 %v2567, 16
        %v2887 = vrot.slane %v2885, 5
        %v2888 = vsel %vm1223, %v2883, %v2887
        %v2890 = vshrl.u32 %v2568, 16
        %v2892 = vrot.slane %v2890, 4
        %v2893 = vshll.u32 %v2568, 16
        %v2895 = vrot.slane %v2893, 5
        %v2896 = vor.u32 %v2892, %v2895
        %v2897 = vrot.slane %v2896, 4
        %v2899 = vshll.u32 %v2569, 16
        %v2901 = vrot.slane %v2899, 5
        %v2902 = vsel %vm1223, %v2897, %v2901
        %v2903 = vshrl.u32 %v2569, 16
        %v2905 = vrot.slane %v2903, 4
        %v2906 = vor.u32 %v2905, %v2901
        %v2907 = vrot.slane %v2906, 4
        %v2909 = vshll.u32 %v2570, 16
        %v2911 = vrot.slane %v2909, 5
        %v2912 = vsel %vm1223, %v2907, %v2911
        %v2914 = vshrl.u32 %v2571, 16
        %v2916 = vrot.slane %v2914, 4
        %v2917 = vshll.u32 %v2571, 16
        %v2919 = vrot.slane %v2917, 5
        %v2920 = vor.u32 %v2916, %v2919
        %v2921 = vrot.slane %v2920, 4
        %v2923 = vshll.u32 %v2572, 16
        %v2925 = vrot.slane %v2923, 5
        %v2926 = vsel %vm1223, %v2921, %v2925
        %v2927 = vshrl.u32 %v2572, 16
        %v2929 = vrot.slane %v2927, 4
        %v2930 = vor.u32 %v2929, %v2925
        %v2931 = vrot.slane %v2930, 4
        %v2933 = vshll.u32 %v2573, 16
        %v2935 = vrot.slane %v2933, 5
        %v2936 = vsel %vm1223, %v2931, %v2935
        %v2938 = vshrl.u32 %v2574, 16
        %v2940 = vrot.slane %v2938, 4
        %v2941 = vshll.u32 %v2574, 16
        %v2943 = vrot.slane %v2941, 5
        %v2944 = vor.u32 %v2940, %v2943
        %v2945 = vrot.slane %v2944, 4
        %v2947 = vshll.u32 %v2575, 16
        %v2949 = vrot.slane %v2947, 5
        %v2950 = vsel %vm1223, %v2945, %v2949
        %v2951 = vshrl.u32 %v2575, 16
        %v2953 = vrot.slane %v2951, 4
        %v2954 = vor.u32 %v2953, %v2949
        %v2955 = vrot.slane %v2954, 4
        %v2957 = vshll.u32 %v2576, 16
        %v2959 = vrot.slane %v2957, 5
        %v2960 = vsel %vm1223, %v2955, %v2959
        %s2961 = scalar_lea.vmem [#allocation6], 32
        %v2962 = vld [vmem:[%s2961] sm:$0xf]
        %v2963 = vld [vmem:[%s2961 + $0x4] sm:$0xf]
        %v2964 = vunpack.c.l.b16 %v2590
        %v2965 = vunpack.c.l.b16 %v2600
        %v2966 = vunpack.c.l.b16 %v2614
        %v2967 = vunpack.c.l.b16 %v2624
        %v2968 = vunpack.c.l.b16 %v2638
        %v2969 = vunpack.c.l.b16 %v2648
        %v2970 = vunpack.c.l.b16 %v2662
        %v2971 = vunpack.c.l.b16 %v2672
        %v2972 = vunpack.c.l.b16 %v2686
        %v2973 = vunpack.c.l.b16 %v2696
        %v2974 = vunpack.c.l.b16 %v2710
        %v2975 = vunpack.c.l.b16 %v2720
        %v2976 = vunpack.c.l.b16 %v2734
        %v2977 = vunpack.c.l.b16 %v2744
        %v2978 = vunpack.c.l.b16 %v2758
        %v2979 = vunpack.c.l.b16 %v2768
        %v2980 = vunpack.c.l.b16 %v2782
        %v2981 = vunpack.c.l.b16 %v2792
        %v2982 = vunpack.c.l.b16 %v2806
        %v2983 = vunpack.c.l.b16 %v2816
        %v2984 = vunpack.c.l.b16 %v2830
        %v2985 = vunpack.c.l.b16 %v2840
        %v2986 = vunpack.c.l.b16 %v2854
        %v2987 = vunpack.c.l.b16 %v2864
        %v2988 = vunpack.c.l.b16 %v2878
        %v2989 = vunpack.c.l.b16 %v2888
        %v2990 = vunpack.c.l.b16 %v2902
        %v2991 = vunpack.c.l.b16 %v2912
        %v2992 = vunpack.c.l.b16 %v2926
        %v2993 = vunpack.c.l.b16 %v2936
        %v2994 = vunpack.c.l.b16 %v2950
        %v2995 = vunpack.c.l.b16 %v2960
        %v2996 = vpack.c.b16 %v2965, %v2964
        %v2997 = vpack.c.b16 %v2967, %v2966
        %v2998 = vpack.c.b16 %v2969, %v2968
        %v2999 = vpack.c.b16 %v2971, %v2970
        %v3000 = vpack.c.b16 %v2973, %v2972
        %v3001 = vpack.c.b16 %v2975, %v2974
        %v3002 = vpack.c.b16 %v2977, %v2976
        %v3003 = vpack.c.b16 %v2979, %v2978
        %v3004 = vpack.c.b16 %v2981, %v2980
        %v3005 = vpack.c.b16 %v2983, %v2982
        %v3006 = vpack.c.b16 %v2985, %v2984
        %v3007 = vpack.c.b16 %v2987, %v2986
        %v3008 = vpack.c.b16 %v2989, %v2988
        %v3009 = vpack.c.b16 %v2991, %v2990
        %v3010 = vpack.c.b16 %v2993, %v2992
        %v3011 = vpack.c.b16 %v2995, %v2994
        %v3014 = vunpack.c.l.b16 %v2962
        %v3015 = vunpack.c.l.b16 %v2963
        %v3016 = vpack.c.b16 %v3015, %v3014
        %v3019 = vsel %vm813, %v2996, 0
        %v3022 = vsel %vm813, %v2997, 0
        %v3025 = vsel %vm813, %v2998, 0
        %v3028 = vsel %vm813, %v2999, 0
        %v3031 = vsel %vm813, %v3000, 0
        %v3034 = vsel %vm813, %v3001, 0
        %v3037 = vsel %vm813, %v3002, 0
        %v3040 = vsel %vm813, %v3003, 0
        %v3043 = vsel %vm813, %v3004, 0
        %v3046 = vsel %vm813, %v3005, 0
        %v3049 = vsel %vm813, %v3006, 0
        %v3052 = vsel %vm813, %v3007, 0
        %v3055 = vsel %vm813, %v3008, 0
        %v3058 = vsel %vm813, %v3009, 0
        %v3061 = vsel %vm813, %v3010, 0
        %v3064 = vsel %vm813, %v3011, 0
        %3066 = vmatpush.bf16.msra.mxu0 0
        %3067 = vmatpush.bf16.msra.mxu0 0
        %3068 = vmatpush.bf16.msra.mxu0 0
        %3069 = vmatpush.bf16.msra.mxu0 0
        %3070 = vmatpush.bf16.msra.mxu0 0
        %3071 = vmatpush.bf16.msra.mxu0 0
        %3072 = vmatpush.bf16.msra.mxu0 0
        %3073 = vmatpush.bf16.msra.mxu0 %v3016
        %3074 = vmatmul.bf16.gmra.mxu0 %v3019
        %v3075 = vpop.f32.mrf.mxu0
        %v3076 = vadd.f32 0.0, %v3075
        %v3077 = vpop.f32.mrf.mxu0
        %v3078 = vadd.f32 0.0, %v3077
        %3079 = vmatmul.bf16.gmra.mxu0 %v3022
        %v3080 = vpop.f32.mrf.mxu0
        %v3081 = vadd.f32 0.0, %v3080
        %v3082 = vpop.f32.mrf.mxu0
        %v3083 = vadd.f32 0.0, %v3082
        %3084 = vmatmul.bf16.gmra.mxu0 %v3025
        %v3085 = vpop.f32.mrf.mxu0
        %v3086 = vadd.f32 0.0, %v3085
        %v3087 = vpop.f32.mrf.mxu0
        %v3088 = vadd.f32 0.0, %v3087
        %3089 = vmatmul.bf16.gmra.mxu0 %v3028
        %v3090 = vpop.f32.mrf.mxu0
        %v3091 = vadd.f32 0.0, %v3090
        %v3092 = vpop.f32.mrf.mxu0
        %v3093 = vadd.f32 0.0, %v3092
        %3094 = vmatmul.bf16.gmra.mxu0 %v3031
        %v3095 = vpop.f32.mrf.mxu0
        %v3096 = vadd.f32 0.0, %v3095
        %v3097 = vpop.f32.mrf.mxu0
        %v3098 = vadd.f32 0.0, %v3097
        %3099 = vmatmul.bf16.gmra.mxu0 %v3034
        %v3100 = vpop.f32.mrf.mxu0
        %v3101 = vadd.f32 0.0, %v3100
        %v3102 = vpop.f32.mrf.mxu0
        %v3103 = vadd.f32 0.0, %v3102
        %3104 = vmatmul.bf16.gmra.mxu0 %v3037
        %v3105 = vpop.f32.mrf.mxu0
        %v3106 = vadd.f32 0.0, %v3105
        %v3107 = vpop.f32.mrf.mxu0
        %v3108 = vadd.f32 0.0, %v3107
        %3109 = vmatmul.bf16.gmra.mxu0 %v3040
        %v3110 = vpop.f32.mrf.mxu0
        %v3111 = vadd.f32 0.0, %v3110
        %v3112 = vpop.f32.mrf.mxu0
        %v3113 = vadd.f32 0.0, %v3112
        %3114 = vmatmul.bf16.gmra.mxu0 %v3043
        %v3115 = vpop.f32.mrf.mxu0
        %v3116 = vadd.f32 0.0, %v3115
        %v3117 = vpop.f32.mrf.mxu0
        %v3118 = vadd.f32 0.0, %v3117
        %3119 = vmatmul.bf16.gmra.mxu0 %v3046
        %v3120 = vpop.f32.mrf.mxu0
        %v3121 = vadd.f32 0.0, %v3120
        %v3122 = vpop.f32.mrf.mxu0
        %v3123 = vadd.f32 0.0, %v3122
        %3124 = vmatmul.bf16.gmra.mxu0 %v3049
        %v3125 = vpop.f32.mrf.mxu0
        %v3126 = vadd.f32 0.0, %v3125
        %v3127 = vpop.f32.mrf.mxu0
        %v3128 = vadd.f32 0.0, %v3127
        %3129 = vmatmul.bf16.gmra.mxu0 %v3052
        %v3130 = vpop.f32.mrf.mxu0
        %v3131 = vadd.f32 0.0, %v3130
        %v3132 = vpop.f32.mrf.mxu0
        %v3133 = vadd.f32 0.0, %v3132
        %3134 = vmatmul.bf16.gmra.mxu0 %v3055
        %v3135 = vpop.f32.mrf.mxu0
        %v3136 = vadd.f32 0.0, %v3135
        %v3137 = vpop.f32.mrf.mxu0
        %v3138 = vadd.f32 0.0, %v3137
        %3139 = vmatmul.bf16.gmra.mxu0 %v3058
        %v3140 = vpop.f32.mrf.mxu0
        %v3141 = vadd.f32 0.0, %v3140
        %v3142 = vpop.f32.mrf.mxu0
        %v3143 = vadd.f32 0.0, %v3142
        %3144 = vmatmul.bf16.gmra.mxu0 %v3061
        %v3145 = vpop.f32.mrf.mxu0
        %v3146 = vadd.f32 0.0, %v3145
        %v3147 = vpop.f32.mrf.mxu0
        %v3148 = vadd.f32 0.0, %v3147
        %3149 = vmatmul.bf16.gmra.mxu0 %v3064
        %v3150 = vpop.f32.mrf.mxu0
        %v3151 = vadd.f32 0.0, %v3150
        %v3152 = vpop.f32.mrf.mxu0
        %v3153 = vadd.f32 0.0, %v3152
        %3154 = vdwg.mxu0
        %v3155 = vadd.f32 %v2497, %v3076
        %v3156 = vadd.f32 %v2498, %v3078
        %v3157 = vadd.f32 %v2499, %v3081
        %v3158 = vadd.f32 %v2500, %v3083
        %v3159 = vadd.f32 %v2501, %v3086
        %v3160 = vadd.f32 %v2502, %v3088
        %v3161 = vadd.f32 %v2503, %v3091
        %v3162 = vadd.f32 %v2504, %v3093
        %v3163 = vadd.f32 %v2505, %v3096
        %v3164 = vadd.f32 %v2506, %v3098
        %v3165 = vadd.f32 %v2507, %v3101
        %v3166 = vadd.f32 %v2508, %v3103
        %v3167 = vadd.f32 %v2509, %v3106
        %v3168 = vadd.f32 %v2510, %v3108
        %v3169 = vadd.f32 %v2511, %v3111
        %v3170 = vadd.f32 %v2512, %v3113
        %v3171 = vadd.f32 %v2513, %v3116
        %v3172 = vadd.f32 %v2514, %v3118
        %v3173 = vadd.f32 %v2515, %v3121
        %v3174 = vadd.f32 %v2516, %v3123
        %v3175 = vadd.f32 %v2517, %v3126
        %v3176 = vadd.f32 %v2518, %v3128
        %v3177 = vadd.f32 %v2519, %v3131
        %v3178 = vadd.f32 %v2520, %v3133
        %v3179 = vadd.f32 %v2521, %v3136
        %v3180 = vadd.f32 %v2522, %v3138
        %v3181 = vadd.f32 %v2523, %v3141
        %v3182 = vadd.f32 %v2524, %v3143
        %v3183 = vadd.f32 %v2525, %v3146
        %v3184 = vadd.f32 %v2526, %v3148
        %v3185 = vadd.f32 %v2527, %v3151
        %v3186 = vadd.f32 %v2528, %v3153
        %v3187 = vld [vmem:[%s663] sm:$0xe]
        %v3188 = vld [vmem:[%s663 + $0xc] sm:$0xe]
        %v3189 = vld [vmem:[%s663 + $0x18] sm:$0xe]
        %v3190 = vld [vmem:[%s663 + $0x24] sm:$0xe]
        %v3191 = vld [vmem:[%s663 + $0x30] sm:$0xe]
        %v3192 = vld [vmem:[%s663 + $0x3c] sm:$0xe]
        %v3193 = vld [vmem:[%s663 + $0x48] sm:$0xe]
        %v3194 = vld [vmem:[%s663 + $0x54] sm:$0xe]
        %v3195 = vld [vmem:[%s663 + $0x60] sm:$0xe]
        %v3196 = vld [vmem:[%s663 + $0x6c] sm:$0xe]
        %v3197 = vld [vmem:[%s663 + $0x78] sm:$0xe]
        %v3198 = vld [vmem:[%s663 + $0x84] sm:$0xe]
        %v3199 = vld [vmem:[%s663 + $0x90] sm:$0xe]
        %v3200 = vld [vmem:[%s663 + $0x9c] sm:$0xe]
        %v3201 = vld [vmem:[%s663 + $0xa8] sm:$0xe]
        %v3202 = vld [vmem:[%s663 + $0xb4] sm:$0xe]
        %v3251 = vrot.slane %v3187, 5
        %v3252 = vrot.slane %v3251, 4
        %v3253 = vrot.slane %v2530, 5
        %v3254 = vsel %vm1900, %v3252, %v3253
        %v3255 = vrot.slane %v3253, 4
        %v3256 = vrot.slane %v2531, 5
        %v3257 = vsel %vm1900, %v3255, %v3256
        %v3258 = vrot.slane %v3188, 5
        %v3259 = vrot.slane %v3258, 4
        %v3260 = vrot.slane %v2533, 5
        %v3261 = vsel %vm1900, %v3259, %v3260
        %v3262 = vrot.slane %v3260, 4
        %v3263 = vrot.slane %v2534, 5
        %v3264 = vsel %vm1900, %v3262, %v3263
        %v3265 = vrot.slane %v3189, 5
        %v3266 = vrot.slane %v3265, 4
        %v3267 = vrot.slane %v2536, 5
        %v3268 = vsel %vm1900, %v3266, %v3267
        %v3269 = vrot.slane %v3267, 4
        %v3270 = vrot.slane %v2537, 5
        %v3271 = vsel %vm1900, %v3269, %v3270
        %v3272 = vrot.slane %v3190, 5
        %v3273 = vrot.slane %v3272, 4
        %v3274 = vrot.slane %v2539, 5
        %v3275 = vsel %vm1900, %v3273, %v3274
        %v3276 = vrot.slane %v3274, 4
        %v3277 = vrot.slane %v2540, 5
        %v3278 = vsel %vm1900, %v3276, %v3277
        %v3279 = vrot.slane %v3191, 5
        %v3280 = vrot.slane %v3279, 4
        %v3281 = vrot.slane %v2542, 5
        %v3282 = vsel %vm1900, %v3280, %v3281
        %v3283 = vrot.slane %v3281, 4
        %v3284 = vrot.slane %v2543, 5
        %v3285 = vsel %vm1900, %v3283, %v3284
        %v3286 = vrot.slane %v3192, 5
        %v3287 = vrot.slane %v3286, 4
        %v3288 = vrot.slane %v2545, 5
        %v3289 = vsel %vm1900, %v3287, %v3288
        %v3290 = vrot.slane %v3288, 4
        %v3291 = vrot.slane %v2546, 5
        %v3292 = vsel %vm1900, %v3290, %v3291
        %v3293 = vrot.slane %v3193, 5
        %v3294 = vrot.slane %v3293, 4
        %v3295 = vrot.slane %v2548, 5
        %v3296 = vsel %vm1900, %v3294, %v3295
        %v3297 = vrot.slane %v3295, 4
        %v3298 = vrot.slane %v2549, 5
        %v3299 = vsel %vm1900, %v3297, %v3298
        %v3300 = vrot.slane %v3194, 5
        %v3301 = vrot.slane %v3300, 4
        %v3302 = vrot.slane %v2551, 5
        %v3303 = vsel %vm1900, %v3301, %v3302
        %v3304 = vrot.slane %v3302, 4
        %v3305 = vrot.slane %v2552, 5
        %v3306 = vsel %vm1900, %v3304, %v3305
        %v3307 = vrot.slane %v3195, 5
        %v3308 = vrot.slane %v3307, 4
        %v3309 = vrot.slane %v2554, 5
        %v3310 = vsel %vm1900, %v3308, %v3309
        %v3311 = vrot.slane %v3309, 4
        %v3312 = vrot.slane %v2555, 5
        %v3313 = vsel %vm1900, %v3311, %v3312
        %v3314 = vrot.slane %v3196, 5
        %v3315 = vrot.slane %v3314, 4
        %v3316 = vrot.slane %v2557, 5
        %v3317 = vsel %vm1900, %v3315, %v3316
        %v3318 = vrot.slane %v3316, 4
        %v3319 = vrot.slane %v2558, 5
        %v3320 = vsel %vm1900, %v3318, %v3319
        %v3321 = vrot.slane %v3197, 5
        %v3322 = vrot.slane %v3321, 4
        %v3323 = vrot.slane %v2560, 5
        %v3324 = vsel %vm1900, %v3322, %v3323
        %v3325 = vrot.slane %v3323, 4
        %v3326 = vrot.slane %v2561, 5
        %v3327 = vsel %vm1900, %v3325, %v3326
        %v3328 = vrot.slane %v3198, 5
        %v3329 = vrot.slane %v3328, 4
        %v3330 = vrot.slane %v2563, 5
        %v3331 = vsel %vm1900, %v3329, %v3330
        %v3332 = vrot.slane %v3330, 4
        %v3333 = vrot.slane %v2564, 5
        %v3334 = vsel %vm1900, %v3332, %v3333
        %v3335 = vrot.slane %v3199, 5
        %v3336 = vrot.slane %v3335, 4
        %v3337 = vrot.slane %v2566, 5
        %v3338 = vsel %vm1900, %v3336, %v3337
        %v3339 = vrot.slane %v3337, 4
        %v3340 = vrot.slane %v2567, 5
        %v3341 = vsel %vm1900, %v3339, %v3340
        %v3342 = vrot.slane %v3200, 5
        %v3343 = vrot.slane %v3342, 4
        %v3344 = vrot.slane %v2569, 5
        %v3345 = vsel %vm1900, %v3343, %v3344
        %v3346 = vrot.slane %v3344, 4
        %v3347 = vrot.slane %v2570, 5
        %v3348 = vsel %vm1900, %v3346, %v3347
        %v3349 = vrot.slane %v3201, 5
        %v3350 = vrot.slane %v3349, 4
        %v3351 = vrot.slane %v2572, 5
        %v3352 = vsel %vm1900, %v3350, %v3351
        %v3353 = vrot.slane %v3351, 4
        %v3354 = vrot.slane %v2573, 5
        %v3355 = vsel %vm1900, %v3353, %v3354
        %v3356 = vrot.slane %v3202, 5
        %v3357 = vrot.slane %v3356, 4
        %v3358 = vrot.slane %v2575, 5
        %v3359 = vsel %vm1900, %v3357, %v3358
        %v3360 = vrot.slane %v3358, 4
        %v3361 = vrot.slane %v2576, 5
        %v3362 = vsel %vm1900, %v3360, %v3361
        %s3363 = scalar_lea.vmem [#allocation6], 40
        %v3364 = vld [vmem:[%s3363] sm:$0xf]
        %v3365 = vld [vmem:[%s3363 + $0x4] sm:$0xf]
        %v3366 = vunpack.c.l.b16 %v3254
        %v3367 = vunpack.c.l.b16 %v3257
        %v3368 = vunpack.c.l.b16 %v3261
        %v3369 = vunpack.c.l.b16 %v3264
        %v3370 = vunpack.c.l.b16 %v3268
        %v3371 = vunpack.c.l.b16 %v3271
        %v3372 = vunpack.c.l.b16 %v3275
        %v3373 = vunpack.c.l.b16 %v3278
        %v3374 = vunpack.c.l.b16 %v3282
        %v3375 = vunpack.c.l.b16 %v3285
        %v3376 = vunpack.c.l.b16 %v3289
        %v3377 = vunpack.c.l.b16 %v3292
        %v3378 = vunpack.c.l.b16 %v3296
        %v3379 = vunpack.c.l.b16 %v3299
        %v3380 = vunpack.c.l.b16 %v3303
        %v3381 = vunpack.c.l.b16 %v3306
        %v3382 = vunpack.c.l.b16 %v3310
        %v3383 = vunpack.c.l.b16 %v3313
        %v3384 = vunpack.c.l.b16 %v3317
        %v3385 = vunpack.c.l.b16 %v3320
        %v3386 = vunpack.c.l.b16 %v3324
        %v3387 = vunpack.c.l.b16 %v3327
        %v3388 = vunpack.c.l.b16 %v3331
        %v3389 = vunpack.c.l.b16 %v3334
        %v3390 = vunpack.c.l.b16 %v3338
        %v3391 = vunpack.c.l.b16 %v3341
        %v3392 = vunpack.c.l.b16 %v3345
        %v3393 = vunpack.c.l.b16 %v3348
        %v3394 = vunpack.c.l.b16 %v3352
        %v3395 = vunpack.c.l.b16 %v3355
        %v3396 = vunpack.c.l.b16 %v3359
        %v3397 = vunpack.c.l.b16 %v3362
        %v3398 = vpack.c.b16 %v3367, %v3366
        %v3399 = vpack.c.b16 %v3369, %v3368
        %v3400 = vpack.c.b16 %v3371, %v3370
        %v3401 = vpack.c.b16 %v3373, %v3372
        %v3402 = vpack.c.b16 %v3375, %v3374
        %v3403 = vpack.c.b16 %v3377, %v3376
        %v3404 = vpack.c.b16 %v3379, %v3378
        %v3405 = vpack.c.b16 %v3381, %v3380
        %v3406 = vpack.c.b16 %v3383, %v3382
        %v3407 = vpack.c.b16 %v3385, %v3384
        %v3408 = vpack.c.b16 %v3387, %v3386
        %v3409 = vpack.c.b16 %v3389, %v3388
        %v3410 = vpack.c.b16 %v3391, %v3390
        %v3411 = vpack.c.b16 %v3393, %v3392
        %v3412 = vpack.c.b16 %v3395, %v3394
        %v3413 = vpack.c.b16 %v3397, %v3396
        %v3416 = vunpack.c.l.b16 %v3364
        %v3417 = vunpack.c.l.b16 %v3365
        %v3418 = vpack.c.b16 %v3417, %v3416
        %v3421 = vsel %vm813, %v3398, 0
        %v3424 = vsel %vm813, %v3399, 0
        %v3427 = vsel %vm813, %v3400, 0
        %v3430 = vsel %vm813, %v3401, 0
        %v3433 = vsel %vm813, %v3402, 0
        %v3436 = vsel %vm813, %v3403, 0
        %v3439 = vsel %vm813, %v3404, 0
        %v3442 = vsel %vm813, %v3405, 0
        %v3445 = vsel %vm813, %v3406, 0
        %v3448 = vsel %vm813, %v3407, 0
        %v3451 = vsel %vm813, %v3408, 0
        %v3454 = vsel %vm813, %v3409, 0
        %v3457 = vsel %vm813, %v3410, 0
        %v3460 = vsel %vm813, %v3411, 0
        %v3463 = vsel %vm813, %v3412, 0
        %v3466 = vsel %vm813, %v3413, 0
        %3468 = vmatpush.bf16.msra.mxu0 0
        %3469 = vmatpush.bf16.msra.mxu0 0
        %3470 = vmatpush.bf16.msra.mxu0 0
        %3471 = vmatpush.bf16.msra.mxu0 0
        %3472 = vmatpush.bf16.msra.mxu0 0
        %3473 = vmatpush.bf16.msra.mxu0 0
        %3474 = vmatpush.bf16.msra.mxu0 0
        %3475 = vmatpush.bf16.msra.mxu0 %v3418
        %3476 = vmatmul.bf16.gmra.mxu0 %v3421
        %v3477 = vpop.f32.mrf.mxu0
        %v3478 = vadd.f32 0.0, %v3477
        %v3479 = vpop.f32.mrf.mxu0
        %v3480 = vadd.f32 0.0, %v3479
        %3481 = vmatmul.bf16.gmra.mxu0 %v3424
        %v3482 = vpop.f32.mrf.mxu0
        %v3483 = vadd.f32 0.0, %v3482
        %v3484 = vpop.f32.mrf.mxu0
        %v3485 = vadd.f32 0.0, %v3484
        %3486 = vmatmul.bf16.gmra.mxu0 %v3427
        %v3487 = vpop.f32.mrf.mxu0
        %v3488 = vadd.f32 0.0, %v3487
        %v3489 = vpop.f32.mrf.mxu0
        %v3490 = vadd.f32 0.0, %v3489
        %3491 = vmatmul.bf16.gmra.mxu0 %v3430
        %v3492 = vpop.f32.mrf.mxu0
        %v3493 = vadd.f32 0.0, %v3492
        %v3494 = vpop.f32.mrf.mxu0
        %v3495 = vadd.f32 0.0, %v3494
        %3496 = vmatmul.bf16.gmra.mxu0 %v3433
        %v3497 = vpop.f32.mrf.mxu0
        %v3498 = vadd.f32 0.0, %v3497
        %v3499 = vpop.f32.mrf.mxu0
        %v3500 = vadd.f32 0.0, %v3499
        %3501 = vmatmul.bf16.gmra.mxu0 %v3436
        %v3502 = vpop.f32.mrf.mxu0
        %v3503 = vadd.f32 0.0, %v3502
        %v3504 = vpop.f32.mrf.mxu0
        %v3505 = vadd.f32 0.0, %v3504
        %3506 = vmatmul.bf16.gmra.mxu0 %v3439
        %v3507 = vpop.f32.mrf.mxu0
        %v3508 = vadd.f32 0.0, %v3507
        %v3509 = vpop.f32.mrf.mxu0
        %v3510 = vadd.f32 0.0, %v3509
        %3511 = vmatmul.bf16.gmra.mxu0 %v3442
        %v3512 = vpop.f32.mrf.mxu0
        %v3513 = vadd.f32 0.0, %v3512
        %v3514 = vpop.f32.mrf.mxu0
        %v3515 = vadd.f32 0.0, %v3514
        %3516 = vmatmul.bf16.gmra.mxu0 %v3445
        %v3517 = vpop.f32.mrf.mxu0
        %v3518 = vadd.f32 0.0, %v3517
        %v3519 = vpop.f32.mrf.mxu0
        %v3520 = vadd.f32 0.0, %v3519
        %3521 = vmatmul.bf16.gmra.mxu0 %v3448
        %v3522 = vpop.f32.mrf.mxu0
        %v3523 = vadd.f32 0.0, %v3522
        %v3524 = vpop.f32.mrf.mxu0
        %v3525 = vadd.f32 0.0, %v3524
        %3526 = vmatmul.bf16.gmra.mxu0 %v3451
        %v3527 = vpop.f32.mrf.mxu0
        %v3528 = vadd.f32 0.0, %v3527
        %v3529 = vpop.f32.mrf.mxu0
        %v3530 = vadd.f32 0.0, %v3529
        %3531 = vmatmul.bf16.gmra.mxu0 %v3454
        %v3532 = vpop.f32.mrf.mxu0
        %v3533 = vadd.f32 0.0, %v3532
        %v3534 = vpop.f32.mrf.mxu0
        %v3535 = vadd.f32 0.0, %v3534
        %3536 = vmatmul.bf16.gmra.mxu0 %v3457
        %v3537 = vpop.f32.mrf.mxu0
        %v3538 = vadd.f32 0.0, %v3537
        %v3539 = vpop.f32.mrf.mxu0
        %v3540 = vadd.f32 0.0, %v3539
        %3541 = vmatmul.bf16.gmra.mxu0 %v3460
        %v3542 = vpop.f32.mrf.mxu0
        %v3543 = vadd.f32 0.0, %v3542
        %v3544 = vpop.f32.mrf.mxu0
        %v3545 = vadd.f32 0.0, %v3544
        %3546 = vmatmul.bf16.gmra.mxu0 %v3463
        %v3547 = vpop.f32.mrf.mxu0
        %v3548 = vadd.f32 0.0, %v3547
        %v3549 = vpop.f32.mrf.mxu0
        %v3550 = vadd.f32 0.0, %v3549
        %3551 = vmatmul.bf16.gmra.mxu0 %v3466
        %v3552 = vpop.f32.mrf.mxu0
        %v3553 = vadd.f32 0.0, %v3552
        %v3554 = vpop.f32.mrf.mxu0
        %v3555 = vadd.f32 0.0, %v3554
        %3556 = vdwg.mxu0
        %v3557 = vadd.f32 %v3155, %v3478
        %v3558 = vadd.f32 %v3156, %v3480
        %v3559 = vadd.f32 %v3157, %v3483
        %v3560 = vadd.f32 %v3158, %v3485
        %v3561 = vadd.f32 %v3159, %v3488
        %v3562 = vadd.f32 %v3160, %v3490
        %v3563 = vadd.f32 %v3161, %v3493
        %v3564 = vadd.f32 %v3162, %v3495
        %v3565 = vadd.f32 %v3163, %v3498
        %v3566 = vadd.f32 %v3164, %v3500
        %v3567 = vadd.f32 %v3165, %v3503
        %v3568 = vadd.f32 %v3166, %v3505
        %v3569 = vadd.f32 %v3167, %v3508
        %v3570 = vadd.f32 %v3168, %v3510
        %v3571 = vadd.f32 %v3169, %v3513
        %v3572 = vadd.f32 %v3170, %v3515
        %v3573 = vadd.f32 %v3171, %v3518
        %v3574 = vadd.f32 %v3172, %v3520
        %v3575 = vadd.f32 %v3173, %v3523
        %v3576 = vadd.f32 %v3174, %v3525
        %v3577 = vadd.f32 %v3175, %v3528
        %v3578 = vadd.f32 %v3176, %v3530
        %v3579 = vadd.f32 %v3177, %v3533
        %v3580 = vadd.f32 %v3178, %v3535
        %v3581 = vadd.f32 %v3179, %v3538
        %v3582 = vadd.f32 %v3180, %v3540
        %v3583 = vadd.f32 %v3181, %v3543
        %v3584 = vadd.f32 %v3182, %v3545
        %v3585 = vadd.f32 %v3183, %v3548
        %v3586 = vadd.f32 %v3184, %v3550
        %v3587 = vadd.f32 %v3185, %v3553
        %v3588 = vadd.f32 %v3186, %v3555
        %s3589 = scalar_lea.vmem [#allocation2], 24
        %v3590 = vld [vmem:[%s3589] sm:$0xf]
        %v3591 = vld [vmem:[%s3589 + $0x4] sm:$0xf]
        %v3592 = vld [vmem:[%s3589 + $0xc] sm:$0xf]
        %v3593 = vld [vmem:[%s3589 + $0x10] sm:$0xf]
        %v3594 = vld [vmem:[%s3589 + $0x18] sm:$0xf]
        %v3595 = vld [vmem:[%s3589 + $0x1c] sm:$0xf]
        %v3596 = vld [vmem:[%s3589 + $0x24] sm:$0xf]
        %v3597 = vld [vmem:[%s3589 + $0x28] sm:$0xf]
        %v3598 = vld [vmem:[%s3589 + $0x30] sm:$0xf]
        %v3599 = vld [vmem:[%s3589 + $0x34] sm:$0xf]
        %v3600 = vld [vmem:[%s3589 + $0x3c] sm:$0xf]
        %v3601 = vld [vmem:[%s3589 + $0x40] sm:$0xf]
        %v3602 = vld [vmem:[%s3589 + $0x48] sm:$0xf]
        %v3603 = vld [vmem:[%s3589 + $0x4c] sm:$0xf]
        %v3604 = vld [vmem:[%s3589 + $0x54] sm:$0xf]
        %v3605 = vld [vmem:[%s3589 + $0x58] sm:$0xf]
        %v3606 = vld [vmem:[%s3589 + $0x60] sm:$0xf]
        %v3607 = vld [vmem:[%s3589 + $0x64] sm:$0xf]
        %v3608 = vld [vmem:[%s3589 + $0x6c] sm:$0xf]
        %v3609 = vld [vmem:[%s3589 + $0x70] sm:$0xf]
        %v3610 = vld [vmem:[%s3589 + $0x78] sm:$0xf]
        %v3611 = vld [vmem:[%s3589 + $0x7c] sm:$0xf]
        %v3612 = vld [vmem:[%s3589 + $0x84] sm:$0xf]
        %v3613 = vld [vmem:[%s3589 + $0x88] sm:$0xf]
        %v3614 = vld [vmem:[%s3589 + $0x90] sm:$0xf]
        %v3615 = vld [vmem:[%s3589 + $0x94] sm:$0xf]
        %v3616 = vld [vmem:[%s3589 + $0x9c] sm:$0xf]
        %v3617 = vld [vmem:[%s3589 + $0xa0] sm:$0xf]
        %v3618 = vld [vmem:[%s3589 + $0xa8] sm:$0xf]
        %v3619 = vld [vmem:[%s3589 + $0xac] sm:$0xf]
        %v3620 = vld [vmem:[%s3589 + $0xb4] sm:$0xf]
        %v3621 = vld [vmem:[%s3589 + $0xb8] sm:$0xf]
        %s3622 = scalar_lea.vmem [#allocation6], 48
        %v3623 = vld [vmem:[%s3622] sm:$0xf]
        %v3624 = vld [vmem:[%s3622 + $0x4] sm:$0xf]
        %v3657 = vunpack.c.l.b16 %v3590
        %v3658 = vunpack.c.l.b16 %v3591
        %v3659 = vunpack.c.l.b16 %v3592
        %v3660 = vunpack.c.l.b16 %v3593
        %v3661 = vunpack.c.l.b16 %v3594
        %v3662 = vunpack.c.l.b16 %v3595
        %v3663 = vunpack.c.l.b16 %v3596
        %v3664 = vunpack.c.l.b16 %v3597
        %v3665 = vunpack.c.l.b16 %v3598
        %v3666 = vunpack.c.l.b16 %v3599
        %v3667 = vunpack.c.l.b16 %v3600
        %v3668 = vunpack.c.l.b16 %v3601
        %v3669 = vunpack.c.l.b16 %v3602
        %v3670 = vunpack.c.l.b16 %v3603
        %v3671 = vunpack.c.l.b16 %v3604
        %v3672 = vunpack.c.l.b16 %v3605
        %v3673 = vunpack.c.l.b16 %v3606
        %v3674 = vunpack.c.l.b16 %v3607
        %v3675 = vunpack.c.l.b16 %v3608
        %v3676 = vunpack.c.l.b16 %v3609
        %v3677 = vunpack.c.l.b16 %v3610
        %v3678 = vunpack.c.l.b16 %v3611
        %v3679 = vunpack.c.l.b16 %v3612
        %v3680 = vunpack.c.l.b16 %v3613
        %v3681 = vunpack.c.l.b16 %v3614
        %v3682 = vunpack.c.l.b16 %v3615
        %v3683 = vunpack.c.l.b16 %v3616
        %v3684 = vunpack.c.l.b16 %v3617
        %v3685 = vunpack.c.l.b16 %v3618
        %v3686 = vunpack.c.l.b16 %v3619
        %v3687 = vunpack.c.l.b16 %v3620
        %v3688 = vunpack.c.l.b16 %v3621
        %v3689 = vpack.c.b16 %v3658, %v3657
        %v3690 = vpack.c.b16 %v3660, %v3659
        %v3691 = vpack.c.b16 %v3662, %v3661
        %v3692 = vpack.c.b16 %v3664, %v3663
        %v3693 = vpack.c.b16 %v3666, %v3665
        %v3694 = vpack.c.b16 %v3668, %v3667
        %v3695 = vpack.c.b16 %v3670, %v3669
        %v3696 = vpack.c.b16 %v3672, %v3671
        %v3697 = vpack.c.b16 %v3674, %v3673
        %v3698 = vpack.c.b16 %v3676, %v3675
        %v3699 = vpack.c.b16 %v3678, %v3677
        %v3700 = vpack.c.b16 %v3680, %v3679
        %v3701 = vpack.c.b16 %v3682, %v3681
        %v3702 = vpack.c.b16 %v3684, %v3683
        %v3703 = vpack.c.b16 %v3686, %v3685
        %v3704 = vpack.c.b16 %v3688, %v3687
        %v3707 = vunpack.c.l.b16 %v3623
        %v3708 = vunpack.c.l.b16 %v3624
        %v3709 = vpack.c.b16 %v3708, %v3707
        %v3712 = vsel %vm813, %v3689, 0
        %v3715 = vsel %vm813, %v3690, 0
        %v3718 = vsel %vm813, %v3691, 0
        %v3721 = vsel %vm813, %v3692, 0
        %v3724 = vsel %vm813, %v3693, 0
        %v3727 = vsel %vm813, %v3694, 0
        %v3730 = vsel %vm813, %v3695, 0
        %v3733 = vsel %vm813, %v3696, 0
        %v3736 = vsel %vm813, %v3697, 0
        %v3739 = vsel %vm813, %v3698, 0
        %v3742 = vsel %vm813, %v3699, 0
        %v3745 = vsel %vm813, %v3700, 0
        %v3748 = vsel %vm813, %v3701, 0
        %v3751 = vsel %vm813, %v3702, 0
        %v3754 = vsel %vm813, %v3703, 0
        %v3757 = vsel %vm813, %v3704, 0
        %3759 = vmatpush.bf16.msra.mxu0 0
        %3760 = vmatpush.bf16.msra.mxu0 0
        %3761 = vmatpush.bf16.msra.mxu0 0
        %3762 = vmatpush.bf16.msra.mxu0 0
        %3763 = vmatpush.bf16.msra.mxu0 0
        %3764 = vmatpush.bf16.msra.mxu0 0
        %3765 = vmatpush.bf16.msra.mxu0 0
        %3766 = vmatpush.bf16.msra.mxu0 %v3709
        %3767 = vmatmul.bf16.gmra.mxu0 %v3712
        %v3768 = vpop.f32.mrf.mxu0
        %v3769 = vadd.f32 0.0, %v3768
        %v3770 = vpop.f32.mrf.mxu0
        %v3771 = vadd.f32 0.0, %v3770
        %3772 = vmatmul.bf16.gmra.mxu0 %v3715
        %v3773 = vpop.f32.mrf.mxu0
        %v3774 = vadd.f32 0.0, %v3773
        %v3775 = vpop.f32.mrf.mxu0
        %v3776 = vadd.f32 0.0, %v3775
        %3777 = vmatmul.bf16.gmra.mxu0 %v3718
        %v3778 = vpop.f32.mrf.mxu0
        %v3779 = vadd.f32 0.0, %v3778
        %v3780 = vpop.f32.mrf.mxu0
        %v3781 = vadd.f32 0.0, %v3780
        %3782 = vmatmul.bf16.gmra.mxu0 %v3721
        %v3783 = vpop.f32.mrf.mxu0
        %v3784 = vadd.f32 0.0, %v3783
        %v3785 = vpop.f32.mrf.mxu0
        %v3786 = vadd.f32 0.0, %v3785
        %3787 = vmatmul.bf16.gmra.mxu0 %v3724
        %v3788 = vpop.f32.mrf.mxu0
        %v3789 = vadd.f32 0.0, %v3788
        %v3790 = vpop.f32.mrf.mxu0
        %v3791 = vadd.f32 0.0, %v3790
        %3792 = vmatmul.bf16.gmra.mxu0 %v3727
        %v3793 = vpop.f32.mrf.mxu0
        %v3794 = vadd.f32 0.0, %v3793
        %v3795 = vpop.f32.mrf.mxu0
        %v3796 = vadd.f32 0.0, %v3795
        %3797 = vmatmul.bf16.gmra.mxu0 %v3730
        %v3798 = vpop.f32.mrf.mxu0
        %v3799 = vadd.f32 0.0, %v3798
        %v3800 = vpop.f32.mrf.mxu0
        %v3801 = vadd.f32 0.0, %v3800
        %3802 = vmatmul.bf16.gmra.mxu0 %v3733
        %v3803 = vpop.f32.mrf.mxu0
        %v3804 = vadd.f32 0.0, %v3803
        %v3805 = vpop.f32.mrf.mxu0
        %v3806 = vadd.f32 0.0, %v3805
        %3807 = vmatmul.bf16.gmra.mxu0 %v3736
        %v3808 = vpop.f32.mrf.mxu0
        %v3809 = vadd.f32 0.0, %v3808
        %v3810 = vpop.f32.mrf.mxu0
        %v3811 = vadd.f32 0.0, %v3810
        %3812 = vmatmul.bf16.gmra.mxu0 %v3739
        %v3813 = vpop.f32.mrf.mxu0
        %v3814 = vadd.f32 0.0, %v3813
        %v3815 = vpop.f32.mrf.mxu0
        %v3816 = vadd.f32 0.0, %v3815
        %3817 = vmatmul.bf16.gmra.mxu0 %v3742
        %v3818 = vpop.f32.mrf.mxu0
        %v3819 = vadd.f32 0.0, %v3818
        %v3820 = vpop.f32.mrf.mxu0
        %v3821 = vadd.f32 0.0, %v3820
        %3822 = vmatmul.bf16.gmra.mxu0 %v3745
        %v3823 = vpop.f32.mrf.mxu0
        %v3824 = vadd.f32 0.0, %v3823
        %v3825 = vpop.f32.mrf.mxu0
        %v3826 = vadd.f32 0.0, %v3825
        %3827 = vmatmul.bf16.gmra.mxu0 %v3748
        %v3828 = vpop.f32.mrf.mxu0
        %v3829 = vadd.f32 0.0, %v3828
        %v3830 = vpop.f32.mrf.mxu0
        %v3831 = vadd.f32 0.0, %v3830
        %3832 = vmatmul.bf16.gmra.mxu0 %v3751
        %v3833 = vpop.f32.mrf.mxu0
        %v3834 = vadd.f32 0.0, %v3833
        %v3835 = vpop.f32.mrf.mxu0
        %v3836 = vadd.f32 0.0, %v3835
        %3837 = vmatmul.bf16.gmra.mxu0 %v3754
        %v3838 = vpop.f32.mrf.mxu0
        %v3839 = vadd.f32 0.0, %v3838
        %v3840 = vpop.f32.mrf.mxu0
        %v3841 = vadd.f32 0.0, %v3840
        %3842 = vmatmul.bf16.gmra.mxu0 %v3757
        %v3843 = vpop.f32.mrf.mxu0
        %v3844 = vadd.f32 0.0, %v3843
        %v3845 = vpop.f32.mrf.mxu0
        %v3846 = vadd.f32 0.0, %v3845
        %3847 = vdwg.mxu0
        %v3848 = vadd.f32 %v3557, %v3769
        %v3849 = vadd.f32 %v3558, %v3771
        %v3850 = vadd.f32 %v3559, %v3774
        %v3851 = vadd.f32 %v3560, %v3776
        %v3852 = vadd.f32 %v3561, %v3779
        %v3853 = vadd.f32 %v3562, %v3781
        %v3854 = vadd.f32 %v3563, %v3784
        %v3855 = vadd.f32 %v3564, %v3786
        %v3856 = vadd.f32 %v3565, %v3789
        %v3857 = vadd.f32 %v3566, %v3791
        %v3858 = vadd.f32 %v3567, %v3794
        %v3859 = vadd.f32 %v3568, %v3796
        %v3860 = vadd.f32 %v3569, %v3799
        %v3861 = vadd.f32 %v3570, %v3801
        %v3862 = vadd.f32 %v3571, %v3804
        %v3863 = vadd.f32 %v3572, %v3806
        %v3864 = vadd.f32 %v3573, %v3809
        %v3865 = vadd.f32 %v3574, %v3811
        %v3866 = vadd.f32 %v3575, %v3814
        %v3867 = vadd.f32 %v3576, %v3816
        %v3868 = vadd.f32 %v3577, %v3819
        %v3869 = vadd.f32 %v3578, %v3821
        %v3870 = vadd.f32 %v3579, %v3824
        %v3871 = vadd.f32 %v3580, %v3826
        %v3872 = vadd.f32 %v3581, %v3829
        %v3873 = vadd.f32 %v3582, %v3831
        %v3874 = vadd.f32 %v3583, %v3834
        %v3875 = vadd.f32 %v3584, %v3836
        %v3876 = vadd.f32 %v3585, %v3839
        %v3877 = vadd.f32 %v3586, %v3841
        %v3878 = vadd.f32 %v3587, %v3844
        %v3879 = vadd.f32 %v3588, %v3846
        %v3880 = vld [vmem:[%s3589] sm:$0xf]
        %v3881 = vld [vmem:[%s3589 + $0x4] sm:$0xf]
        %v3882 = vld [vmem:[%s3589 + $0x8] sm:$0x1]
        %v3883 = vld [vmem:[%s3589 + $0xc] sm:$0xf]
        %v3884 = vld [vmem:[%s3589 + $0x10] sm:$0xf]
        %v3885 = vld [vmem:[%s3589 + $0x14] sm:$0x1]
        %v3886 = vld [vmem:[%s3589 + $0x18] sm:$0xf]
        %v3887 = vld [vmem:[%s3589 + $0x1c] sm:$0xf]
        %v3888 = vld [vmem:[%s3589 + $0x20] sm:$0x1]
        %v3889 = vld [vmem:[%s3589 + $0x24] sm:$0xf]
        %v3890 = vld [vmem:[%s3589 + $0x28] sm:$0xf]
        %v3891 = vld [vmem:[%s3589 + $0x2c] sm:$0x1]
        %v3892 = vld [vmem:[%s3589 + $0x30] sm:$0xf]
        %v3893 = vld [vmem:[%s3589 + $0x34] sm:$0xf]
        %v3894 = vld [vmem:[%s3589 + $0x38] sm:$0x1]
        %v3895 = vld [vmem:[%s3589 + $0x3c] sm:$0xf]
        %v3896 = vld [vmem:[%s3589 + $0x40] sm:$0xf]
        %v3897 = vld [vmem:[%s3589 + $0x44] sm:$0x1]
        %v3898 = vld [vmem:[%s3589 + $0x48] sm:$0xf]
        %v3899 = vld [vmem:[%s3589 + $0x4c] sm:$0xf]
        %v3900 = vld [vmem:[%s3589 + $0x50] sm:$0x1]
        %v3901 = vld [vmem:[%s3589 + $0x54] sm:$0xf]
        %v3902 = vld [vmem:[%s3589 + $0x58] sm:$0xf]
        %v3903 = vld [vmem:[%s3589 + $0x5c] sm:$0x1]
        %v3904 = vld [vmem:[%s3589 + $0x60] sm:$0xf]
        %v3905 = vld [vmem:[%s3589 + $0x64] sm:$0xf]
        %v3906 = vld [vmem:[%s3589 + $0x68] sm:$0x1]
        %v3907 = vld [vmem:[%s3589 + $0x6c] sm:$0xf]
        %v3908 = vld [vmem:[%s3589 + $0x70] sm:$0xf]
        %v3909 = vld [vmem:[%s3589 + $0x74] sm:$0x1]
        %v3910 = vld [vmem:[%s3589 + $0x78] sm:$0xf]
        %v3911 = vld [vmem:[%s3589 + $0x7c] sm:$0xf]
        %v3912 = vld [vmem:[%s3589 + $0x80] sm:$0x1]
        %v3913 = vld [vmem:[%s3589 + $0x84] sm:$0xf]
        %v3914 = vld [vmem:[%s3589 + $0x88] sm:$0xf]
        %v3915 = vld [vmem:[%s3589 + $0x8c] sm:$0x1]
        %v3916 = vld [vmem:[%s3589 + $0x90] sm:$0xf]
        %v3917 = vld [vmem:[%s3589 + $0x94] sm:$0xf]
        %v3918 = vld [vmem:[%s3589 + $0x98] sm:$0x1]
        %v3919 = vld [vmem:[%s3589 + $0x9c] sm:$0xf]
        %v3920 = vld [vmem:[%s3589 + $0xa0] sm:$0xf]
        %v3921 = vld [vmem:[%s3589 + $0xa4] sm:$0x1]
        %v3922 = vld [vmem:[%s3589 + $0xa8] sm:$0xf]
        %v3923 = vld [vmem:[%s3589 + $0xac] sm:$0xf]
        %v3924 = vld [vmem:[%s3589 + $0xb0] sm:$0x1]
        %v3925 = vld [vmem:[%s3589 + $0xb4] sm:$0xf]
        %v3926 = vld [vmem:[%s3589 + $0xb8] sm:$0xf]
        %v3927 = vld [vmem:[%s3589 + $0xbc] sm:$0x1]
        %v3929 = vshrl.u32 %v3880, 16
        %v3931 = vrot.slane %v3929, 4
        %v3932 = vshll.u32 %v3880, 16
        %v3934 = vrot.slane %v3932, 5
        %v3935 = vor.u32 %v3931, %v3934
        %v3936 = vrot.slane %v3935, 4
        %v3938 = vshll.u32 %v3881, 16
        %v3940 = vrot.slane %v3938, 5
        %v3941 = vsel %vm1223, %v3936, %v3940
        %v3942 = vshrl.u32 %v3881, 16
        %v3944 = vrot.slane %v3942, 4
        %v3945 = vor.u32 %v3944, %v3940
        %v3946 = vrot.slane %v3945, 4
        %v3948 = vshll.u32 %v3882, 16
        %v3950 = vrot.slane %v3948, 5
        %v3951 = vsel %vm1223, %v3946, %v3950
        %v3953 = vshrl.u32 %v3883, 16
        %v3955 = vrot.slane %v3953, 4
        %v3956 = vshll.u32 %v3883, 16
        %v3958 = vrot.slane %v3956, 5
        %v3959 = vor.u32 %v3955, %v3958
        %v3960 = vrot.slane %v3959, 4
        %v3962 = vshll.u32 %v3884, 16
        %v3964 = vrot.slane %v3962, 5
        %v3965 = vsel %vm1223, %v3960, %v3964
        %v3966 = vshrl.u32 %v3884, 16
        %v3968 = vrot.slane %v3966, 4
        %v3969 = vor.u32 %v3968, %v3964
        %v3970 = vrot.slane %v3969, 4
        %v3972 = vshll.u32 %v3885, 16
        %v3974 = vrot.slane %v3972, 5
        %v3975 = vsel %vm1223, %v3970, %v3974
        %v3977 = vshrl.u32 %v3886, 16
        %v3979 = vrot.slane %v3977, 4
        %v3980 = vshll.u32 %v3886, 16
        %v3982 = vrot.slane %v3980, 5
        %v3983 = vor.u32 %v3979, %v3982
        %v3984 = vrot.slane %v3983, 4
        %v3986 = vshll.u32 %v3887, 16
        %v3988 = vrot.slane %v3986, 5
        %v3989 = vsel %vm1223, %v3984, %v3988
        %v3990 = vshrl.u32 %v3887, 16
        %v3992 = vrot.slane %v3990, 4
        %v3993 = vor.u32 %v3992, %v3988
        %v3994 = vrot.slane %v3993, 4
        %v3996 = vshll.u32 %v3888, 16
        %v3998 = vrot.slane %v3996, 5
        %v3999 = vsel %vm1223, %v3994, %v3998
        %v4001 = vshrl.u32 %v3889, 16
        %v4003 = vrot.slane %v4001, 4
        %v4004 = vshll.u32 %v3889, 16
        %v4006 = vrot.slane %v4004, 5
        %v4007 = vor.u32 %v4003, %v4006
        %v4008 = vrot.slane %v4007, 4
        %v4010 = vshll.u32 %v3890, 16
        %v4012 = vrot.slane %v4010, 5
        %v4013 = vsel %vm1223, %v4008, %v4012
        %v4014 = vshrl.u32 %v3890, 16
        %v4016 = vrot.slane %v4014, 4
        %v4017 = vor.u32 %v4016, %v4012
        %v4018 = vrot.slane %v4017, 4
        %v4020 = vshll.u32 %v3891, 16
        %v4022 = vrot.slane %v4020, 5
        %v4023 = vsel %vm1223, %v4018, %v4022
        %v4025 = vshrl.u32 %v3892, 16
        %v4027 = vrot.slane %v4025, 4
        %v4028 = vshll.u32 %v3892, 16
        %v4030 = vrot.slane %v4028, 5
        %v4031 = vor.u32 %v4027, %v4030
        %v4032 = vrot.slane %v4031, 4
        %v4034 = vshll.u32 %v3893, 16
        %v4036 = vrot.slane %v4034, 5
        %v4037 = vsel %vm1223, %v4032, %v4036
        %v4038 = vshrl.u32 %v3893, 16
        %v4040 = vrot.slane %v4038, 4
        %v4041 = vor.u32 %v4040, %v4036
        %v4042 = vrot.slane %v4041, 4
        %v4044 = vshll.u32 %v3894, 16
        %v4046 = vrot.slane %v4044, 5
        %v4047 = vsel %vm1223, %v4042, %v4046
        %v4049 = vshrl.u32 %v3895, 16
        %v4051 = vrot.slane %v4049, 4
        %v4052 = vshll.u32 %v3895, 16
        %v4054 = vrot.slane %v4052, 5
        %v4055 = vor.u32 %v4051, %v4054
        %v4056 = vrot.slane %v4055, 4
        %v4058 = vshll.u32 %v3896, 16
        %v4060 = vrot.slane %v4058, 5
        %v4061 = vsel %vm1223, %v4056, %v4060
        %v4062 = vshrl.u32 %v3896, 16
        %v4064 = vrot.slane %v4062, 4
        %v4065 = vor.u32 %v4064, %v4060
        %v4066 = vrot.slane %v4065, 4
        %v4068 = vshll.u32 %v3897, 16
        %v4070 = vrot.slane %v4068, 5
        %v4071 = vsel %vm1223, %v4066, %v4070
        %v4073 = vshrl.u32 %v3898, 16
        %v4075 = vrot.slane %v4073, 4
        %v4076 = vshll.u32 %v3898, 16
        %v4078 = vrot.slane %v4076, 5
        %v4079 = vor.u32 %v4075, %v4078
        %v4080 = vrot.slane %v4079, 4
        %v4082 = vshll.u32 %v3899, 16
        %v4084 = vrot.slane %v4082, 5
        %v4085 = vsel %vm1223, %v4080, %v4084
        %v4086 = vshrl.u32 %v3899, 16
        %v4088 = vrot.slane %v4086, 4
        %v4089 = vor.u32 %v4088, %v4084
        %v4090 = vrot.slane %v4089, 4
        %v4092 = vshll.u32 %v3900, 16
        %v4094 = vrot.slane %v4092, 5
        %v4095 = vsel %vm1223, %v4090, %v4094
        %v4097 = vshrl.u32 %v3901, 16
        %v4099 = vrot.slane %v4097, 4
        %v4100 = vshll.u32 %v3901, 16
        %v4102 = vrot.slane %v4100, 5
        %v4103 = vor.u32 %v4099, %v4102
        %v4104 = vrot.slane %v4103, 4
        %v4106 = vshll.u32 %v3902, 16
        %v4108 = vrot.slane %v4106, 5
        %v4109 = vsel %vm1223, %v4104, %v4108
        %v4110 = vshrl.u32 %v3902, 16
        %v4112 = vrot.slane %v4110, 4
        %v4113 = vor.u32 %v4112, %v4108
        %v4114 = vrot.slane %v4113, 4
        %v4116 = vshll.u32 %v3903, 16
        %v4118 = vrot.slane %v4116, 5
        %v4119 = vsel %vm1223, %v4114, %v4118
        %v4121 = vshrl.u32 %v3904, 16
        %v4123 = vrot.slane %v4121, 4
        %v4124 = vshll.u32 %v3904, 16
        %v4126 = vrot.slane %v4124, 5
        %v4127 = vor.u32 %v4123, %v4126
        %v4128 = vrot.slane %v4127, 4
        %v4130 = vshll.u32 %v3905, 16
        %v4132 = vrot.slane %v4130, 5
        %v4133 = vsel %vm1223, %v4128, %v4132
        %v4134 = vshrl.u32 %v3905, 16
        %v4136 = vrot.slane %v4134, 4
        %v4137 = vor.u32 %v4136, %v4132
        %v4138 = vrot.slane %v4137, 4
        %v4140 = vshll.u32 %v3906, 16
        %v4142 = vrot.slane %v4140, 5
        %v4143 = vsel %vm1223, %v4138, %v4142
        %v4145 = vshrl.u32 %v3907, 16
        %v4147 = vrot.slane %v4145, 4
        %v4148 = vshll.u32 %v3907, 16
        %v4150 = vrot.slane %v4148, 5
        %v4151 = vor.u32 %v4147, %v4150
        %v4152 = vrot.slane %v4151, 4
        %v4154 = vshll.u32 %v3908, 16
        %v4156 = vrot.slane %v4154, 5
        %v4157 = vsel %vm1223, %v4152, %v4156
        %v4158 = vshrl.u32 %v3908, 16
        %v4160 = vrot.slane %v4158, 4
        %v4161 = vor.u32 %v4160, %v4156
        %v4162 = vrot.slane %v4161, 4
        %v4164 = vshll.u32 %v3909, 16
        %v4166 = vrot.slane %v4164, 5
        %v4167 = vsel %vm1223, %v4162, %v4166
        %v4169 = vshrl.u32 %v3910, 16
        %v4171 = vrot.slane %v4169, 4
        %v4172 = vshll.u32 %v3910, 16
        %v4174 = vrot.slane %v4172, 5
        %v4175 = vor.u32 %v4171, %v4174
        %v4176 = vrot.slane %v4175, 4
        %v4178 = vshll.u32 %v3911, 16
        %v4180 = vrot.slane %v4178, 5
        %v4181 = vsel %vm1223, %v4176, %v4180
        %v4182 = vshrl.u32 %v3911, 16
        %v4184 = vrot.slane %v4182, 4
        %v4185 = vor.u32 %v4184, %v4180
        %v4186 = vrot.slane %v4185, 4
        %v4188 = vshll.u32 %v3912, 16
        %v4190 = vrot.slane %v4188, 5
        %v4191 = vsel %vm1223, %v4186, %v4190
        %v4193 = vshrl.u32 %v3913, 16
        %v4195 = vrot.slane %v4193, 4
        %v4196 = vshll.u32 %v3913, 16
        %v4198 = vrot.slane %v4196, 5
        %v4199 = vor.u32 %v4195, %v4198
        %v4200 = vrot.slane %v4199, 4
        %v4202 = vshll.u32 %v3914, 16
        %v4204 = vrot.slane %v4202, 5
        %v4205 = vsel %vm1223, %v4200, %v4204
        %v4206 = vshrl.u32 %v3914, 16
        %v4208 = vrot.slane %v4206, 4
        %v4209 = vor.u32 %v4208, %v4204
        %v4210 = vrot.slane %v4209, 4
        %v4212 = vshll.u32 %v3915, 16
        %v4214 = vrot.slane %v4212, 5
        %v4215 = vsel %vm1223, %v4210, %v4214
        %v4217 = vshrl.u32 %v3916, 16
        %v4219 = vrot.slane %v4217, 4
        %v4220 = vshll.u32 %v3916, 16
        %v4222 = vrot.slane %v4220, 5
        %v4223 = vor.u32 %v4219, %v4222
        %v4224 = vrot.slane %v4223, 4
        %v4226 = vshll.u32 %v3917, 16
        %v4228 = vrot.slane %v4226, 5
        %v4229 = vsel %vm1223, %v4224, %v4228
        %v4230 = vshrl.u32 %v3917, 16
        %v4232 = vrot.slane %v4230, 4
        %v4233 = vor.u32 %v4232, %v4228
        %v4234 = vrot.slane %v4233, 4
        %v4236 = vshll.u32 %v3918, 16
        %v4238 = vrot.slane %v4236, 5
        %v4239 = vsel %vm1223, %v4234, %v4238
        %v4241 = vshrl.u32 %v3919, 16
        %v4243 = vrot.slane %v4241, 4
        %v4244 = vshll.u32 %v3919, 16
        %v4246 = vrot.slane %v4244, 5
        %v4247 = vor.u32 %v4243, %v4246
        %v4248 = vrot.slane %v4247, 4
        %v4250 = vshll.u32 %v3920, 16
        %v4252 = vrot.slane %v4250, 5
        %v4253 = vsel %vm1223, %v4248, %v4252
        %v4254 = vshrl.u32 %v3920, 16
        %v4256 = vrot.slane %v4254, 4
        %v4257 = vor.u32 %v4256, %v4252
        %v4258 = vrot.slane %v4257, 4
        %v4260 = vshll.u32 %v3921, 16
        %v4262 = vrot.slane %v4260, 5
        %v4263 = vsel %vm1223, %v4258, %v4262
        %v4265 = vshrl.u32 %v3922, 16
        %v4267 = vrot.slane %v4265, 4
        %v4268 = vshll.u32 %v3922, 16
        %v4270 = vrot.slane %v4268, 5
        %v4271 = vor.u32 %v4267, %v4270
        %v4272 = vrot.slane %v4271, 4
        %v4274 = vshll.u32 %v3923, 16
        %v4276 = vrot.slane %v4274, 5
        %v4277 = vsel %vm1223, %v4272, %v4276
        %v4278 = vshrl.u32 %v3923, 16
        %v4280 = vrot.slane %v4278, 4
        %v4281 = vor.u32 %v4280, %v4276
        %v4282 = vrot.slane %v4281, 4
        %v4284 = vshll.u32 %v3924, 16
        %v4286 = vrot.slane %v4284, 5
        %v4287 = vsel %vm1223, %v4282, %v4286
        %v4289 = vshrl.u32 %v3925, 16
        %v4291 = vrot.slane %v4289, 4
        %v4292 = vshll.u32 %v3925, 16
        %v4294 = vrot.slane %v4292, 5
        %v4295 = vor.u32 %v4291, %v4294
        %v4296 = vrot.slane %v4295, 4
        %v4298 = vshll.u32 %v3926, 16
        %v4300 = vrot.slane %v4298, 5
        %v4301 = vsel %vm1223, %v4296, %v4300
        %v4302 = vshrl.u32 %v3926, 16
        %v4304 = vrot.slane %v4302, 4
        %v4305 = vor.u32 %v4304, %v4300
        %v4306 = vrot.slane %v4305, 4
        %v4308 = vshll.u32 %v3927, 16
        %v4310 = vrot.slane %v4308, 5
        %v4311 = vsel %vm1223, %v4306, %v4310
        %s4312 = scalar_lea.vmem [#allocation6], 56
        %v4313 = vld [vmem:[%s4312] sm:$0xf]
        %v4314 = vld [vmem:[%s4312 + $0x4] sm:$0xf]
        %v4315 = vunpack.c.l.b16 %v3941
        %v4316 = vunpack.c.l.b16 %v3951
        %v4317 = vunpack.c.l.b16 %v3965
        %v4318 = vunpack.c.l.b16 %v3975
        %v4319 = vunpack.c.l.b16 %v3989
        %v4320 = vunpack.c.l.b16 %v3999
        %v4321 = vunpack.c.l.b16 %v4013
        %v4322 = vunpack.c.l.b16 %v4023
        %v4323 = vunpack.c.l.b16 %v4037
        %v4324 = vunpack.c.l.b16 %v4047
        %v4325 = vunpack.c.l.b16 %v4061
        %v4326 = vunpack.c.l.b16 %v4071
        %v4327 = vunpack.c.l.b16 %v4085
        %v4328 = vunpack.c.l.b16 %v4095
        %v4329 = vunpack.c.l.b16 %v4109
        %v4330 = vunpack.c.l.b16 %v4119
        %v4331 = vunpack.c.l.b16 %v4133
        %v4332 = vunpack.c.l.b16 %v4143
        %v4333 = vunpack.c.l.b16 %v4157
        %v4334 = vunpack.c.l.b16 %v4167
        %v4335 = vunpack.c.l.b16 %v4181
        %v4336 = vunpack.c.l.b16 %v4191
        %v4337 = vunpack.c.l.b16 %v4205
        %v4338 = vunpack.c.l.b16 %v4215
        %v4339 = vunpack.c.l.b16 %v4229
        %v4340 = vunpack.c.l.b16 %v4239
        %v4341 = vunpack.c.l.b16 %v4253
        %v4342 = vunpack.c.l.b16 %v4263
        %v4343 = vunpack.c.l.b16 %v4277
        %v4344 = vunpack.c.l.b16 %v4287
        %v4345 = vunpack.c.l.b16 %v4301
        %v4346 = vunpack.c.l.b16 %v4311
        %v4347 = vpack.c.b16 %v4316, %v4315
        %v4348 = vpack.c.b16 %v4318, %v4317
        %v4349 = vpack.c.b16 %v4320, %v4319
        %v4350 = vpack.c.b16 %v4322, %v4321
        %v4351 = vpack.c.b16 %v4324, %v4323
        %v4352 = vpack.c.b16 %v4326, %v4325
        %v4353 = vpack.c.b16 %v4328, %v4327
        %v4354 = vpack.c.b16 %v4330, %v4329
        %v4355 = vpack.c.b16 %v4332, %v4331
        %v4356 = vpack.c.b16 %v4334, %v4333
        %v4357 = vpack.c.b16 %v4336, %v4335
        %v4358 = vpack.c.b16 %v4338, %v4337
        %v4359 = vpack.c.b16 %v4340, %v4339
        %v4360 = vpack.c.b16 %v4342, %v4341
        %v4361 = vpack.c.b16 %v4344, %v4343
        %v4362 = vpack.c.b16 %v4346, %v4345
        %v4365 = vunpack.c.l.b16 %v4313
        %v4366 = vunpack.c.l.b16 %v4314
        %v4367 = vpack.c.b16 %v4366, %v4365
        %v4370 = vsel %vm813, %v4347, 0
        %v4373 = vsel %vm813, %v4348, 0
        %v4376 = vsel %vm813, %v4349, 0
        %v4379 = vsel %vm813, %v4350, 0
        %v4382 = vsel %vm813, %v4351, 0
        %v4385 = vsel %vm813, %v4352, 0
        %v4388 = vsel %vm813, %v4353, 0
        %v4391 = vsel %vm813, %v4354, 0
        %v4394 = vsel %vm813, %v4355, 0
        %v4397 = vsel %vm813, %v4356, 0
        %v4400 = vsel %vm813, %v4357, 0
        %v4403 = vsel %vm813, %v4358, 0
        %v4406 = vsel %vm813, %v4359, 0
        %v4409 = vsel %vm813, %v4360, 0
        %v4412 = vsel %vm813, %v4361, 0
        %v4415 = vsel %vm813, %v4362, 0
        %4417 = vmatpush.bf16.msra.mxu0 0
        %4418 = vmatpush.bf16.msra.mxu0 0
        %4419 = vmatpush.bf16.msra.mxu0 0
        %4420 = vmatpush.bf16.msra.mxu0 0
        %4421 = vmatpush.bf16.msra.mxu0 0
        %4422 = vmatpush.bf16.msra.mxu0 0
        %4423 = vmatpush.bf16.msra.mxu0 0
        %4424 = vmatpush.bf16.msra.mxu0 %v4367
        %4425 = vmatmul.bf16.gmra.mxu0 %v4370
        %v4426 = vpop.f32.mrf.mxu0
        %v4427 = vadd.f32 0.0, %v4426
        %v4428 = vpop.f32.mrf.mxu0
        %v4429 = vadd.f32 0.0, %v4428
        %4430 = vmatmul.bf16.gmra.mxu0 %v4373
        %v4431 = vpop.f32.mrf.mxu0
        %v4432 = vadd.f32 0.0, %v4431
        %v4433 = vpop.f32.mrf.mxu0
        %v4434 = vadd.f32 0.0, %v4433
        %4435 = vmatmul.bf16.gmra.mxu0 %v4376
        %v4436 = vpop.f32.mrf.mxu0
        %v4437 = vadd.f32 0.0, %v4436
        %v4438 = vpop.f32.mrf.mxu0
        %v4439 = vadd.f32 0.0, %v4438
        %4440 = vmatmul.bf16.gmra.mxu0 %v4379
        %v4441 = vpop.f32.mrf.mxu0
        %v4442 = vadd.f32 0.0, %v4441
        %v4443 = vpop.f32.mrf.mxu0
        %v4444 = vadd.f32 0.0, %v4443
        %4445 = vmatmul.bf16.gmra.mxu0 %v4382
        %v4446 = vpop.f32.mrf.mxu0
        %v4447 = vadd.f32 0.0, %v4446
        %v4448 = vpop.f32.mrf.mxu0
        %v4449 = vadd.f32 0.0, %v4448
        %4450 = vmatmul.bf16.gmra.mxu0 %v4385
        %v4451 = vpop.f32.mrf.mxu0
        %v4452 = vadd.f32 0.0, %v4451
        %v4453 = vpop.f32.mrf.mxu0
        %v4454 = vadd.f32 0.0, %v4453
        %4455 = vmatmul.bf16.gmra.mxu0 %v4388
        %v4456 = vpop.f32.mrf.mxu0
        %v4457 = vadd.f32 0.0, %v4456
        %v4458 = vpop.f32.mrf.mxu0
        %v4459 = vadd.f32 0.0, %v4458
        %4460 = vmatmul.bf16.gmra.mxu0 %v4391
        %v4461 = vpop.f32.mrf.mxu0
        %v4462 = vadd.f32 0.0, %v4461
        %v4463 = vpop.f32.mrf.mxu0
        %v4464 = vadd.f32 0.0, %v4463
        %4465 = vmatmul.bf16.gmra.mxu0 %v4394
        %v4466 = vpop.f32.mrf.mxu0
        %v4467 = vadd.f32 0.0, %v4466
        %v4468 = vpop.f32.mrf.mxu0
        %v4469 = vadd.f32 0.0, %v4468
        %4470 = vmatmul.bf16.gmra.mxu0 %v4397
        %v4471 = vpop.f32.mrf.mxu0
        %v4472 = vadd.f32 0.0, %v4471
        %v4473 = vpop.f32.mrf.mxu0
        %v4474 = vadd.f32 0.0, %v4473
        %4475 = vmatmul.bf16.gmra.mxu0 %v4400
        %v4476 = vpop.f32.mrf.mxu0
        %v4477 = vadd.f32 0.0, %v4476
        %v4478 = vpop.f32.mrf.mxu0
        %v4479 = vadd.f32 0.0, %v4478
        %4480 = vmatmul.bf16.gmra.mxu0 %v4403
        %v4481 = vpop.f32.mrf.mxu0
        %v4482 = vadd.f32 0.0, %v4481
        %v4483 = vpop.f32.mrf.mxu0
        %v4484 = vadd.f32 0.0, %v4483
        %4485 = vmatmul.bf16.gmra.mxu0 %v4406
        %v4486 = vpop.f32.mrf.mxu0
        %v4487 = vadd.f32 0.0, %v4486
        %v4488 = vpop.f32.mrf.mxu0
        %v4489 = vadd.f32 0.0, %v4488
        %4490 = vmatmul.bf16.gmra.mxu0 %v4409
        %v4491 = vpop.f32.mrf.mxu0
        %v4492 = vadd.f32 0.0, %v4491
        %v4493 = vpop.f32.mrf.mxu0
        %v4494 = vadd.f32 0.0, %v4493
        %4495 = vmatmul.bf16.gmra.mxu0 %v4412
        %v4496 = vpop.f32.mrf.mxu0
        %v4497 = vadd.f32 0.0, %v4496
        %v4498 = vpop.f32.mrf.mxu0
        %v4499 = vadd.f32 0.0, %v4498
        %4500 = vmatmul.bf16.gmra.mxu0 %v4415
        %v4501 = vpop.f32.mrf.mxu0
        %v4502 = vadd.f32 0.0, %v4501
        %v4503 = vpop.f32.mrf.mxu0
        %v4504 = vadd.f32 0.0, %v4503
        %4505 = vdwg.mxu0
        %v4506 = vadd.f32 %v3848, %v4427
        %v4507 = vadd.f32 %v3849, %v4429
        %v4508 = vadd.f32 %v3850, %v4432
        %v4509 = vadd.f32 %v3851, %v4434
        %v4510 = vadd.f32 %v3852, %v4437
        %v4511 = vadd.f32 %v3853, %v4439
        %v4512 = vadd.f32 %v3854, %v4442
        %v4513 = vadd.f32 %v3855, %v4444
        %v4514 = vadd.f32 %v3856, %v4447
        %v4515 = vadd.f32 %v3857, %v4449
        %v4516 = vadd.f32 %v3858, %v4452
        %v4517 = vadd.f32 %v3859, %v4454
        %v4518 = vadd.f32 %v3860, %v4457
        %v4519 = vadd.f32 %v3861, %v4459
        %v4520 = vadd.f32 %v3862, %v4462
        %v4521 = vadd.f32 %v3863, %v4464
        %v4522 = vadd.f32 %v3864, %v4467
        %v4523 = vadd.f32 %v3865, %v4469
        %v4524 = vadd.f32 %v3866, %v4472
        %v4525 = vadd.f32 %v3867, %v4474
        %v4526 = vadd.f32 %v3868, %v4477
        %v4527 = vadd.f32 %v3869, %v4479
        %v4528 = vadd.f32 %v3870, %v4482
        %v4529 = vadd.f32 %v3871, %v4484
        %v4530 = vadd.f32 %v3872, %v4487
        %v4531 = vadd.f32 %v3873, %v4489
        %v4532 = vadd.f32 %v3874, %v4492
        %v4533 = vadd.f32 %v3875, %v4494
        %v4534 = vadd.f32 %v3876, %v4497
        %v4535 = vadd.f32 %v3877, %v4499
        %v4536 = vadd.f32 %v3878, %v4502
        %v4537 = vadd.f32 %v3879, %v4504
        %v4538 = vld [vmem:[%s3589] sm:$0xe]
        %v4539 = vld [vmem:[%s3589 + $0xc] sm:$0xe]
        %v4540 = vld [vmem:[%s3589 + $0x18] sm:$0xe]
        %v4541 = vld [vmem:[%s3589 + $0x24] sm:$0xe]
        %v4542 = vld [vmem:[%s3589 + $0x30] sm:$0xe]
        %v4543 = vld [vmem:[%s3589 + $0x3c] sm:$0xe]
        %v4544 = vld [vmem:[%s3589 + $0x48] sm:$0xe]
        %v4545 = vld [vmem:[%s3589 + $0x54] sm:$0xe]
        %v4546 = vld [vmem:[%s3589 + $0x60] sm:$0xe]
        %v4547 = vld [vmem:[%s3589 + $0x6c] sm:$0xe]
        %v4548 = vld [vmem:[%s3589 + $0x78] sm:$0xe]
        %v4549 = vld [vmem:[%s3589 + $0x84] sm:$0xe]
        %v4550 = vld [vmem:[%s3589 + $0x90] sm:$0xe]
        %v4551 = vld [vmem:[%s3589 + $0x9c] sm:$0xe]
        %v4552 = vld [vmem:[%s3589 + $0xa8] sm:$0xe]
        %v4553 = vld [vmem:[%s3589 + $0xb4] sm:$0xe]
        %v4602 = vrot.slane %v4538, 5
        %v4603 = vrot.slane %v4602, 4
        %v4604 = vrot.slane %v3881, 5
        %v4605 = vsel %vm1900, %v4603, %v4604
        %v4606 = vrot.slane %v4604, 4
        %v4607 = vrot.slane %v3882, 5
        %v4608 = vsel %vm1900, %v4606, %v4607
        %v4609 = vrot.slane %v4539, 5
        %v4610 = vrot.slane %v4609, 4
        %v4611 = vrot.slane %v3884, 5
        %v4612 = vsel %vm1900, %v4610, %v4611
        %v4613 = vrot.slane %v4611, 4
        %v4614 = vrot.slane %v3885, 5
        %v4615 = vsel %vm1900, %v4613, %v4614
        %v4616 = vrot.slane %v4540, 5
        %v4617 = vrot.slane %v4616, 4
        %v4618 = vrot.slane %v3887, 5
        %v4619 = vsel %vm1900, %v4617, %v4618
        %v4620 = vrot.slane %v4618, 4
        %v4621 = vrot.slane %v3888, 5
        %v4622 = vsel %vm1900, %v4620, %v4621
        %v4623 = vrot.slane %v4541, 5
        %v4624 = vrot.slane %v4623, 4
        %v4625 = vrot.slane %v3890, 5
        %v4626 = vsel %vm1900, %v4624, %v4625
        %v4627 = vrot.slane %v4625, 4
        %v4628 = vrot.slane %v3891, 5
        %v4629 = vsel %vm1900, %v4627, %v4628
        %v4630 = vrot.slane %v4542, 5
        %v4631 = vrot.slane %v4630, 4
        %v4632 = vrot.slane %v3893, 5
        %v4633 = vsel %vm1900, %v4631, %v4632
        %v4634 = vrot.slane %v4632, 4
        %v4635 = vrot.slane %v3894, 5
        %v4636 = vsel %vm1900, %v4634, %v4635
        %v4637 = vrot.slane %v4543, 5
        %v4638 = vrot.slane %v4637, 4
        %v4639 = vrot.slane %v3896, 5
        %v4640 = vsel %vm1900, %v4638, %v4639
        %v4641 = vrot.slane %v4639, 4
        %v4642 = vrot.slane %v3897, 5
        %v4643 = vsel %vm1900, %v4641, %v4642
        %v4644 = vrot.slane %v4544, 5
        %v4645 = vrot.slane %v4644, 4
        %v4646 = vrot.slane %v3899, 5
        %v4647 = vsel %vm1900, %v4645, %v4646
        %v4648 = vrot.slane %v4646, 4
        %v4649 = vrot.slane %v3900, 5
        %v4650 = vsel %vm1900, %v4648, %v4649
        %v4651 = vrot.slane %v4545, 5
        %v4652 = vrot.slane %v4651, 4
        %v4653 = vrot.slane %v3902, 5
        %v4654 = vsel %vm1900, %v4652, %v4653
        %v4655 = vrot.slane %v4653, 4
        %v4656 = vrot.slane %v3903, 5
        %v4657 = vsel %vm1900, %v4655, %v4656
        %v4658 = vrot.slane %v4546, 5
        %v4659 = vrot.slane %v4658, 4
        %v4660 = vrot.slane %v3905, 5
        %v4661 = vsel %vm1900, %v4659, %v4660
        %v4662 = vrot.slane %v4660, 4
        %v4663 = vrot.slane %v3906, 5
        %v4664 = vsel %vm1900, %v4662, %v4663
        %v4665 = vrot.slane %v4547, 5
        %v4666 = vrot.slane %v4665, 4
        %v4667 = vrot.slane %v3908, 5
        %v4668 = vsel %vm1900, %v4666, %v4667
        %v4669 = vrot.slane %v4667, 4
        %v4670 = vrot.slane %v3909, 5
        %v4671 = vsel %vm1900, %v4669, %v4670
        %v4672 = vrot.slane %v4548, 5
        %v4673 = vrot.slane %v4672, 4
        %v4674 = vrot.slane %v3911, 5
        %v4675 = vsel %vm1900, %v4673, %v4674
        %v4676 = vrot.slane %v4674, 4
        %v4677 = vrot.slane %v3912, 5
        %v4678 = vsel %vm1900, %v4676, %v4677
        %v4679 = vrot.slane %v4549, 5
        %v4680 = vrot.slane %v4679, 4
        %v4681 = vrot.slane %v3914, 5
        %v4682 = vsel %vm1900, %v4680, %v4681
        %v4683 = vrot.slane %v4681, 4
        %v4684 = vrot.slane %v3915, 5
        %v4685 = vsel %vm1900, %v4683, %v4684
        %v4686 = vrot.slane %v4550, 5
        %v4687 = vrot.slane %v4686, 4
        %v4688 = vrot.slane %v3917, 5
        %v4689 = vsel %vm1900, %v4687, %v4688
        %v4690 = vrot.slane %v4688, 4
        %v4691 = vrot.slane %v3918, 5
        %v4692 = vsel %vm1900, %v4690, %v4691
        %v4693 = vrot.slane %v4551, 5
        %v4694 = vrot.slane %v4693, 4
        %v4695 = vrot.slane %v3920, 5
        %v4696 = vsel %vm1900, %v4694, %v4695
        %v4697 = vrot.slane %v4695, 4
        %v4698 = vrot.slane %v3921, 5
        %v4699 = vsel %vm1900, %v4697, %v4698
        %v4700 = vrot.slane %v4552, 5
        %v4701 = vrot.slane %v4700, 4
        %v4702 = vrot.slane %v3923, 5
        %v4703 = vsel %vm1900, %v4701, %v4702
        %v4704 = vrot.slane %v4702, 4
        %v4705 = vrot.slane %v3924, 5
        %v4706 = vsel %vm1900, %v4704, %v4705
        %v4707 = vrot.slane %v4553, 5
        %v4708 = vrot.slane %v4707, 4
        %v4709 = vrot.slane %v3926, 5
        %v4710 = vsel %vm1900, %v4708, %v4709
        %v4711 = vrot.slane %v4709, 4
        %v4712 = vrot.slane %v3927, 5
        %v4713 = vsel %vm1900, %v4711, %v4712
        %s4714 = scalar_lea.vmem [#allocation6], 64
        %v4715 = vld [vmem:[%s4714] sm:$0xf]
        %v4716 = vld [vmem:[%s4714 + $0x4] sm:$0xf]
        %v4717 = vunpack.c.l.b16 %v4605
        %v4718 = vunpack.c.l.b16 %v4608
        %v4719 = vunpack.c.l.b16 %v4612
        %v4720 = vunpack.c.l.b16 %v4615
        %v4721 = vunpack.c.l.b16 %v4619
        %v4722 = vunpack.c.l.b16 %v4622
        %v4723 = vunpack.c.l.b16 %v4626
        %v4724 = vunpack.c.l.b16 %v4629
        %v4725 = vunpack.c.l.b16 %v4633
        %v4726 = vunpack.c.l.b16 %v4636
        %v4727 = vunpack.c.l.b16 %v4640
        %v4728 = vunpack.c.l.b16 %v4643
        %v4729 = vunpack.c.l.b16 %v4647
        %v4730 = vunpack.c.l.b16 %v4650
        %v4731 = vunpack.c.l.b16 %v4654
        %v4732 = vunpack.c.l.b16 %v4657
        %v4733 = vunpack.c.l.b16 %v4661
        %v4734 = vunpack.c.l.b16 %v4664
        %v4735 = vunpack.c.l.b16 %v4668
        %v4736 = vunpack.c.l.b16 %v4671
        %v4737 = vunpack.c.l.b16 %v4675
        %v4738 = vunpack.c.l.b16 %v4678
        %v4739 = vunpack.c.l.b16 %v4682
        %v4740 = vunpack.c.l.b16 %v4685
        %v4741 = vunpack.c.l.b16 %v4689
        %v4742 = vunpack.c.l.b16 %v4692
        %v4743 = vunpack.c.l.b16 %v4696
        %v4744 = vunpack.c.l.b16 %v4699
        %v4745 = vunpack.c.l.b16 %v4703
        %v4746 = vunpack.c.l.b16 %v4706
        %v4747 = vunpack.c.l.b16 %v4710
        %v4748 = vunpack.c.l.b16 %v4713
        %v4749 = vpack.c.b16 %v4718, %v4717
        %v4750 = vpack.c.b16 %v4720, %v4719
        %v4751 = vpack.c.b16 %v4722, %v4721
        %v4752 = vpack.c.b16 %v4724, %v4723
        %v4753 = vpack.c.b16 %v4726, %v4725
        %v4754 = vpack.c.b16 %v4728, %v4727
        %v4755 = vpack.c.b16 %v4730, %v4729
        %v4756 = vpack.c.b16 %v4732, %v4731
        %v4757 = vpack.c.b16 %v4734, %v4733
        %v4758 = vpack.c.b16 %v4736, %v4735
        %v4759 = vpack.c.b16 %v4738, %v4737
        %v4760 = vpack.c.b16 %v4740, %v4739
        %v4761 = vpack.c.b16 %v4742, %v4741
        %v4762 = vpack.c.b16 %v4744, %v4743
        %v4763 = vpack.c.b16 %v4746, %v4745
        %v4764 = vpack.c.b16 %v4748, %v4747
        %v4767 = vunpack.c.l.b16 %v4715
        %v4768 = vunpack.c.l.b16 %v4716
        %v4769 = vpack.c.b16 %v4768, %v4767
        %v4772 = vsel %vm813, %v4749, 0
        %v4775 = vsel %vm813, %v4750, 0
        %v4778 = vsel %vm813, %v4751, 0
        %v4781 = vsel %vm813, %v4752, 0
        %v4784 = vsel %vm813, %v4753, 0
        %v4787 = vsel %vm813, %v4754, 0
        %v4790 = vsel %vm813, %v4755, 0
        %v4793 = vsel %vm813, %v4756, 0
        %v4796 = vsel %vm813, %v4757, 0
        %v4799 = vsel %vm813, %v4758, 0
        %v4802 = vsel %vm813, %v4759, 0
        %v4805 = vsel %vm813, %v4760, 0
        %v4808 = vsel %vm813, %v4761, 0
        %v4811 = vsel %vm813, %v4762, 0
        %v4814 = vsel %vm813, %v4763, 0
        %v4817 = vsel %vm813, %v4764, 0
        %4819 = vmatpush.bf16.msra.mxu0 0
        %4820 = vmatpush.bf16.msra.mxu0 0
        %4821 = vmatpush.bf16.msra.mxu0 0
        %4822 = vmatpush.bf16.msra.mxu0 0
        %4823 = vmatpush.bf16.msra.mxu0 0
        %4824 = vmatpush.bf16.msra.mxu0 0
        %4825 = vmatpush.bf16.msra.mxu0 0
        %4826 = vmatpush.bf16.msra.mxu0 %v4769
        %4827 = vmatmul.bf16.gmra.mxu0 %v4772
        %v4828 = vpop.f32.mrf.mxu0
        %v4829 = vadd.f32 0.0, %v4828
        %v4830 = vpop.f32.mrf.mxu0
        %v4831 = vadd.f32 0.0, %v4830
        %4832 = vmatmul.bf16.gmra.mxu0 %v4775
        %v4833 = vpop.f32.mrf.mxu0
        %v4834 = vadd.f32 0.0, %v4833
        %v4835 = vpop.f32.mrf.mxu0
        %v4836 = vadd.f32 0.0, %v4835
        %4837 = vmatmul.bf16.gmra.mxu0 %v4778
        %v4838 = vpop.f32.mrf.mxu0
        %v4839 = vadd.f32 0.0, %v4838
        %v4840 = vpop.f32.mrf.mxu0
        %v4841 = vadd.f32 0.0, %v4840
        %4842 = vmatmul.bf16.gmra.mxu0 %v4781
        %v4843 = vpop.f32.mrf.mxu0
        %v4844 = vadd.f32 0.0, %v4843
        %v4845 = vpop.f32.mrf.mxu0
        %v4846 = vadd.f32 0.0, %v4845
        %4847 = vmatmul.bf16.gmra.mxu0 %v4784
        %v4848 = vpop.f32.mrf.mxu0
        %v4849 = vadd.f32 0.0, %v4848
        %v4850 = vpop.f32.mrf.mxu0
        %v4851 = vadd.f32 0.0, %v4850
        %4852 = vmatmul.bf16.gmra.mxu0 %v4787
        %v4853 = vpop.f32.mrf.mxu0
        %v4854 = vadd.f32 0.0, %v4853
        %v4855 = vpop.f32.mrf.mxu0
        %v4856 = vadd.f32 0.0, %v4855
        %4857 = vmatmul.bf16.gmra.mxu0 %v4790
        %v4858 = vpop.f32.mrf.mxu0
        %v4859 = vadd.f32 0.0, %v4858
        %v4860 = vpop.f32.mrf.mxu0
        %v4861 = vadd.f32 0.0, %v4860
        %4862 = vmatmul.bf16.gmra.mxu0 %v4793
        %v4863 = vpop.f32.mrf.mxu0
        %v4864 = vadd.f32 0.0, %v4863
        %v4865 = vpop.f32.mrf.mxu0
        %v4866 = vadd.f32 0.0, %v4865
        %4867 = vmatmul.bf16.gmra.mxu0 %v4796
        %v4868 = vpop.f32.mrf.mxu0
        %v4869 = vadd.f32 0.0, %v4868
        %v4870 = vpop.f32.mrf.mxu0
        %v4871 = vadd.f32 0.0, %v4870
        %4872 = vmatmul.bf16.gmra.mxu0 %v4799
        %v4873 = vpop.f32.mrf.mxu0
        %v4874 = vadd.f32 0.0, %v4873
        %v4875 = vpop.f32.mrf.mxu0
        %v4876 = vadd.f32 0.0, %v4875
        %4877 = vmatmul.bf16.gmra.mxu0 %v4802
        %v4878 = vpop.f32.mrf.mxu0
        %v4879 = vadd.f32 0.0, %v4878
        %v4880 = vpop.f32.mrf.mxu0
        %v4881 = vadd.f32 0.0, %v4880
        %4882 = vmatmul.bf16.gmra.mxu0 %v4805
        %v4883 = vpop.f32.mrf.mxu0
        %v4884 = vadd.f32 0.0, %v4883
        %v4885 = vpop.f32.mrf.mxu0
        %v4886 = vadd.f32 0.0, %v4885
        %4887 = vmatmul.bf16.gmra.mxu0 %v4808
        %v4888 = vpop.f32.mrf.mxu0
        %v4889 = vadd.f32 0.0, %v4888
        %v4890 = vpop.f32.mrf.mxu0
        %v4891 = vadd.f32 0.0, %v4890
        %4892 = vmatmul.bf16.gmra.mxu0 %v4811
        %v4893 = vpop.f32.mrf.mxu0
        %v4894 = vadd.f32 0.0, %v4893
        %v4895 = vpop.f32.mrf.mxu0
        %v4896 = vadd.f32 0.0, %v4895
        %4897 = vmatmul.bf16.gmra.mxu0 %v4814
        %v4898 = vpop.f32.mrf.mxu0
        %v4899 = vadd.f32 0.0, %v4898
        %v4900 = vpop.f32.mrf.mxu0
        %v4901 = vadd.f32 0.0, %v4900
        %4902 = vmatmul.bf16.gmra.mxu0 %v4817
        %v4903 = vpop.f32.mrf.mxu0
        %v4904 = vadd.f32 0.0, %v4903
        %v4905 = vpop.f32.mrf.mxu0
        %v4906 = vadd.f32 0.0, %v4905
        %4907 = vdwg.mxu0
        %v4908 = vadd.f32 %v4506, %v4829
        %v4909 = vadd.f32 %v4507, %v4831
        %v4910 = vadd.f32 %v4508, %v4834
        %v4911 = vadd.f32 %v4509, %v4836
        %v4912 = vadd.f32 %v4510, %v4839
        %v4913 = vadd.f32 %v4511, %v4841
        %v4914 = vadd.f32 %v4512, %v4844
        %v4915 = vadd.f32 %v4513, %v4846
        %v4916 = vadd.f32 %v4514, %v4849
        %v4917 = vadd.f32 %v4515, %v4851
        %v4918 = vadd.f32 %v4516, %v4854
        %v4919 = vadd.f32 %v4517, %v4856
        %v4920 = vadd.f32 %v4518, %v4859
        %v4921 = vadd.f32 %v4519, %v4861
        %v4922 = vadd.f32 %v4520, %v4864
        %v4923 = vadd.f32 %v4521, %v4866
        %v4924 = vadd.f32 %v4522, %v4869
        %v4925 = vadd.f32 %v4523, %v4871
        %v4926 = vadd.f32 %v4524, %v4874
        %v4927 = vadd.f32 %v4525, %v4876
        %v4928 = vadd.f32 %v4526, %v4879
        %v4929 = vadd.f32 %v4527, %v4881
        %v4930 = vadd.f32 %v4528, %v4884
        %v4931 = vadd.f32 %v4529, %v4886
        %v4932 = vadd.f32 %v4530, %v4889
        %v4933 = vadd.f32 %v4531, %v4891
        %v4934 = vadd.f32 %v4532, %v4894
        %v4935 = vadd.f32 %v4533, %v4896
        %v4936 = vadd.f32 %v4534, %v4899
        %v4937 = vadd.f32 %v4535, %v4901
        %v4938 = vadd.f32 %v4536, %v4904
        %v4939 = vadd.f32 %v4537, %v4906
        %4940 = vxpose.xlu0.b32.start [1/16] %v4908, 128
        %4941 = vxpose.xlu0.b32.cont [2/16] %v4909, 128
        %4942 = vxpose.xlu0.b32.cont [3/16] %v4910, 128
        %4943 = vxpose.xlu0.b32.cont [4/16] %v4911, 128
        %4944 = vxpose.xlu0.b32.cont [5/16] %v4912, 128
        %4945 = vxpose.xlu0.b32.cont [6/16] %v4913, 128
        %4946 = vxpose.xlu0.b32.cont [7/16] %v4914, 128
        %4947 = vxpose.xlu0.b32.cont [8/16] %v4915, 128
        %4948 = vxpose.xlu0.b32.cont [9/16] %v4916, 128
        %4949 = vxpose.xlu0.b32.cont [10/16] %v4917, 128
        %4950 = vxpose.xlu0.b32.cont [11/16] %v4918, 128
        %4951 = vxpose.xlu0.b32.cont [12/16] %v4919, 128
        %4952 = vxpose.xlu0.b32.cont [13/16] %v4920, 128
        %4953 = vxpose.xlu0.b32.cont [14/16] %v4921, 128
        %4954 = vxpose.xlu0.b32.cont [15/16] %v4922, 128
        %4955 = vxpose.xlu0.b32.end [16/16] %v4923, 128
        %v4956 = vpop.trf.xlu0
        %v4957 = vpop.trf.xlu0
        %v4958 = vpop.trf.xlu0
        %v4959 = vpop.trf.xlu0
        %v4960 = vpop.trf.xlu0
        %v4961 = vpop.trf.xlu0
        %v4962 = vpop.trf.xlu0
        %v4963 = vpop.trf.xlu0
        %v4964 = vpop.trf.xlu0
        %v4965 = vpop.trf.xlu0
        %v4966 = vpop.trf.xlu0
        %v4967 = vpop.trf.xlu0
        %v4968 = vpop.trf.xlu0
        %v4969 = vpop.trf.xlu0
        %v4970 = vpop.trf.xlu0
        %v4971 = vpop.trf.xlu0
        %4972 = vxpose.xlu0.b32.start [1/16] %v4924, 128
        %4973 = vxpose.xlu0.b32.cont [2/16] %v4925, 128
        %4974 = vxpose.xlu0.b32.cont [3/16] %v4926, 128
        %4975 = vxpose.xlu0.b32.cont [4/16] %v4927, 128
        %4976 = vxpose.xlu0.b32.cont [5/16] %v4928, 128
        %4977 = vxpose.xlu0.b32.cont [6/16] %v4929, 128
        %4978 = vxpose.xlu0.b32.cont [7/16] %v4930, 128
        %4979 = vxpose.xlu0.b32.cont [8/16] %v4931, 128
        %4980 = vxpose.xlu0.b32.cont [9/16] %v4932, 128
        %4981 = vxpose.xlu0.b32.cont [10/16] %v4933, 128
        %4982 = vxpose.xlu0.b32.cont [11/16] %v4934, 128
        %4983 = vxpose.xlu0.b32.cont [12/16] %v4935, 128
        %4984 = vxpose.xlu0.b32.cont [13/16] %v4936, 128
        %4985 = vxpose.xlu0.b32.cont [14/16] %v4937, 128
        %4986 = vxpose.xlu0.b32.cont [15/16] %v4938, 128
        %4987 = vxpose.xlu0.b32.end [16/16] %v4939, 128
        %v4988 = vpop.trf.xlu0
        %v4989 = vpop.trf.xlu0
        %v4990 = vpop.trf.xlu0
        %v4991 = vpop.trf.xlu0
        %v4992 = vpop.trf.xlu0
        %v4993 = vpop.trf.xlu0
        %v4994 = vpop.trf.xlu0
        %v4995 = vpop.trf.xlu0
        %v4996 = vpop.trf.xlu0
        %v4997 = vpop.trf.xlu0
        %v4998 = vpop.trf.xlu0
        %v4999 = vpop.trf.xlu0
        %v5000 = vpop.trf.xlu0
        %v5001 = vpop.trf.xlu0
        %v5002 = vpop.trf.xlu0
        %v5003 = vpop.trf.xlu0
        %5004 = vst [vmem:[%s250] sm:$0xff] %v4956
        %5005 = vst [vmem:[%s250 + $0x8] sm:$0xff] %v4988
        %5006 = vst [vmem:[%s250 + $0x10] sm:$0xff] %v4957
        %5007 = vst [vmem:[%s250 + $0x18] sm:$0xff] %v4989
        %s5008 = sand.u32 %s119, 1
        %s5009 = scalar_lea.sflag [#allocation5], %s5008
        %s5010 = sand.u32 %s119, 1
        %s5011 = smul.addr %s5010, 32
        %s5012 = scalar_lea.vmem [#allocation9], %s5011
        // Predicated region
        $region49: #{tpu_custom_call.1} parent=35 // pred_check
          %p5013 = pneg %p129
        $region50: #{tpu_custom_call.1} parent=35 // pred_check_branch
          %5015 = sbr.rel (%p5013) target = $region52
        $region51: #{tpu_custom_call.1} parent=35 // pred_region
          %5017 = vsyncadd %s5009, 0
          %s5018 = smul.addr %s22, 4
          %s5019 = smul.addr %s5018, 8
          %s5020 = scalar_lea.hbm %s4, %s5019
          %s5021 = sshll.u32 %s5012, 4
          %s5022 = int_to_ptr.vmem [resolvable:$true] %s5021
          %s5023 = sshll.u32 %s5020, 4
          %s5024 = int_to_ptr.hbm [resolvable:$true] %s5023
          %5029 = dma.vmem_to_hbm [thread:$0]  %s5022, 512, %s5024, %s5009, 256, 256, 16
        $region52: #{tpu_custom_call.1} parent=35 // pred_fallthru
          _
      $region36: #{tpu_custom_call.1} parent=5 // pred_fallthru
        _
      %p5030 = scmp.le.s32.totalorder 2, %s17
      // Predicated region
      $region53: #{tpu_custom_call.1} parent=5 // pred_check
        %p5031 = pneg %p5030
      $region54: #{tpu_custom_call.1} parent=5 // pred_check_branch
        %5033 = sbr.rel (%p5031) target = $region56
      $region55: #{tpu_custom_call.1} parent=5 // pred_region
        %s5034 = ssub.s32 %s17, 2
        // Predicated region
        $region57: #{tpu_custom_call.1} parent=55 // pred_check
          %p5035 = pneg %p135
        $region58: #{tpu_custom_call.1} parent=55 // pred_check_branch
          %5037 = sbr.rel (%p5035) target = $region60
        $region59: #{tpu_custom_call.1} parent=55 // pred_region
          %s5038 = sand.u32 %s120, 1
          %s5039 = scalar_lea.sflag [#allocation5], %s5038
          %s5040 = sand.u32 %s120, 1
          %s5041 = smul.addr %s5040, 32
          %s5042 = scalar_lea.vmem [#allocation9], %s5041
          %5044 = dma.done %s5039, 512
        $region60: #{tpu_custom_call.1} parent=55 // pred_fallthru
          _
      $region56: #{tpu_custom_call.1} parent=5 // pred_fallthru
        _
    $region6: #{tpu_custom_call.1} parent=1 // loop_footer
      %s21 = sadd.s32 1, %s17
    $region7: #{tpu_custom_call.1} parent=1 // loop_footer_branch
      %16 = sbr.rel target = $region3
    $region8: #{tpu_custom_call.1} parent=1 // loop_exit
      _
    %5045 = vsyncpa [#allocation4], 1
    %s5046 = scalar_lea.sflag [#allocation4], 1
    %5047 = vsyncpa %s5046, 1
    %5048 = vsyncpa [#allocation7], 1
    %5049 = vsyncpa [#allocation5], 1
    %s5050 = scalar_lea.sflag [#allocation5], 1
    %5051 = vsyncpa %s5050, 1

</llo_original>
